<compile_context>
chip_gen: v6e
topology: v6e:2x2x1
jax: 0.10.0
libtpu: 0.0.40
codegen_flags: <defaults>
</compile_context>

<pallas_src>
import jax
import jax.numpy as jnp
from jax import lax
from jax.experimental import pallas as pl
from jax.experimental.pallas import tpu as pltpu


def seq_tagger_kernel(ids_ref, len_ref, emb_ref, wih_ref, whh_ref, bgi_ref,
                      bhn_ref, wout_ref, bout_ref, out_ref, ptab_ref):
    """Fused embedding-gather + GRU recurrence + masking + Linear head.

    ids_ref : (T, B)          int32 SMEM   time-major token ids (scalar prefetch)
    len_ref : (B,)            int32 SMEM   true sequence lengths (scalar prefetch)
    emb_ref : (V_pad, E)      bf16  VMEM   zero-padded embedding table
    wih_ref : (E, 3*128)      bf16         GRU input weights, lane-aligned (r,z,n)
    whh_ref : (128, 3*128)    bf16         GRU hidden weights, lane-aligned
    bgi_ref : (1, 3*128)      f32          b_ih (all gates) + b_hh (r,z gates)
    bhn_ref : (1, 128)        f32          b_hh of the n gate
    wout_ref: (128, C_pad)    bf16         Linear weight, lane-dense padded
    bout_ref: (1, C_pad)      f32          Linear bias, padded
    out_ref : (T, TB, C_pad)  bf16         per-timestep logits (lane-dense)
    ptab_ref: (V_pad, 3*128)  f32   VMEM   scratch: per-vocab-row projections
    """
    T, TB, C_pad = out_ref.shape
    H_pad = whh_ref.shape[0]                       # 128: lane-aligned hidden block
    off = pl.program_id(0) * TB                    # batch-tile offset into ids/len

    # ---- fused embedding gather + hoisted input projection -----------------
    # Project the whole (padded) vocabulary once; per-token x @ W_ih^T is then
    # just a row gather from ptab (gather+projection fused, one MXU matmul).
    ptab_ref[...] = (
        jnp.dot(emb_ref[...], wih_ref[...],
                preferred_element_type=jnp.float32) + bgi_ref[...])

    # ---- hoisted loop invariants --------------------------------------------
    w_hh = whh_ref[...]                                        # (128, 384) bf16
    b_hn = jnp.broadcast_to(bhn_ref[...], (TB, H_pad))         # (TB, 128)  f32

    def gather_gi(t):
        # TB dynamic single-row loads; no dependency on h -> the scheduler can
        # hoist them off the serial recurrence chain.
        rows = [ptab_ref[pl.ds(ids_ref[t, off + b], 1), :] for b in range(TB)]
        return jnp.concatenate(rows, axis=0)                   # (TB, 3*128) f32

    # ---- GRU recurrence: fully unrolled, gi/hs kept as values ---------------
    # TODO(synk): keep W_hh resident on the MXU (pltpu.matmul_push_rhs / ...);
    #             jnp.dot re-stages the RHS every step.
    # NOTE: h is cast to bf16 only as an MXU operand; gate math stays f32.
    #       Rounding compounds over T -- for long sequences switch the
    #       recurrent matmul to f32/HIGHEST (MXU is idle at these sizes).
    h = jnp.zeros((TB, H_pad), dtype=jnp.float32)
    hs_steps = []
    for t in range(T):
        gi_t = gather_gi(t)                                    # (TB, 3*128) f32
        gh = jnp.dot(h.astype(jnp.bfloat16), w_hh,
                     preferred_element_type=jnp.float32)       # (TB, 3*128) f32
        # lane-aligned gate blocks: whole-vreg slices (no 32-lane extracts)
        r = jax.nn.sigmoid(gi_t[:, 0:H_pad] + gh[:, 0:H_pad])
        z = jax.nn.sigmoid(gi_t[:, H_pad:2 * H_pad] + gh[:, H_pad:2 * H_pad])
        n = jnp.tanh(gi_t[:, 2 * H_pad:3 * H_pad]
                     + r * (gh[:, 2 * H_pad:3 * H_pad] + b_hn))
        h = (1.0 - z) * n + z * h                              # padded lanes stay 0
        hs_steps.append(h)
    hs = jnp.stack(hs_steps, axis=0)                           # (T, TB, 128) f32

    # ---- pack/pad_packed semantics: zero h at t >= length[b] ----------------
    # Mask generated in-kernel from SMEM lengths (no (T,B,1) HBM mask input).
    t_idx = lax.broadcasted_iota(jnp.int32, (T, TB, H_pad), 0)
    b_idx = lax.broadcasted_iota(jnp.int32, (T, TB, H_pad), 1)
    lens = jnp.zeros((T, TB, H_pad), dtype=jnp.int32)
    for b in range(TB):
        lens = jnp.where(b_idx == b, len_ref[off + b], lens)
    hs = jnp.where(t_idx < lens, hs, 0.0)

    # ---- Dropout = identity at inference; lane-dense Linear head ------------
    # Padded positions output exactly b_out (matches pad_packed + Linear).
    proj = (jnp.dot(hs.astype(jnp.bfloat16).reshape(T * TB, H_pad),
                    wout_ref[...], preferred_element_type=jnp.float32)
            + bout_ref[...])
    out_ref[...] = proj.reshape(T, TB, C_pad).astype(out_ref.dtype)


def seq_tagger_forward(batch, length, max_len, params):
    """Embedding + GRU (pack/pad_packed) + Dropout(id) + Linear -> (B, C, T)."""
    emb = params["embeddings"]
    V, E = emb.shape
    B, T = batch.shape
    assert T == max_len
    H = params["w_hh"].shape[1]
    C = params["w_out"].shape[0]

    H_pad = 128                        # each gate gets its own 128-lane block
    G_pad = 3 * H_pad
    C_pad = 128                        # lane-dense logits (unmasked stores)
    V_pad = ((V + 7) // 8) * 8         # sublane-pad the vocab rows

    # Keep all batch rows in one grid step until tiles approach MXU height
    # (128-256 rows); extra grid steps only add ~0.35us each at these sizes.
    TB = min(B, 128)
    assert B % TB == 0 and (TB % 8 == 0 or TB == B)

    # token ids (time-major) and lengths go to SMEM via scalar prefetch.
    ids_tb = jnp.transpose(batch.astype(jnp.int32), (1, 0))      # (T, B)
    lens = length.astype(jnp.int32)                              # (B,)

    # zero-padded bf16 embedding table (rows >= V are never gathered)
    emb_p = (jnp.zeros((V_pad, E), jnp.float32)
             .at[:V, :].set(emb.astype(jnp.float32)).astype(jnp.bfloat16))

    # lane-aligned, pre-transposed GRU weights: gate g lives in lanes
    # [g*128, g*128 + H); padded lanes/rows are zero so padded h lanes stay 0.
    w_ih = params["w_ih"].astype(jnp.float32)                    # (3H, E)
    w_hh = params["w_hh"].astype(jnp.float32)                    # (3H, H)
    b_ih = params["b_ih"].astype(jnp.float32)
    b_hh = params["b_hh"].astype(jnp.float32)

    w_ih_p = jnp.zeros((E, G_pad), jnp.float32)
    w_hh_p = jnp.zeros((H_pad, G_pad), jnp.float32)
    for g in range(3):
        w_ih_p = w_ih_p.at[:, g * H_pad:g * H_pad + H].set(w_ih[g * H:(g + 1) * H, :].T)
        w_hh_p = w_hh_p.at[:H, g * H_pad:g * H_pad + H].set(w_hh[g * H:(g + 1) * H, :].T)
    # fold b_hh of the r,z gates into the hoisted projection bias;
    # the n-gate b_hh must stay inside r * (gh_n + b_hh_n).
    b_gi_p = jnp.zeros((1, G_pad), jnp.float32)
    b_gi_p = b_gi_p.at[0, 0:H].set(b_ih[0:H] + b_hh[0:H])
    b_gi_p = b_gi_p.at[0, H_pad:H_pad + H].set(b_ih[H:2 * H] + b_hh[H:2 * H])
    b_gi_p = b_gi_p.at[0, 2 * H_pad:2 * H_pad + H].set(b_ih[2 * H:3 * H])
    b_hn_p = jnp.zeros((1, H_pad), jnp.float32).at[0, :H].set(b_hh[2 * H:3 * H])

    w_out_p = (jnp.zeros((H_pad, C_pad), jnp.float32)
               .at[:H, :C].set(params["w_out"].astype(jnp.float32).T)
               .astype(jnp.bfloat16))
    b_out_p = jnp.zeros((1, C_pad), jnp.float32).at[0, :C].set(
        params["b_out"].astype(jnp.float32))

    w_ih_p = w_ih_p.astype(jnp.bfloat16)
    w_hh_p = w_hh_p.astype(jnp.bfloat16)

    out_tbc = pl.pallas_call(
        seq_tagger_kernel,
        # bf16 writeback: only C of C_pad lanes carry data; halve HBM bytes.
        out_shape=jax.ShapeDtypeStruct((T, B, C_pad), jnp.bfloat16),
        grid_spec=pltpu.PrefetchScalarGridSpec(
            num_scalar_prefetch=2,                       # ids, lengths -> SMEM
            grid=(B // TB,),
            in_specs=[
                pl.BlockSpec((V_pad, E), lambda i, ids, ln: (0, 0)),       # emb
                pl.BlockSpec((E, G_pad), lambda i, ids, ln: (0, 0)),       # W_ih^T
                pl.BlockSpec((H_pad, G_pad), lambda i, ids, ln: (0, 0)),   # W_hh^T
                pl.BlockSpec((1, G_pad), lambda i, ids, ln: (0, 0)),       # b_gi
                pl.BlockSpec((1, H_pad), lambda i, ids, ln: (0, 0)),       # b_hn
                pl.BlockSpec((H_pad, C_pad), lambda i, ids, ln: (0, 0)),   # W_out^T
                pl.BlockSpec((1, C_pad), lambda i, ids, ln: (0, 0)),       # b_out
            ],
            out_specs=pl.BlockSpec((T, TB, C_pad), lambda i, ids, ln: (0, i, 0)),
            scratch_shapes=[
                pltpu.VMEM((V_pad, G_pad), jnp.float32),   # vocab projection table
            ],
        ),
        # grid == (1,) at this batch size: a single TensorCore does all work.
        # Switch to "parallel" (v7x megacore) only when B > TB with >=128-row
        # tiles; on v5e/v6e a single grid step is preferred.
        compiler_params=pltpu.CompilerParams(
            dimension_semantics=("arbitrary",),
        ),
    )(ids_tb, lens, emb_p, w_ih_p, w_hh_p, b_gi_p, b_hn_p, w_out_p, b_out_p)

    # slice padded classes; (T,B,C) -> (B,C,T) == seq_out.permute(0,2,1); f32 out
    return jnp.transpose(out_tbc[:, :, :C], (1, 2, 0)).astype(jnp.float32)


def gru_tagger_reference(batch, length, params):
    """Pure-JAX (f32) reference of the module forward, for correctness check."""
    x = jnp.take(params["embeddings"], batch, axis=0).astype(jnp.float32)
    B, T, E = x.shape
    H = params["w_hh"].shape[1]
    w_ih, w_hh = params["w_ih"], params["w_hh"]
    b_ih, b_hh = params["b_ih"], params["b_hh"]

    def cell(h, x_t):
        gi = x_t @ w_ih.T + b_ih
        gh = h @ w_hh.T + b_hh
        r = jax.nn.sigmoid(gi[:, :H] + gh[:, :H])
        z = jax.nn.sigmoid(gi[:, H:2 * H] + gh[:, H:2 * H])
        n = jnp.tanh(gi[:, 2 * H:] + r * gh[:, 2 * H:])
        h_new = (1.0 - z) * n + z * h
        return h_new, h_new

    _, hs = lax.scan(cell, jnp.zeros((B, H), jnp.float32),
                     jnp.transpose(x, (1, 0, 2)))                  # (T, B, H)
    mask = (jnp.arange(T)[:, None]
            < length.astype(jnp.int32)[None, :]).astype(jnp.float32)[:, :, None]
    hs = hs * mask
    proj = jnp.einsum('tbh,ch->tbc', hs, params["w_out"]) + params["b_out"]
    return jnp.transpose(proj, (1, 2, 0))                          # (B, C, T)


if __name__ == "__main__":
    # Small, deterministic synthetic configuration (B fills the 8 sublanes).
    V, E, H, C = 50, 32, 32, 16          # vocab, embed dim, hidden, num_class
    B, T = 8, 8                          # batch, max_len

    key = jax.random.PRNGKey(0)
    ks = jax.random.split(key, 8)
    s = 1.0 / (H ** 0.5)                 # PyTorch default init scale

    params = {
        "embeddings": jax.random.normal(ks[0], (V, E), jnp.float32),
        "w_ih": jax.random.uniform(ks[1], (3 * H, E), jnp.float32, -s, s),
        "w_hh": jax.random.uniform(ks[2], (3 * H, H), jnp.float32, -s, s),
        "b_ih": jax.random.uniform(ks[3], (3 * H,), jnp.float32, -s, s),
        "b_hh": jax.random.uniform(ks[4], (3 * H,), jnp.float32, -s, s),
        "w_out": jax.random.uniform(ks[5], (C, H), jnp.float32, -s, s),
        "b_out": jax.random.uniform(ks[6], (C,), jnp.float32, -s, s),
    }

    batch = jax.random.randint(ks[7], (B, T), 0, V, jnp.int32)
    # pack_padded_sequence default requires lengths sorted descending.
    length = jnp.array([8, 8, 7, 6, 5, 4, 3, 2], dtype=jnp.int32)

    out = seq_tagger_forward(batch, length, T, params)
    out = jax.block_until_ready(out)

    assert out.shape == (B, C, T), out.shape
    assert bool(jnp.all(jnp.isfinite(out)))

    ref = gru_tagger_reference(batch, length, params)
    max_err = float(jnp.max(jnp.abs(out - ref)))
    assert max_err < 5e-2, f"max abs error vs reference: {max_err}"

    print("KERNEL_OK")
</pallas_src>

<mosaic_0001>
module attributes {stable_mosaic.version = 11 : i64} {
  func.func @seq_tagger_kernel(%arg0: i32, %arg1: memref<8x8xi32, #tpu.memory_space<smem>>, %arg2: memref<8xi32, #tpu.memory_space<smem>>, %arg3: memref<56x32xbf16, #tpu.memory_space<vmem>>, %arg4: memref<32x384xbf16, #tpu.memory_space<vmem>>, %arg5: memref<128x384xbf16, #tpu.memory_space<vmem>>, %arg6: memref<1x384xf32, #tpu.memory_space<vmem>>, %arg7: memref<1x128xf32, #tpu.memory_space<vmem>>, %arg8: memref<128x128xbf16, #tpu.memory_space<vmem>>, %arg9: memref<1x128xf32, #tpu.memory_space<vmem>>, %arg10: memref<8x8x128xbf16, #tpu.memory_space<vmem>>, %arg11: memref<56x384xf32, #tpu.memory_space<vmem>>) attributes {dimension_semantics = [#tpu.dimension_semantics<arbitrary>], iteration_bounds = array<i64: 1>, scalar_prefetch = 2 : i64, scratch_operands = 1 : i64, tpu.core_type = #tpu.core_type<tc>, window_params = [{pipeline_mode = #tpu.pipeline_mode<synchronous>, transform_indices = @transform_0, window_bounds = array<i64: 56, 32>}, {pipeline_mode = #tpu.pipeline_mode<synchronous>, transform_indices = @transform_1, window_bounds = array<i64: 32, 384>}, {pipeline_mode = #tpu.pipeline_mode<synchronous>, transform_indices = @transform_2, window_bounds = array<i64: 128, 384>}, {pipeline_mode = #tpu.pipeline_mode<synchronous>, transform_indices = @transform_3, window_bounds = array<i64: 1, 384>}, {pipeline_mode = #tpu.pipeline_mode<synchronous>, transform_indices = @transform_4, window_bounds = array<i64: 1, 128>}, {pipeline_mode = #tpu.pipeline_mode<synchronous>, transform_indices = @transform_5, window_bounds = array<i64: 128, 128>}, {pipeline_mode = #tpu.pipeline_mode<synchronous>, transform_indices = @transform_6, window_bounds = array<i64: 1, 128>}, {transform_indices = @transform_7, window_bounds = array<i64: 8, 8, 128>}]} {
    %c8_i32 = arith.constant 8 : i32
    %0 = arith.muli %arg0, %c8_i32 : i32
    %c0 = arith.constant 0 : index
    %c0_0 = arith.constant 0 : index
    %1 = vector.load %arg3[%c0, %c0_0] : memref<56x32xbf16, #tpu.memory_space<vmem>>, vector<56x32xbf16>
    %c0_1 = arith.constant 0 : index
    %c0_2 = arith.constant 0 : index
    %2 = vector.load %arg4[%c0_1, %c0_2] : memref<32x384xbf16, #tpu.memory_space<vmem>>, vector<32x384xbf16>
    %cst = arith.constant dense<0.000000e+00> : vector<56x384xf32>
    %3 = tpu.matmul %1, %2, %cst {dimension_numbers = #tpu.dot_dimension_numbers<[1], [0], [0], [1], [0, 0, 1, 1], [], []>} : vector<56x32xbf16>, vector<32x384xbf16>, vector<56x384xf32> -> vector<56x384xf32>
    %c0_3 = arith.constant 0 : index
    %c0_4 = arith.constant 0 : index
    %4 = vector.load %arg6[%c0_3, %c0_4] : memref<1x384xf32, #tpu.memory_space<vmem>>, vector<1x384xf32>
    %5 = vector.broadcast %4 : vector<1x384xf32> to vector<56x384xf32>
    %6 = arith.addf %3, %5 : vector<56x384xf32>
    %c0_5 = arith.constant 0 : index
    %c0_6 = arith.constant 0 : index
    %7 = vector.load %arg11[%c0_5, %c0_6] : memref<56x384xf32, #tpu.memory_space<vmem>>, vector<56x384xf32>
    tpu.vector_store %arg11[%c0_5, %c0_6], %6 {strides = array<i32>} : memref<56x384xf32, #tpu.memory_space<vmem>>, vector<56x384xf32>,
    %c0_7 = arith.constant 0 : index
    %c0_8 = arith.constant 0 : index
    %8 = vector.load %arg5[%c0_7, %c0_8] : memref<128x384xbf16, #tpu.memory_space<vmem>>, vector<128x384xbf16>
    %c0_9 = arith.constant 0 : index
    %c0_10 = arith.constant 0 : index
    %9 = vector.load %arg7[%c0_9, %c0_10] : memref<1x128xf32, #tpu.memory_space<vmem>>, vector<1x128xf32>
    %10 = vector.shape_cast %9 : vector<1x128xf32> to vector<1x128xf32>
    %11 = vector.broadcast %10 : vector<1x128xf32> to vector<8x128xf32>
    %cst_11 = arith.constant 0.000000e+00 : f32
    %12 = vector.broadcast %cst_11 : f32 to vector<8x128xf32>
    %c0_i32 = arith.constant 0 : i32
    %13 = arith.addi %0, %c0_i32 : i32
    %c0_12 = arith.constant 0 : index
    %14 = arith.index_cast %13 : i32 to index
    %15 = memref.load %arg1[%c0_12, %14] : memref<8x8xi32, #tpu.memory_space<smem>>
    %16 = arith.index_cast %15 : i32 to index
    %c0_13 = arith.constant 0 : index
    %17 = vector.load %arg11[%16, %c0_13] : memref<56x384xf32, #tpu.memory_space<vmem>>, vector<1x384xf32>
    %c1_i32 = arith.constant 1 : i32
    %18 = arith.addi %0, %c1_i32 : i32
    %c0_14 = arith.constant 0 : index
    %19 = arith.index_cast %18 : i32 to index
    %20 = memref.load %arg1[%c0_14, %19] : memref<8x8xi32, #tpu.memory_space<smem>>
    %21 = arith.index_cast %20 : i32 to index
    %c0_15 = arith.constant 0 : index
    %22 = vector.load %arg11[%21, %c0_15] : memref<56x384xf32, #tpu.memory_space<vmem>>, vector<1x384xf32>
    %c2_i32 = arith.constant 2 : i32
    %23 = arith.addi %0, %c2_i32 : i32
    %c0_16 = arith.constant 0 : index
    %24 = arith.index_cast %23 : i32 to index
    %25 = memref.load %arg1[%c0_16, %24] : memref<8x8xi32, #tpu.memory_space<smem>>
    %26 = arith.index_cast %25 : i32 to index
    %c0_17 = arith.constant 0 : index
    %27 = vector.load %arg11[%26, %c0_17] : memref<56x384xf32, #tpu.memory_space<vmem>>, vector<1x384xf32>
    %c3_i32 = arith.constant 3 : i32
    %28 = arith.addi %0, %c3_i32 : i32
    %c0_18 = arith.constant 0 : index
    %29 = arith.index_cast %28 : i32 to index
    %30 = memref.load %arg1[%c0_18, %29] : memref<8x8xi32, #tpu.memory_space<smem>>
    %31 = arith.index_cast %30 : i32 to index
    %c0_19 = arith.constant 0 : index
    %32 = vector.load %arg11[%31, %c0_19] : memref<56x384xf32, #tpu.memory_space<vmem>>, vector<1x384xf32>
    %c4_i32 = arith.constant 4 : i32
    %33 = arith.addi %0, %c4_i32 : i32
    %c0_20 = arith.constant 0 : index
    %34 = arith.index_cast %33 : i32 to index
    %35 = memref.load %arg1[%c0_20, %34] : memref<8x8xi32, #tpu.memory_space<smem>>
    %36 = arith.index_cast %35 : i32 to index
    %c0_21 = arith.constant 0 : index
    %37 = vector.load %arg11[%36, %c0_21] : memref<56x384xf32, #tpu.memory_space<vmem>>, vector<1x384xf32>
    %c5_i32 = arith.constant 5 : i32
    %38 = arith.addi %0, %c5_i32 : i32
    %c0_22 = arith.constant 0 : index
    %39 = arith.index_cast %38 : i32 to index
    %40 = memref.load %arg1[%c0_22, %39] : memref<8x8xi32, #tpu.memory_space<smem>>
    %41 = arith.index_cast %40 : i32 to index
    %c0_23 = arith.constant 0 : index
    %42 = vector.load %arg11[%41, %c0_23] : memref<56x384xf32, #tpu.memory_space<vmem>>, vector<1x384xf32>
    %c6_i32 = arith.constant 6 : i32
    %43 = arith.addi %0, %c6_i32 : i32
    %c0_24 = arith.constant 0 : index
    %44 = arith.index_cast %43 : i32 to index
    %45 = memref.load %arg1[%c0_24, %44] : memref<8x8xi32, #tpu.memory_space<smem>>
    %46 = arith.index_cast %45 : i32 to index
    %c0_25 = arith.constant 0 : index
    %47 = vector.load %arg11[%46, %c0_25] : memref<56x384xf32, #tpu.memory_space<vmem>>, vector<1x384xf32>
    %c7_i32 = arith.constant 7 : i32
    %48 = arith.addi %0, %c7_i32 : i32
    %c0_26 = arith.constant 0 : index
    %49 = arith.index_cast %48 : i32 to index
    %50 = memref.load %arg1[%c0_26, %49] : memref<8x8xi32, #tpu.memory_space<smem>>
    %51 = arith.index_cast %50 : i32 to index
    %c0_27 = arith.constant 0 : index
    %52 = vector.load %arg11[%51, %c0_27] : memref<56x384xf32, #tpu.memory_space<vmem>>, vector<1x384xf32>
    %53 = tpu.concatenate %17, %22, %27, %32, %37, %42, %47, %52 in 0 : vector<1x384xf32>, vector<1x384xf32>, vector<1x384xf32>, vector<1x384xf32>, vector<1x384xf32>, vector<1x384xf32>, vector<1x384xf32>, vector<1x384xf32> -> vector<8x384xf32>
    %54 = arith.truncf %12 : vector<8x128xf32> to vector<8x128xbf16>
    %cst_28 = arith.constant dense<0.000000e+00> : vector<8x384xf32>
    %55 = tpu.matmul %54, %8, %cst_28 {dimension_numbers = #tpu.dot_dimension_numbers<[1], [0], [0], [1], [0, 0, 1, 1], [], []>} : vector<8x128xbf16>, vector<128x384xbf16>, vector<8x384xf32> -> vector<8x384xf32>
    %56 = vector.extract_strided_slice %53 {offsets = [0, 0], sizes = [8, 128], strides = [1, 1]} : vector<8x384xf32> to vector<8x128xf32>
    %57 = vector.extract_strided_slice %55 {offsets = [0, 0], sizes = [8, 128], strides = [1, 1]} : vector<8x384xf32> to vector<8x128xf32>
    %58 = arith.addf %56, %57 : vector<8x128xf32>
    %59 = arith.negf %58 : vector<8x128xf32>
    %60 = math.exp %59 : vector<8x128xf32>
    %cst_29 = arith.constant 1.000000e+00 : f32
    %61 = vector.broadcast %cst_29 : f32 to vector<8x128xf32>
    %62 = arith.addf %61, %60 : vector<8x128xf32>
    %63 = arith.divf %61, %62 : vector<8x128xf32>
    %64 = vector.extract_strided_slice %53 {offsets = [0, 128], sizes = [8, 128], strides = [1, 1]} : vector<8x384xf32> to vector<8x128xf32>
    %65 = vector.extract_strided_slice %55 {offsets = [0, 128], sizes = [8, 128], strides = [1, 1]} : vector<8x384xf32> to vector<8x128xf32>
    %66 = arith.addf %64, %65 : vector<8x128xf32>
    %67 = arith.negf %66 : vector<8x128xf32>
    %68 = math.exp %67 : vector<8x128xf32>
    %cst_30 = arith.constant 1.000000e+00 : f32
    %69 = vector.broadcast %cst_30 : f32 to vector<8x128xf32>
    %70 = arith.addf %69, %68 : vector<8x128xf32>
    %71 = arith.divf %69, %70 : vector<8x128xf32>
    %72 = vector.extract_strided_slice %53 {offsets = [0, 256], sizes = [8, 128], strides = [1, 1]} : vector<8x384xf32> to vector<8x128xf32>
    %73 = vector.extract_strided_slice %55 {offsets = [0, 256], sizes = [8, 128], strides = [1, 1]} : vector<8x384xf32> to vector<8x128xf32>
    %74 = arith.addf %73, %11 : vector<8x128xf32>
    %75 = arith.mulf %63, %74 : vector<8x128xf32>
    %76 = arith.addf %72, %75 : vector<8x128xf32>
    %77 = math.tanh %76 : vector<8x128xf32>
    %cst_31 = arith.constant 1.000000e+00 : f32
    %78 = vector.broadcast %cst_31 : f32 to vector<8x128xf32>
    %79 = arith.subf %78, %71 : vector<8x128xf32>
    %80 = arith.mulf %79, %77 : vector<8x128xf32>
    %81 = arith.mulf %71, %12 : vector<8x128xf32>
    %82 = arith.addf %80, %81 : vector<8x128xf32>
    %c0_i32_32 = arith.constant 0 : i32
    %83 = arith.addi %0, %c0_i32_32 : i32
    %c1 = arith.constant 1 : index
    %84 = arith.index_cast %83 : i32 to index
    %85 = memref.load %arg1[%c1, %84] : memref<8x8xi32, #tpu.memory_space<smem>>
    %86 = arith.index_cast %85 : i32 to index
    %c0_33 = arith.constant 0 : index
    %87 = vector.load %arg11[%86, %c0_33] : memref<56x384xf32, #tpu.memory_space<vmem>>, vector<1x384xf32>
    %c1_i32_34 = arith.constant 1 : i32
    %88 = arith.addi %0, %c1_i32_34 : i32
    %c1_35 = arith.constant 1 : index
    %89 = arith.index_cast %88 : i32 to index
    %90 = memref.load %arg1[%c1_35, %89] : memref<8x8xi32, #tpu.memory_space<smem>>
    %91 = arith.index_cast %90 : i32 to index
    %c0_36 = arith.constant 0 : index
    %92 = vector.load %arg11[%91, %c0_36] : memref<56x384xf32, #tpu.memory_space<vmem>>, vector<1x384xf32>
    %c2_i32_37 = arith.constant 2 : i32
    %93 = arith.addi %0, %c2_i32_37 : i32
    %c1_38 = arith.constant 1 : index
    %94 = arith.index_cast %93 : i32 to index
    %95 = memref.load %arg1[%c1_38, %94] : memref<8x8xi32, #tpu.memory_space<smem>>
    %96 = arith.index_cast %95 : i32 to index
    %c0_39 = arith.constant 0 : index
    %97 = vector.load %arg11[%96, %c0_39] : memref<56x384xf32, #tpu.memory_space<vmem>>, vector<1x384xf32>
    %c3_i32_40 = arith.constant 3 : i32
    %98 = arith.addi %0, %c3_i32_40 : i32
    %c1_41 = arith.constant 1 : index
    %99 = arith.index_cast %98 : i32 to index
    %100 = memref.load %arg1[%c1_41, %99] : memref<8x8xi32, #tpu.memory_space<smem>>
    %101 = arith.index_cast %100 : i32 to index
    %c0_42 = arith.constant 0 : index
    %102 = vector.load %arg11[%101, %c0_42] : memref<56x384xf32, #tpu.memory_space<vmem>>, vector<1x384xf32>
    %c4_i32_43 = arith.constant 4 : i32
    %103 = arith.addi %0, %c4_i32_43 : i32
    %c1_44 = arith.constant 1 : index
    %104 = arith.index_cast %103 : i32 to index
    %105 = memref.load %arg1[%c1_44, %104] : memref<8x8xi32, #tpu.memory_space<smem>>
    %106 = arith.index_cast %105 : i32 to index
    %c0_45 = arith.constant 0 : index
    %107 = vector.load %arg11[%106, %c0_45] : memref<56x384xf32, #tpu.memory_space<vmem>>, vector<1x384xf32>
    %c5_i32_46 = arith.constant 5 : i32
    %108 = arith.addi %0, %c5_i32_46 : i32
    %c1_47 = arith.constant 1 : index
    %109 = arith.index_cast %108 : i32 to index
    %110 = memref.load %arg1[%c1_47, %109] : memref<8x8xi32, #tpu.memory_space<smem>>
    %111 = arith.index_cast %110 : i32 to index
    %c0_48 = arith.constant 0 : index
    %112 = vector.load %arg11[%111, %c0_48] : memref<56x384xf32, #tpu.memory_space<vmem>>, vector<1x384xf32>
    %c6_i32_49 = arith.constant 6 : i32
    %113 = arith.addi %0, %c6_i32_49 : i32
    %c1_50 = arith.constant 1 : index
    %114 = arith.index_cast %113 : i32 to index
    %115 = memref.load %arg1[%c1_50, %114] : memref<8x8xi32, #tpu.memory_space<smem>>
    %116 = arith.index_cast %115 : i32 to index
    %c0_51 = arith.constant 0 : index
    %117 = vector.load %arg11[%116, %c0_51] : memref<56x384xf32, #tpu.memory_space<vmem>>, vector<1x384xf32>
    %c7_i32_52 = arith.constant 7 : i32
    %118 = arith.addi %0, %c7_i32_52 : i32
    %c1_53 = arith.constant 1 : index
    %119 = arith.index_cast %118 : i32 to index
    %120 = memref.load %arg1[%c1_53, %119] : memref<8x8xi32, #tpu.memory_space<smem>>
    %121 = arith.index_cast %120 : i32 to index
    %c0_54 = arith.constant 0 : index
    %122 = vector.load %arg11[%121, %c0_54] : memref<56x384xf32, #tpu.memory_space<vmem>>, vector<1x384xf32>
    %123 = tpu.concatenate %87, %92, %97, %102, %107, %112, %117, %122 in 0 : vector<1x384xf32>, vector<1x384xf32>, vector<1x384xf32>, vector<1x384xf32>, vector<1x384xf32>, vector<1x384xf32>, vector<1x384xf32>, vector<1x384xf32> -> vector<8x384xf32>
    %124 = arith.truncf %82 : vector<8x128xf32> to vector<8x128xbf16>
    %cst_55 = arith.constant dense<0.000000e+00> : vector<8x384xf32>
    %125 = tpu.matmul %124, %8, %cst_55 {dimension_numbers = #tpu.dot_dimension_numbers<[1], [0], [0], [1], [0, 0, 1, 1], [], []>} : vector<8x128xbf16>, vector<128x384xbf16>, vector<8x384xf32> -> vector<8x384xf32>
    %126 = vector.extract_strided_slice %123 {offsets = [0, 0], sizes = [8, 128], strides = [1, 1]} : vector<8x384xf32> to vector<8x128xf32>
    %127 = vector.extract_strided_slice %125 {offsets = [0, 0], sizes = [8, 128], strides = [1, 1]} : vector<8x384xf32> to vector<8x128xf32>
    %128 = arith.addf %126, %127 : vector<8x128xf32>
    %129 = arith.negf %128 : vector<8x128xf32>
    %130 = math.exp %129 : vector<8x128xf32>
    %cst_56 = arith.constant 1.000000e+00 : f32
    %131 = vector.broadcast %cst_56 : f32 to vector<8x128xf32>
    %132 = arith.addf %131, %130 : vector<8x128xf32>
    %133 = arith.divf %131, %132 : vector<8x128xf32>
    %134 = vector.extract_strided_slice %123 {offsets = [0, 128], sizes = [8, 128], strides = [1, 1]} : vector<8x384xf32> to vector<8x128xf32>
    %135 = vector.extract_strided_slice %125 {offsets = [0, 128], sizes = [8, 128], strides = [1, 1]} : vector<8x384xf32> to vector<8x128xf32>
    %136 = arith.addf %134, %135 : vector<8x128xf32>
    %137 = arith.negf %136 : vector<8x128xf32>
    %138 = math.exp %137 : vector<8x128xf32>
    %cst_57 = arith.constant 1.000000e+00 : f32
    %139 = vector.broadcast %cst_57 : f32 to vector<8x128xf32>
    %140 = arith.addf %139, %138 : vector<8x128xf32>
    %141 = arith.divf %139, %140 : vector<8x128xf32>
    %142 = vector.extract_strided_slice %123 {offsets = [0, 256], sizes = [8, 128], strides = [1, 1]} : vector<8x384xf32> to vector<8x128xf32>
    %143 = vector.extract_strided_slice %125 {offsets = [0, 256], sizes = [8, 128], strides = [1, 1]} : vector<8x384xf32> to vector<8x128xf32>
    %144 = arith.addf %143, %11 : vector<8x128xf32>
    %145 = arith.mulf %133, %144 : vector<8x128xf32>
    %146 = arith.addf %142, %145 : vector<8x128xf32>
    %147 = math.tanh %146 : vector<8x128xf32>
    %cst_58 = arith.constant 1.000000e+00 : f32
    %148 = vector.broadcast %cst_58 : f32 to vector<8x128xf32>
    %149 = arith.subf %148, %141 : vector<8x128xf32>
    %150 = arith.mulf %149, %147 : vector<8x128xf32>
    %151 = arith.mulf %141, %82 : vector<8x128xf32>
    %152 = arith.addf %150, %151 : vector<8x128xf32>
    %c0_i32_59 = arith.constant 0 : i32
    %153 = arith.addi %0, %c0_i32_59 : i32
    %c2 = arith.constant 2 : index
    %154 = arith.index_cast %153 : i32 to index
    %155 = memref.load %arg1[%c2, %154] : memref<8x8xi32, #tpu.memory_space<smem>>
    %156 = arith.index_cast %155 : i32 to index
    %c0_60 = arith.constant 0 : index
    %157 = vector.load %arg11[%156, %c0_60] : memref<56x384xf32, #tpu.memory_space<vmem>>, vector<1x384xf32>
    %c1_i32_61 = arith.constant 1 : i32
    %158 = arith.addi %0, %c1_i32_61 : i32
    %c2_62 = arith.constant 2 : index
    %159 = arith.index_cast %158 : i32 to index
    %160 = memref.load %arg1[%c2_62, %159] : memref<8x8xi32, #tpu.memory_space<smem>>
    %161 = arith.index_cast %160 : i32 to index
    %c0_63 = arith.constant 0 : index
    %162 = vector.load %arg11[%161, %c0_63] : memref<56x384xf32, #tpu.memory_space<vmem>>, vector<1x384xf32>
    %c2_i32_64 = arith.constant 2 : i32
    %163 = arith.addi %0, %c2_i32_64 : i32
    %c2_65 = arith.constant 2 : index
    %164 = arith.index_cast %163 : i32 to index
    %165 = memref.load %arg1[%c2_65, %164] : memref<8x8xi32, #tpu.memory_space<smem>>
    %166 = arith.index_cast %165 : i32 to index
    %c0_66 = arith.constant 0 : index
    %167 = vector.load %arg11[%166, %c0_66] : memref<56x384xf32, #tpu.memory_space<vmem>>, vector<1x384xf32>
    %c3_i32_67 = arith.constant 3 : i32
    %168 = arith.addi %0, %c3_i32_67 : i32
    %c2_68 = arith.constant 2 : index
    %169 = arith.index_cast %168 : i32 to index
    %170 = memref.load %arg1[%c2_68, %169] : memref<8x8xi32, #tpu.memory_space<smem>>
    %171 = arith.index_cast %170 : i32 to index
    %c0_69 = arith.constant 0 : index
    %172 = vector.load %arg11[%171, %c0_69] : memref<56x384xf32, #tpu.memory_space<vmem>>, vector<1x384xf32>
    %c4_i32_70 = arith.constant 4 : i32
    %173 = arith.addi %0, %c4_i32_70 : i32
    %c2_71 = arith.constant 2 : index
    %174 = arith.index_cast %173 : i32 to index
    %175 = memref.load %arg1[%c2_71, %174] : memref<8x8xi32, #tpu.memory_space<smem>>
    %176 = arith.index_cast %175 : i32 to index
    %c0_72 = arith.constant 0 : index
    %177 = vector.load %arg11[%176, %c0_72] : memref<56x384xf32, #tpu.memory_space<vmem>>, vector<1x384xf32>
    %c5_i32_73 = arith.constant 5 : i32
    %178 = arith.addi %0, %c5_i32_73 : i32
    %c2_74 = arith.constant 2 : index
    %179 = arith.index_cast %178 : i32 to index
    %180 = memref.load %arg1[%c2_74, %179] : memref<8x8xi32, #tpu.memory_space<smem>>
    %181 = arith.index_cast %180 : i32 to index
    %c0_75 = arith.constant 0 : index
    %182 = vector.load %arg11[%181, %c0_75] : memref<56x384xf32, #tpu.memory_space<vmem>>, vector<1x384xf32>
    %c6_i32_76 = arith.constant 6 : i32
    %183 = arith.addi %0, %c6_i32_76 : i32
    %c2_77 = arith.constant 2 : index
    %184 = arith.index_cast %183 : i32 to index
    %185 = memref.load %arg1[%c2_77, %184] : memref<8x8xi32, #tpu.memory_space<smem>>
    %186 = arith.index_cast %185 : i32 to index
    %c0_78 = arith.constant 0 : index
    %187 = vector.load %arg11[%186, %c0_78] : memref<56x384xf32, #tpu.memory_space<vmem>>, vector<1x384xf32>
    %c7_i32_79 = arith.constant 7 : i32
    %188 = arith.addi %0, %c7_i32_79 : i32
    %c2_80 = arith.constant 2 : index
    %189 = arith.index_cast %188 : i32 to index
    %190 = memref.load %arg1[%c2_80, %189] : memref<8x8xi32, #tpu.memory_space<smem>>
    %191 = arith.index_cast %190 : i32 to index
    %c0_81 = arith.constant 0 : index
    %192 = vector.load %arg11[%191, %c0_81] : memref<56x384xf32, #tpu.memory_space<vmem>>, vector<1x384xf32>
    %193 = tpu.concatenate %157, %162, %167, %172, %177, %182, %187, %192 in 0 : vector<1x384xf32>, vector<1x384xf32>, vector<1x384xf32>, vector<1x384xf32>, vector<1x384xf32>, vector<1x384xf32>, vector<1x384xf32>, vector<1x384xf32> -> vector<8x384xf32>
    %194 = arith.truncf %152 : vector<8x128xf32> to vector<8x128xbf16>
    %cst_82 = arith.constant dense<0.000000e+00> : vector<8x384xf32>
    %195 = tpu.matmul %194, %8, %cst_82 {dimension_numbers = #tpu.dot_dimension_numbers<[1], [0], [0], [1], [0, 0, 1, 1], [], []>} : vector<8x128xbf16>, vector<128x384xbf16>, vector<8x384xf32> -> vector<8x384xf32>
    %196 = vector.extract_strided_slice %193 {offsets = [0, 0], sizes = [8, 128], strides = [1, 1]} : vector<8x384xf32> to vector<8x128xf32>
    %197 = vector.extract_strided_slice %195 {offsets = [0, 0], sizes = [8, 128], strides = [1, 1]} : vector<8x384xf32> to vector<8x128xf32>
    %198 = arith.addf %196, %197 : vector<8x128xf32>
    %199 = arith.negf %198 : vector<8x128xf32>
    %200 = math.exp %199 : vector<8x128xf32>
    %cst_83 = arith.constant 1.000000e+00 : f32
    %201 = vector.broadcast %cst_83 : f32 to vector<8x128xf32>
    %202 = arith.addf %201, %200 : vector<8x128xf32>
    %203 = arith.divf %201, %202 : vector<8x128xf32>
    %204 = vector.extract_strided_slice %193 {offsets = [0, 128], sizes = [8, 128], strides = [1, 1]} : vector<8x384xf32> to vector<8x128xf32>
    %205 = vector.extract_strided_slice %195 {offsets = [0, 128], sizes = [8, 128], strides = [1, 1]} : vector<8x384xf32> to vector<8x128xf32>
    %206 = arith.addf %204, %205 : vector<8x128xf32>
    %207 = arith.negf %206 : vector<8x128xf32>
    %208 = math.exp %207 : vector<8x128xf32>
    %cst_84 = arith.constant 1.000000e+00 : f32
    %209 = vector.broadcast %cst_84 : f32 to vector<8x128xf32>
    %210 = arith.addf %209, %208 : vector<8x128xf32>
    %211 = arith.divf %209, %210 : vector<8x128xf32>
    %212 = vector.extract_strided_slice %193 {offsets = [0, 256], sizes = [8, 128], strides = [1, 1]} : vector<8x384xf32> to vector<8x128xf32>
    %213 = vector.extract_strided_slice %195 {offsets = [0, 256], sizes = [8, 128], strides = [1, 1]} : vector<8x384xf32> to vector<8x128xf32>
    %214 = arith.addf %213, %11 : vector<8x128xf32>
    %215 = arith.mulf %203, %214 : vector<8x128xf32>
    %216 = arith.addf %212, %215 : vector<8x128xf32>
    %217 = math.tanh %216 : vector<8x128xf32>
    %cst_85 = arith.constant 1.000000e+00 : f32
    %218 = vector.broadcast %cst_85 : f32 to vector<8x128xf32>
    %219 = arith.subf %218, %211 : vector<8x128xf32>
    %220 = arith.mulf %219, %217 : vector<8x128xf32>
    %221 = arith.mulf %211, %152 : vector<8x128xf32>
    %222 = arith.addf %220, %221 : vector<8x128xf32>
    %c0_i32_86 = arith.constant 0 : i32
    %223 = arith.addi %0, %c0_i32_86 : i32
    %c3 = arith.constant 3 : index
    %224 = arith.index_cast %223 : i32 to index
    %225 = memref.load %arg1[%c3, %224] : memref<8x8xi32, #tpu.memory_space<smem>>
    %226 = arith.index_cast %225 : i32 to index
    %c0_87 = arith.constant 0 : index
    %227 = vector.load %arg11[%226, %c0_87] : memref<56x384xf32, #tpu.memory_space<vmem>>, vector<1x384xf32>
    %c1_i32_88 = arith.constant 1 : i32
    %228 = arith.addi %0, %c1_i32_88 : i32
    %c3_89 = arith.constant 3 : index
    %229 = arith.index_cast %228 : i32 to index
    %230 = memref.load %arg1[%c3_89, %229] : memref<8x8xi32, #tpu.memory_space<smem>>
    %231 = arith.index_cast %230 : i32 to index
    %c0_90 = arith.constant 0 : index
    %232 = vector.load %arg11[%231, %c0_90] : memref<56x384xf32, #tpu.memory_space<vmem>>, vector<1x384xf32>
    %c2_i32_91 = arith.constant 2 : i32
    %233 = arith.addi %0, %c2_i32_91 : i32
    %c3_92 = arith.constant 3 : index
    %234 = arith.index_cast %233 : i32 to index
    %235 = memref.load %arg1[%c3_92, %234] : memref<8x8xi32, #tpu.memory_space<smem>>
    %236 = arith.index_cast %235 : i32 to index
    %c0_93 = arith.constant 0 : index
    %237 = vector.load %arg11[%236, %c0_93] : memref<56x384xf32, #tpu.memory_space<vmem>>, vector<1x384xf32>
    %c3_i32_94 = arith.constant 3 : i32
    %238 = arith.addi %0, %c3_i32_94 : i32
    %c3_95 = arith.constant 3 : index
    %239 = arith.index_cast %238 : i32 to index
    %240 = memref.load %arg1[%c3_95, %239] : memref<8x8xi32, #tpu.memory_space<smem>>
    %241 = arith.index_cast %240 : i32 to index
    %c0_96 = arith.constant 0 : index
    %242 = vector.load %arg11[%241, %c0_96] : memref<56x384xf32, #tpu.memory_space<vmem>>, vector<1x384xf32>
    %c4_i32_97 = arith.constant 4 : i32
    %243 = arith.addi %0, %c4_i32_97 : i32
    %c3_98 = arith.constant 3 : index
    %244 = arith.index_cast %243 : i32 to index
    %245 = memref.load %arg1[%c3_98, %244] : memref<8x8xi32, #tpu.memory_space<smem>>
    %246 = arith.index_cast %245 : i32 to index
    %c0_99 = arith.constant 0 : index
    %247 = vector.load %arg11[%246, %c0_99] : memref<56x384xf32, #tpu.memory_space<vmem>>, vector<1x384xf32>
    %c5_i32_100 = arith.constant 5 : i32
    %248 = arith.addi %0, %c5_i32_100 : i32
    %c3_101 = arith.constant 3 : index
    %249 = arith.index_cast %248 : i32 to index
    %250 = memref.load %arg1[%c3_101, %249] : memref<8x8xi32, #tpu.memory_space<smem>>
    %251 = arith.index_cast %250 : i32 to index
    %c0_102 = arith.constant 0 : index
    %252 = vector.load %arg11[%251, %c0_102] : memref<56x384xf32, #tpu.memory_space<vmem>>, vector<1x384xf32>
    %c6_i32_103 = arith.constant 6 : i32
    %253 = arith.addi %0, %c6_i32_103 : i32
    %c3_104 = arith.constant 3 : index
    %254 = arith.index_cast %253 : i32 to index
    %255 = memref.load %arg1[%c3_104, %254] : memref<8x8xi32, #tpu.memory_space<smem>>
    %256 = arith.index_cast %255 : i32 to index
    %c0_105 = arith.constant 0 : index
    %257 = vector.load %arg11[%256, %c0_105] : memref<56x384xf32, #tpu.memory_space<vmem>>, vector<1x384xf32>
    %c7_i32_106 = arith.constant 7 : i32
    %258 = arith.addi %0, %c7_i32_106 : i32
    %c3_107 = arith.constant 3 : index
    %259 = arith.index_cast %258 : i32 to index
    %260 = memref.load %arg1[%c3_107, %259] : memref<8x8xi32, #tpu.memory_space<smem>>
    %261 = arith.index_cast %260 : i32 to index
    %c0_108 = arith.constant 0 : index
    %262 = vector.load %arg11[%261, %c0_108] : memref<56x384xf32, #tpu.memory_space<vmem>>, vector<1x384xf32>
    %263 = tpu.concatenate %227, %232, %237, %242, %247, %252, %257, %262 in 0 : vector<1x384xf32>, vector<1x384xf32>, vector<1x384xf32>, vector<1x384xf32>, vector<1x384xf32>, vector<1x384xf32>, vector<1x384xf32>, vector<1x384xf32> -> vector<8x384xf32>
    %264 = arith.truncf %222 : vector<8x128xf32> to vector<8x128xbf16>
    %cst_109 = arith.constant dense<0.000000e+00> : vector<8x384xf32>
    %265 = tpu.matmul %264, %8, %cst_109 {dimension_numbers = #tpu.dot_dimension_numbers<[1], [0], [0], [1], [0, 0, 1, 1], [], []>} : vector<8x128xbf16>, vector<128x384xbf16>, vector<8x384xf32> -> vector<8x384xf32>
    %266 = vector.extract_strided_slice %263 {offsets = [0, 0], sizes = [8, 128], strides = [1, 1]} : vector<8x384xf32> to vector<8x128xf32>
    %267 = vector.extract_strided_slice %265 {offsets = [0, 0], sizes = [8, 128], strides = [1, 1]} : vector<8x384xf32> to vector<8x128xf32>
    %268 = arith.addf %266, %267 : vector<8x128xf32>
    %269 = arith.negf %268 : vector<8x128xf32>
    %270 = math.exp %269 : vector<8x128xf32>
    %cst_110 = arith.constant 1.000000e+00 : f32
    %271 = vector.broadcast %cst_110 : f32 to vector<8x128xf32>
    %272 = arith.addf %271, %270 : vector<8x128xf32>
    %273 = arith.divf %271, %272 : vector<8x128xf32>
    %274 = vector.extract_strided_slice %263 {offsets = [0, 128], sizes = [8, 128], strides = [1, 1]} : vector<8x384xf32> to vector<8x128xf32>
    %275 = vector.extract_strided_slice %265 {offsets = [0, 128], sizes = [8, 128], strides = [1, 1]} : vector<8x384xf32> to vector<8x128xf32>
    %276 = arith.addf %274, %275 : vector<8x128xf32>
    %277 = arith.negf %276 : vector<8x128xf32>
    %278 = math.exp %277 : vector<8x128xf32>
    %cst_111 = arith.constant 1.000000e+00 : f32
    %279 = vector.broadcast %cst_111 : f32 to vector<8x128xf32>
    %280 = arith.addf %279, %278 : vector<8x128xf32>
    %281 = arith.divf %279, %280 : vector<8x128xf32>
    %282 = vector.extract_strided_slice %263 {offsets = [0, 256], sizes = [8, 128], strides = [1, 1]} : vector<8x384xf32> to vector<8x128xf32>
    %283 = vector.extract_strided_slice %265 {offsets = [0, 256], sizes = [8, 128], strides = [1, 1]} : vector<8x384xf32> to vector<8x128xf32>
    %284 = arith.addf %283, %11 : vector<8x128xf32>
    %285 = arith.mulf %273, %284 : vector<8x128xf32>
    %286 = arith.addf %282, %285 : vector<8x128xf32>
    %287 = math.tanh %286 : vector<8x128xf32>
    %cst_112 = arith.constant 1.000000e+00 : f32
    %288 = vector.broadcast %cst_112 : f32 to vector<8x128xf32>
    %289 = arith.subf %288, %281 : vector<8x128xf32>
    %290 = arith.mulf %289, %287 : vector<8x128xf32>
    %291 = arith.mulf %281, %222 : vector<8x128xf32>
    %292 = arith.addf %290, %291 : vector<8x128xf32>
    %c0_i32_113 = arith.constant 0 : i32
    %293 = arith.addi %0, %c0_i32_113 : i32
    %c4 = arith.constant 4 : index
    %294 = arith.index_cast %293 : i32 to index
    %295 = memref.load %arg1[%c4, %294] : memref<8x8xi32, #tpu.memory_space<smem>>
    %296 = arith.index_cast %295 : i32 to index
    %c0_114 = arith.constant 0 : index
    %297 = vector.load %arg11[%296, %c0_114] : memref<56x384xf32, #tpu.memory_space<vmem>>, vector<1x384xf32>
    %c1_i32_115 = arith.constant 1 : i32
    %298 = arith.addi %0, %c1_i32_115 : i32
    %c4_116 = arith.constant 4 : index
    %299 = arith.index_cast %298 : i32 to index
    %300 = memref.load %arg1[%c4_116, %299] : memref<8x8xi32, #tpu.memory_space<smem>>
    %301 = arith.index_cast %300 : i32 to index
    %c0_117 = arith.constant 0 : index
    %302 = vector.load %arg11[%301, %c0_117] : memref<56x384xf32, #tpu.memory_space<vmem>>, vector<1x384xf32>
    %c2_i32_118 = arith.constant 2 : i32
    %303 = arith.addi %0, %c2_i32_118 : i32
    %c4_119 = arith.constant 4 : index
    %304 = arith.index_cast %303 : i32 to index
    %305 = memref.load %arg1[%c4_119, %304] : memref<8x8xi32, #tpu.memory_space<smem>>
    %306 = arith.index_cast %305 : i32 to index
    %c0_120 = arith.constant 0 : index
    %307 = vector.load %arg11[%306, %c0_120] : memref<56x384xf32, #tpu.memory_space<vmem>>, vector<1x384xf32>
    %c3_i32_121 = arith.constant 3 : i32
    %308 = arith.addi %0, %c3_i32_121 : i32
    %c4_122 = arith.constant 4 : index
    %309 = arith.index_cast %308 : i32 to index
    %310 = memref.load %arg1[%c4_122, %309] : memref<8x8xi32, #tpu.memory_space<smem>>
    %311 = arith.index_cast %310 : i32 to index
    %c0_123 = arith.constant 0 : index
    %312 = vector.load %arg11[%311, %c0_123] : memref<56x384xf32, #tpu.memory_space<vmem>>, vector<1x384xf32>
    %c4_i32_124 = arith.constant 4 : i32
    %313 = arith.addi %0, %c4_i32_124 : i32
    %c4_125 = arith.constant 4 : index
    %314 = arith.index_cast %313 : i32 to index
    %315 = memref.load %arg1[%c4_125, %314] : memref<8x8xi32, #tpu.memory_space<smem>>
    %316 = arith.index_cast %315 : i32 to index
    %c0_126 = arith.constant 0 : index
    %317 = vector.load %arg11[%316, %c0_126] : memref<56x384xf32, #tpu.memory_space<vmem>>, vector<1x384xf32>
    %c5_i32_127 = arith.constant 5 : i32
    %318 = arith.addi %0, %c5_i32_127 : i32
    %c4_128 = arith.constant 4 : index
    %319 = arith.index_cast %318 : i32 to index
    %320 = memref.load %arg1[%c4_128, %319] : memref<8x8xi32, #tpu.memory_space<smem>>
    %321 = arith.index_cast %320 : i32 to index
    %c0_129 = arith.constant 0 : index
    %322 = vector.load %arg11[%321, %c0_129] : memref<56x384xf32, #tpu.memory_space<vmem>>, vector<1x384xf32>
    %c6_i32_130 = arith.constant 6 : i32
    %323 = arith.addi %0, %c6_i32_130 : i32
    %c4_131 = arith.constant 4 : index
    %324 = arith.index_cast %323 : i32 to index
    %325 = memref.load %arg1[%c4_131, %324] : memref<8x8xi32, #tpu.memory_space<smem>>
    %326 = arith.index_cast %325 : i32 to index
    %c0_132 = arith.constant 0 : index
    %327 = vector.load %arg11[%326, %c0_132] : memref<56x384xf32, #tpu.memory_space<vmem>>, vector<1x384xf32>
    %c7_i32_133 = arith.constant 7 : i32
    %328 = arith.addi %0, %c7_i32_133 : i32
    %c4_134 = arith.constant 4 : index
    %329 = arith.index_cast %328 : i32 to index
    %330 = memref.load %arg1[%c4_134, %329] : memref<8x8xi32, #tpu.memory_space<smem>>
    %331 = arith.index_cast %330 : i32 to index
    %c0_135 = arith.constant 0 : index
    %332 = vector.load %arg11[%331, %c0_135] : memref<56x384xf32, #tpu.memory_space<vmem>>, vector<1x384xf32>
    %333 = tpu.concatenate %297, %302, %307, %312, %317, %322, %327, %332 in 0 : vector<1x384xf32>, vector<1x384xf32>, vector<1x384xf32>, vector<1x384xf32>, vector<1x384xf32>, vector<1x384xf32>, vector<1x384xf32>, vector<1x384xf32> -> vector<8x384xf32>
    %334 = arith.truncf %292 : vector<8x128xf32> to vector<8x128xbf16>
    %cst_136 = arith.constant dense<0.000000e+00> : vector<8x384xf32>
    %335 = tpu.matmul %334, %8, %cst_136 {dimension_numbers = #tpu.dot_dimension_numbers<[1], [0], [0], [1], [0, 0, 1, 1], [], []>} : vector<8x128xbf16>, vector<128x384xbf16>, vector<8x384xf32> -> vector<8x384xf32>
    %336 = vector.extract_strided_slice %333 {offsets = [0, 0], sizes = [8, 128], strides = [1, 1]} : vector<8x384xf32> to vector<8x128xf32>
    %337 = vector.extract_strided_slice %335 {offsets = [0, 0], sizes = [8, 128], strides = [1, 1]} : vector<8x384xf32> to vector<8x128xf32>
    %338 = arith.addf %336, %337 : vector<8x128xf32>
    %339 = arith.negf %338 : vector<8x128xf32>
    %340 = math.exp %339 : vector<8x128xf32>
    %cst_137 = arith.constant 1.000000e+00 : f32
    %341 = vector.broadcast %cst_137 : f32 to vector<8x128xf32>
    %342 = arith.addf %341, %340 : vector<8x128xf32>
    %343 = arith.divf %341, %342 : vector<8x128xf32>
    %344 = vector.extract_strided_slice %333 {offsets = [0, 128], sizes = [8, 128], strides = [1, 1]} : vector<8x384xf32> to vector<8x128xf32>
    %345 = vector.extract_strided_slice %335 {offsets = [0, 128], sizes = [8, 128], strides = [1, 1]} : vector<8x384xf32> to vector<8x128xf32>
    %346 = arith.addf %344, %345 : vector<8x128xf32>
    %347 = arith.negf %346 : vector<8x128xf32>
    %348 = math.exp %347 : vector<8x128xf32>
    %cst_138 = arith.constant 1.000000e+00 : f32
    %349 = vector.broadcast %cst_138 : f32 to vector<8x128xf32>
    %350 = arith.addf %349, %348 : vector<8x128xf32>
    %351 = arith.divf %349, %350 : vector<8x128xf32>
    %352 = vector.extract_strided_slice %333 {offsets = [0, 256], sizes = [8, 128], strides = [1, 1]} : vector<8x384xf32> to vector<8x128xf32>
    %353 = vector.extract_strided_slice %335 {offsets = [0, 256], sizes = [8, 128], strides = [1, 1]} : vector<8x384xf32> to vector<8x128xf32>
    %354 = arith.addf %353, %11 : vector<8x128xf32>
    %355 = arith.mulf %343, %354 : vector<8x128xf32>
    %356 = arith.addf %352, %355 : vector<8x128xf32>
    %357 = math.tanh %356 : vector<8x128xf32>
    %cst_139 = arith.constant 1.000000e+00 : f32
    %358 = vector.broadcast %cst_139 : f32 to vector<8x128xf32>
    %359 = arith.subf %358, %351 : vector<8x128xf32>
    %360 = arith.mulf %359, %357 : vector<8x128xf32>
    %361 = arith.mulf %351, %292 : vector<8x128xf32>
    %362 = arith.addf %360, %361 : vector<8x128xf32>
    %c0_i32_140 = arith.constant 0 : i32
    %363 = arith.addi %0, %c0_i32_140 : i32
    %c5 = arith.constant 5 : index
    %364 = arith.index_cast %363 : i32 to index
    %365 = memref.load %arg1[%c5, %364] : memref<8x8xi32, #tpu.memory_space<smem>>
    %366 = arith.index_cast %365 : i32 to index
    %c0_141 = arith.constant 0 : index
    %367 = vector.load %arg11[%366, %c0_141] : memref<56x384xf32, #tpu.memory_space<vmem>>, vector<1x384xf32>
    %c1_i32_142 = arith.constant 1 : i32
    %368 = arith.addi %0, %c1_i32_142 : i32
    %c5_143 = arith.constant 5 : index
    %369 = arith.index_cast %368 : i32 to index
    %370 = memref.load %arg1[%c5_143, %369] : memref<8x8xi32, #tpu.memory_space<smem>>
    %371 = arith.index_cast %370 : i32 to index
    %c0_144 = arith.constant 0 : index
    %372 = vector.load %arg11[%371, %c0_144] : memref<56x384xf32, #tpu.memory_space<vmem>>, vector<1x384xf32>
    %c2_i32_145 = arith.constant 2 : i32
    %373 = arith.addi %0, %c2_i32_145 : i32
    %c5_146 = arith.constant 5 : index
    %374 = arith.index_cast %373 : i32 to index
    %375 = memref.load %arg1[%c5_146, %374] : memref<8x8xi32, #tpu.memory_space<smem>>
    %376 = arith.index_cast %375 : i32 to index
    %c0_147 = arith.constant 0 : index
    %377 = vector.load %arg11[%376, %c0_147] : memref<56x384xf32, #tpu.memory_space<vmem>>, vector<1x384xf32>
    %c3_i32_148 = arith.constant 3 : i32
    %378 = arith.addi %0, %c3_i32_148 : i32
    %c5_149 = arith.constant 5 : index
    %379 = arith.index_cast %378 : i32 to index
    %380 = memref.load %arg1[%c5_149, %379] : memref<8x8xi32, #tpu.memory_space<smem>>
    %381 = arith.index_cast %380 : i32 to index
    %c0_150 = arith.constant 0 : index
    %382 = vector.load %arg11[%381, %c0_150] : memref<56x384xf32, #tpu.memory_space<vmem>>, vector<1x384xf32>
    %c4_i32_151 = arith.constant 4 : i32
    %383 = arith.addi %0, %c4_i32_151 : i32
    %c5_152 = arith.constant 5 : index
    %384 = arith.index_cast %383 : i32 to index
    %385 = memref.load %arg1[%c5_152, %384] : memref<8x8xi32, #tpu.memory_space<smem>>
    %386 = arith.index_cast %385 : i32 to index
    %c0_153 = arith.constant 0 : index
    %387 = vector.load %arg11[%386, %c0_153] : memref<56x384xf32, #tpu.memory_space<vmem>>, vector<1x384xf32>
    %c5_i32_154 = arith.constant 5 : i32
    %388 = arith.addi %0, %c5_i32_154 : i32
    %c5_155 = arith.constant 5 : index
    %389 = arith.index_cast %388 : i32 to index
    %390 = memref.load %arg1[%c5_155, %389] : memref<8x8xi32, #tpu.memory_space<smem>>
    %391 = arith.index_cast %390 : i32 to index
    %c0_156 = arith.constant 0 : index
    %392 = vector.load %arg11[%391, %c0_156] : memref<56x384xf32, #tpu.memory_space<vmem>>, vector<1x384xf32>
    %c6_i32_157 = arith.constant 6 : i32
    %393 = arith.addi %0, %c6_i32_157 : i32
    %c5_158 = arith.constant 5 : index
    %394 = arith.index_cast %393 : i32 to index
    %395 = memref.load %arg1[%c5_158, %394] : memref<8x8xi32, #tpu.memory_space<smem>>
    %396 = arith.index_cast %395 : i32 to index
    %c0_159 = arith.constant 0 : index
    %397 = vector.load %arg11[%396, %c0_159] : memref<56x384xf32, #tpu.memory_space<vmem>>, vector<1x384xf32>
    %c7_i32_160 = arith.constant 7 : i32
    %398 = arith.addi %0, %c7_i32_160 : i32
    %c5_161 = arith.constant 5 : index
    %399 = arith.index_cast %398 : i32 to index
    %400 = memref.load %arg1[%c5_161, %399] : memref<8x8xi32, #tpu.memory_space<smem>>
    %401 = arith.index_cast %400 : i32 to index
    %c0_162 = arith.constant 0 : index
    %402 = vector.load %arg11[%401, %c0_162] : memref<56x384xf32, #tpu.memory_space<vmem>>, vector<1x384xf32>
    %403 = tpu.concatenate %367, %372, %377, %382, %387, %392, %397, %402 in 0 : vector<1x384xf32>, vector<1x384xf32>, vector<1x384xf32>, vector<1x384xf32>, vector<1x384xf32>, vector<1x384xf32>, vector<1x384xf32>, vector<1x384xf32> -> vector<8x384xf32>
    %404 = arith.truncf %362 : vector<8x128xf32> to vector<8x128xbf16>
    %cst_163 = arith.constant dense<0.000000e+00> : vector<8x384xf32>
    %405 = tpu.matmul %404, %8, %cst_163 {dimension_numbers = #tpu.dot_dimension_numbers<[1], [0], [0], [1], [0, 0, 1, 1], [], []>} : vector<8x128xbf16>, vector<128x384xbf16>, vector<8x384xf32> -> vector<8x384xf32>
    %406 = vector.extract_strided_slice %403 {offsets = [0, 0], sizes = [8, 128], strides = [1, 1]} : vector<8x384xf32> to vector<8x128xf32>
    %407 = vector.extract_strided_slice %405 {offsets = [0, 0], sizes = [8, 128], strides = [1, 1]} : vector<8x384xf32> to vector<8x128xf32>
    %408 = arith.addf %406, %407 : vector<8x128xf32>
    %409 = arith.negf %408 : vector<8x128xf32>
    %410 = math.exp %409 : vector<8x128xf32>
    %cst_164 = arith.constant 1.000000e+00 : f32
    %411 = vector.broadcast %cst_164 : f32 to vector<8x128xf32>
    %412 = arith.addf %411, %410 : vector<8x128xf32>
    %413 = arith.divf %411, %412 : vector<8x128xf32>
    %414 = vector.extract_strided_slice %403 {offsets = [0, 128], sizes = [8, 128], strides = [1, 1]} : vector<8x384xf32> to vector<8x128xf32>
    %415 = vector.extract_strided_slice %405 {offsets = [0, 128], sizes = [8, 128], strides = [1, 1]} : vector<8x384xf32> to vector<8x128xf32>
    %416 = arith.addf %414, %415 : vector<8x128xf32>
    %417 = arith.negf %416 : vector<8x128xf32>
    %418 = math.exp %417 : vector<8x128xf32>
    %cst_165 = arith.constant 1.000000e+00 : f32
    %419 = vector.broadcast %cst_165 : f32 to vector<8x128xf32>
    %420 = arith.addf %419, %418 : vector<8x128xf32>
    %421 = arith.divf %419, %420 : vector<8x128xf32>
    %422 = vector.extract_strided_slice %403 {offsets = [0, 256], sizes = [8, 128], strides = [1, 1]} : vector<8x384xf32> to vector<8x128xf32>
    %423 = vector.extract_strided_slice %405 {offsets = [0, 256], sizes = [8, 128], strides = [1, 1]} : vector<8x384xf32> to vector<8x128xf32>
    %424 = arith.addf %423, %11 : vector<8x128xf32>
    %425 = arith.mulf %413, %424 : vector<8x128xf32>
    %426 = arith.addf %422, %425 : vector<8x128xf32>
    %427 = math.tanh %426 : vector<8x128xf32>
    %cst_166 = arith.constant 1.000000e+00 : f32
    %428 = vector.broadcast %cst_166 : f32 to vector<8x128xf32>
    %429 = arith.subf %428, %421 : vector<8x128xf32>
    %430 = arith.mulf %429, %427 : vector<8x128xf32>
    %431 = arith.mulf %421, %362 : vector<8x128xf32>
    %432 = arith.addf %430, %431 : vector<8x128xf32>
    %c0_i32_167 = arith.constant 0 : i32
    %433 = arith.addi %0, %c0_i32_167 : i32
    %c6 = arith.constant 6 : index
    %434 = arith.index_cast %433 : i32 to index
    %435 = memref.load %arg1[%c6, %434] : memref<8x8xi32, #tpu.memory_space<smem>>
    %436 = arith.index_cast %435 : i32 to index
    %c0_168 = arith.constant 0 : index
    %437 = vector.load %arg11[%436, %c0_168] : memref<56x384xf32, #tpu.memory_space<vmem>>, vector<1x384xf32>
    %c1_i32_169 = arith.constant 1 : i32
    %438 = arith.addi %0, %c1_i32_169 : i32
    %c6_170 = arith.constant 6 : index
    %439 = arith.index_cast %438 : i32 to index
    %440 = memref.load %arg1[%c6_170, %439] : memref<8x8xi32, #tpu.memory_space<smem>>
    %441 = arith.index_cast %440 : i32 to index
    %c0_171 = arith.constant 0 : index
    %442 = vector.load %arg11[%441, %c0_171] : memref<56x384xf32, #tpu.memory_space<vmem>>, vector<1x384xf32>
    %c2_i32_172 = arith.constant 2 : i32
    %443 = arith.addi %0, %c2_i32_172 : i32
    %c6_173 = arith.constant 6 : index
    %444 = arith.index_cast %443 : i32 to index
    %445 = memref.load %arg1[%c6_173, %444] : memref<8x8xi32, #tpu.memory_space<smem>>
    %446 = arith.index_cast %445 : i32 to index
    %c0_174 = arith.constant 0 : index
    %447 = vector.load %arg11[%446, %c0_174] : memref<56x384xf32, #tpu.memory_space<vmem>>, vector<1x384xf32>
    %c3_i32_175 = arith.constant 3 : i32
    %448 = arith.addi %0, %c3_i32_175 : i32
    %c6_176 = arith.constant 6 : index
    %449 = arith.index_cast %448 : i32 to index
    %450 = memref.load %arg1[%c6_176, %449] : memref<8x8xi32, #tpu.memory_space<smem>>
    %451 = arith.index_cast %450 : i32 to index
    %c0_177 = arith.constant 0 : index
    %452 = vector.load %arg11[%451, %c0_177] : memref<56x384xf32, #tpu.memory_space<vmem>>, vector<1x384xf32>
    %c4_i32_178 = arith.constant 4 : i32
    %453 = arith.addi %0, %c4_i32_178 : i32
    %c6_179 = arith.constant 6 : index
    %454 = arith.index_cast %453 : i32 to index
    %455 = memref.load %arg1[%c6_179, %454] : memref<8x8xi32, #tpu.memory_space<smem>>
    %456 = arith.index_cast %455 : i32 to index
    %c0_180 = arith.constant 0 : index
    %457 = vector.load %arg11[%456, %c0_180] : memref<56x384xf32, #tpu.memory_space<vmem>>, vector<1x384xf32>
    %c5_i32_181 = arith.constant 5 : i32
    %458 = arith.addi %0, %c5_i32_181 : i32
    %c6_182 = arith.constant 6 : index
    %459 = arith.index_cast %458 : i32 to index
    %460 = memref.load %arg1[%c6_182, %459] : memref<8x8xi32, #tpu.memory_space<smem>>
    %461 = arith.index_cast %460 : i32 to index
    %c0_183 = arith.constant 0 : index
    %462 = vector.load %arg11[%461, %c0_183] : memref<56x384xf32, #tpu.memory_space<vmem>>, vector<1x384xf32>
    %c6_i32_184 = arith.constant 6 : i32
    %463 = arith.addi %0, %c6_i32_184 : i32
    %c6_185 = arith.constant 6 : index
    %464 = arith.index_cast %463 : i32 to index
    %465 = memref.load %arg1[%c6_185, %464] : memref<8x8xi32, #tpu.memory_space<smem>>
    %466 = arith.index_cast %465 : i32 to index
    %c0_186 = arith.constant 0 : index
    %467 = vector.load %arg11[%466, %c0_186] : memref<56x384xf32, #tpu.memory_space<vmem>>, vector<1x384xf32>
    %c7_i32_187 = arith.constant 7 : i32
    %468 = arith.addi %0, %c7_i32_187 : i32
    %c6_188 = arith.constant 6 : index
    %469 = arith.index_cast %468 : i32 to index
    %470 = memref.load %arg1[%c6_188, %469] : memref<8x8xi32, #tpu.memory_space<smem>>
    %471 = arith.index_cast %470 : i32 to index
    %c0_189 = arith.constant 0 : index
    %472 = vector.load %arg11[%471, %c0_189] : memref<56x384xf32, #tpu.memory_space<vmem>>, vector<1x384xf32>
    %473 = tpu.concatenate %437, %442, %447, %452, %457, %462, %467, %472 in 0 : vector<1x384xf32>, vector<1x384xf32>, vector<1x384xf32>, vector<1x384xf32>, vector<1x384xf32>, vector<1x384xf32>, vector<1x384xf32>, vector<1x384xf32> -> vector<8x384xf32>
    %474 = arith.truncf %432 : vector<8x128xf32> to vector<8x128xbf16>
    %cst_190 = arith.constant dense<0.000000e+00> : vector<8x384xf32>
    %475 = tpu.matmul %474, %8, %cst_190 {dimension_numbers = #tpu.dot_dimension_numbers<[1], [0], [0], [1], [0, 0, 1, 1], [], []>} : vector<8x128xbf16>, vector<128x384xbf16>, vector<8x384xf32> -> vector<8x384xf32>
    %476 = vector.extract_strided_slice %473 {offsets = [0, 0], sizes = [8, 128], strides = [1, 1]} : vector<8x384xf32> to vector<8x128xf32>
    %477 = vector.extract_strided_slice %475 {offsets = [0, 0], sizes = [8, 128], strides = [1, 1]} : vector<8x384xf32> to vector<8x128xf32>
    %478 = arith.addf %476, %477 : vector<8x128xf32>
    %479 = arith.negf %478 : vector<8x128xf32>
    %480 = math.exp %479 : vector<8x128xf32>
    %cst_191 = arith.constant 1.000000e+00 : f32
    %481 = vector.broadcast %cst_191 : f32 to vector<8x128xf32>
    %482 = arith.addf %481, %480 : vector<8x128xf32>
    %483 = arith.divf %481, %482 : vector<8x128xf32>
    %484 = vector.extract_strided_slice %473 {offsets = [0, 128], sizes = [8, 128], strides = [1, 1]} : vector<8x384xf32> to vector<8x128xf32>
    %485 = vector.extract_strided_slice %475 {offsets = [0, 128], sizes = [8, 128], strides = [1, 1]} : vector<8x384xf32> to vector<8x128xf32>
    %486 = arith.addf %484, %485 : vector<8x128xf32>
    %487 = arith.negf %486 : vector<8x128xf32>
    %488 = math.exp %487 : vector<8x128xf32>
    %cst_192 = arith.constant 1.000000e+00 : f32
    %489 = vector.broadcast %cst_192 : f32 to vector<8x128xf32>
    %490 = arith.addf %489, %488 : vector<8x128xf32>
    %491 = arith.divf %489, %490 : vector<8x128xf32>
    %492 = vector.extract_strided_slice %473 {offsets = [0, 256], sizes = [8, 128], strides = [1, 1]} : vector<8x384xf32> to vector<8x128xf32>
    %493 = vector.extract_strided_slice %475 {offsets = [0, 256], sizes = [8, 128], strides = [1, 1]} : vector<8x384xf32> to vector<8x128xf32>
    %494 = arith.addf %493, %11 : vector<8x128xf32>
    %495 = arith.mulf %483, %494 : vector<8x128xf32>
    %496 = arith.addf %492, %495 : vector<8x128xf32>
    %497 = math.tanh %496 : vector<8x128xf32>
    %cst_193 = arith.constant 1.000000e+00 : f32
    %498 = vector.broadcast %cst_193 : f32 to vector<8x128xf32>
    %499 = arith.subf %498, %491 : vector<8x128xf32>
    %500 = arith.mulf %499, %497 : vector<8x128xf32>
    %501 = arith.mulf %491, %432 : vector<8x128xf32>
    %502 = arith.addf %500, %501 : vector<8x128xf32>
    %c0_i32_194 = arith.constant 0 : i32
    %503 = arith.addi %0, %c0_i32_194 : i32
    %c7 = arith.constant 7 : index
    %504 = arith.index_cast %503 : i32 to index
    %505 = memref.load %arg1[%c7, %504] : memref<8x8xi32, #tpu.memory_space<smem>>
    %506 = arith.index_cast %505 : i32 to index
    %c0_195 = arith.constant 0 : index
    %507 = vector.load %arg11[%506, %c0_195] : memref<56x384xf32, #tpu.memory_space<vmem>>, vector<1x384xf32>
    %c1_i32_196 = arith.constant 1 : i32
    %508 = arith.addi %0, %c1_i32_196 : i32
    %c7_197 = arith.constant 7 : index
    %509 = arith.index_cast %508 : i32 to index
    %510 = memref.load %arg1[%c7_197, %509] : memref<8x8xi32, #tpu.memory_space<smem>>
    %511 = arith.index_cast %510 : i32 to index
    %c0_198 = arith.constant 0 : index
    %512 = vector.load %arg11[%511, %c0_198] : memref<56x384xf32, #tpu.memory_space<vmem>>, vector<1x384xf32>
    %c2_i32_199 = arith.constant 2 : i32
    %513 = arith.addi %0, %c2_i32_199 : i32
    %c7_200 = arith.constant 7 : index
    %514 = arith.index_cast %513 : i32 to index
    %515 = memref.load %arg1[%c7_200, %514] : memref<8x8xi32, #tpu.memory_space<smem>>
    %516 = arith.index_cast %515 : i32 to index
    %c0_201 = arith.constant 0 : index
    %517 = vector.load %arg11[%516, %c0_201] : memref<56x384xf32, #tpu.memory_space<vmem>>, vector<1x384xf32>
    %c3_i32_202 = arith.constant 3 : i32
    %518 = arith.addi %0, %c3_i32_202 : i32
    %c7_203 = arith.constant 7 : index
    %519 = arith.index_cast %518 : i32 to index
    %520 = memref.load %arg1[%c7_203, %519] : memref<8x8xi32, #tpu.memory_space<smem>>
    %521 = arith.index_cast %520 : i32 to index
    %c0_204 = arith.constant 0 : index
    %522 = vector.load %arg11[%521, %c0_204] : memref<56x384xf32, #tpu.memory_space<vmem>>, vector<1x384xf32>
    %c4_i32_205 = arith.constant 4 : i32
    %523 = arith.addi %0, %c4_i32_205 : i32
    %c7_206 = arith.constant 7 : index
    %524 = arith.index_cast %523 : i32 to index
    %525 = memref.load %arg1[%c7_206, %524] : memref<8x8xi32, #tpu.memory_space<smem>>
    %526 = arith.index_cast %525 : i32 to index
    %c0_207 = arith.constant 0 : index
    %527 = vector.load %arg11[%526, %c0_207] : memref<56x384xf32, #tpu.memory_space<vmem>>, vector<1x384xf32>
    %c5_i32_208 = arith.constant 5 : i32
    %528 = arith.addi %0, %c5_i32_208 : i32
    %c7_209 = arith.constant 7 : index
    %529 = arith.index_cast %528 : i32 to index
    %530 = memref.load %arg1[%c7_209, %529] : memref<8x8xi32, #tpu.memory_space<smem>>
    %531 = arith.index_cast %530 : i32 to index
    %c0_210 = arith.constant 0 : index
    %532 = vector.load %arg11[%531, %c0_210] : memref<56x384xf32, #tpu.memory_space<vmem>>, vector<1x384xf32>
    %c6_i32_211 = arith.constant 6 : i32
    %533 = arith.addi %0, %c6_i32_211 : i32
    %c7_212 = arith.constant 7 : index
    %534 = arith.index_cast %533 : i32 to index
    %535 = memref.load %arg1[%c7_212, %534] : memref<8x8xi32, #tpu.memory_space<smem>>
    %536 = arith.index_cast %535 : i32 to index
    %c0_213 = arith.constant 0 : index
    %537 = vector.load %arg11[%536, %c0_213] : memref<56x384xf32, #tpu.memory_space<vmem>>, vector<1x384xf32>
    %c7_i32_214 = arith.constant 7 : i32
    %538 = arith.addi %0, %c7_i32_214 : i32
    %c7_215 = arith.constant 7 : index
    %539 = arith.index_cast %538 : i32 to index
    %540 = memref.load %arg1[%c7_215, %539] : memref<8x8xi32, #tpu.memory_space<smem>>
    %541 = arith.index_cast %540 : i32 to index
    %c0_216 = arith.constant 0 : index
    %542 = vector.load %arg11[%541, %c0_216] : memref<56x384xf32, #tpu.memory_space<vmem>>, vector<1x384xf32>
    %543 = tpu.concatenate %507, %512, %517, %522, %527, %532, %537, %542 in 0 : vector<1x384xf32>, vector<1x384xf32>, vector<1x384xf32>, vector<1x384xf32>, vector<1x384xf32>, vector<1x384xf32>, vector<1x384xf32>, vector<1x384xf32> -> vector<8x384xf32>
    %544 = arith.truncf %502 : vector<8x128xf32> to vector<8x128xbf16>
    %cst_217 = arith.constant dense<0.000000e+00> : vector<8x384xf32>
    %545 = tpu.matmul %544, %8, %cst_217 {dimension_numbers = #tpu.dot_dimension_numbers<[1], [0], [0], [1], [0, 0, 1, 1], [], []>} : vector<8x128xbf16>, vector<128x384xbf16>, vector<8x384xf32> -> vector<8x384xf32>
    %546 = vector.extract_strided_slice %543 {offsets = [0, 0], sizes = [8, 128], strides = [1, 1]} : vector<8x384xf32> to vector<8x128xf32>
    %547 = vector.extract_strided_slice %545 {offsets = [0, 0], sizes = [8, 128], strides = [1, 1]} : vector<8x384xf32> to vector<8x128xf32>
    %548 = arith.addf %546, %547 : vector<8x128xf32>
    %549 = arith.negf %548 : vector<8x128xf32>
    %550 = math.exp %549 : vector<8x128xf32>
    %cst_218 = arith.constant 1.000000e+00 : f32
    %551 = vector.broadcast %cst_218 : f32 to vector<8x128xf32>
    %552 = arith.addf %551, %550 : vector<8x128xf32>
    %553 = arith.divf %551, %552 : vector<8x128xf32>
    %554 = vector.extract_strided_slice %543 {offsets = [0, 128], sizes = [8, 128], strides = [1, 1]} : vector<8x384xf32> to vector<8x128xf32>
    %555 = vector.extract_strided_slice %545 {offsets = [0, 128], sizes = [8, 128], strides = [1, 1]} : vector<8x384xf32> to vector<8x128xf32>
    %556 = arith.addf %554, %555 : vector<8x128xf32>
    %557 = arith.negf %556 : vector<8x128xf32>
    %558 = math.exp %557 : vector<8x128xf32>
    %cst_219 = arith.constant 1.000000e+00 : f32
    %559 = vector.broadcast %cst_219 : f32 to vector<8x128xf32>
    %560 = arith.addf %559, %558 : vector<8x128xf32>
    %561 = arith.divf %559, %560 : vector<8x128xf32>
    %562 = vector.extract_strided_slice %543 {offsets = [0, 256], sizes = [8, 128], strides = [1, 1]} : vector<8x384xf32> to vector<8x128xf32>
    %563 = vector.extract_strided_slice %545 {offsets = [0, 256], sizes = [8, 128], strides = [1, 1]} : vector<8x384xf32> to vector<8x128xf32>
    %564 = arith.addf %563, %11 : vector<8x128xf32>
    %565 = arith.mulf %553, %564 : vector<8x128xf32>
    %566 = arith.addf %562, %565 : vector<8x128xf32>
    %567 = math.tanh %566 : vector<8x128xf32>
    %cst_220 = arith.constant 1.000000e+00 : f32
    %568 = vector.broadcast %cst_220 : f32 to vector<8x128xf32>
    %569 = arith.subf %568, %561 : vector<8x128xf32>
    %570 = arith.mulf %569, %567 : vector<8x128xf32>
    %571 = arith.mulf %561, %502 : vector<8x128xf32>
    %572 = arith.addf %570, %571 : vector<8x128xf32>
    %573 = vector.shape_cast %82 : vector<8x128xf32> to vector<1x8x128xf32>
    %574 = vector.shape_cast %152 : vector<8x128xf32> to vector<1x8x128xf32>
    %575 = vector.shape_cast %222 : vector<8x128xf32> to vector<1x8x128xf32>
    %576 = vector.shape_cast %292 : vector<8x128xf32> to vector<1x8x128xf32>
    %577 = vector.shape_cast %362 : vector<8x128xf32> to vector<1x8x128xf32>
    %578 = vector.shape_cast %432 : vector<8x128xf32> to vector<1x8x128xf32>
    %579 = vector.shape_cast %502 : vector<8x128xf32> to vector<1x8x128xf32>
    %580 = vector.shape_cast %572 : vector<8x128xf32> to vector<1x8x128xf32>
    %581 = tpu.concatenate %573, %574, %575, %576, %577, %578, %579, %580 in 0 : vector<1x8x128xf32>, vector<1x8x128xf32>, vector<1x8x128xf32>, vector<1x8x128xf32>, vector<1x8x128xf32>, vector<1x8x128xf32>, vector<1x8x128xf32>, vector<1x8x128xf32> -> vector<8x8x128xf32>
    %582 = tpu.iota {dimensions = array<i32: 0>} : vector<8x8x128xi32>
    %583 = tpu.iota {dimensions = array<i32: 1>} : vector<8x8x128xi32>
    %c0_i32_221 = arith.constant 0 : i32
    %584 = vector.broadcast %c0_i32_221 : i32 to vector<8x8x128xi32>
    %c0_i32_222 = arith.constant 0 : i32
    %585 = vector.broadcast %c0_i32_222 : i32 to vector<8x8x128xi32>
    %586 = arith.cmpi eq, %583, %585 : vector<8x8x128xi32>
    %c0_i32_223 = arith.constant 0 : i32
    %587 = arith.addi %0, %c0_i32_223 : i32
    %588 = arith.index_cast %587 : i32 to index
    %589 = memref.load %arg2[%588] : memref<8xi32, #tpu.memory_space<smem>>
    %590 = vector.broadcast %589 : i32 to vector<8x8x128xi32>
    %591 = arith.select %586, %590, %584 : vector<8x8x128xi1>, vector<8x8x128xi32>
    %c1_i32_224 = arith.constant 1 : i32
    %592 = vector.broadcast %c1_i32_224 : i32 to vector<8x8x128xi32>
    %593 = arith.cmpi eq, %583, %592 : vector<8x8x128xi32>
    %c1_i32_225 = arith.constant 1 : i32
    %594 = arith.addi %0, %c1_i32_225 : i32
    %595 = arith.index_cast %594 : i32 to index
    %596 = memref.load %arg2[%595] : memref<8xi32, #tpu.memory_space<smem>>
    %597 = vector.broadcast %596 : i32 to vector<8x8x128xi32>
    %598 = arith.select %593, %597, %591 : vector<8x8x128xi1>, vector<8x8x128xi32>
    %c2_i32_226 = arith.constant 2 : i32
    %599 = vector.broadcast %c2_i32_226 : i32 to vector<8x8x128xi32>
    %600 = arith.cmpi eq, %583, %599 : vector<8x8x128xi32>
    %c2_i32_227 = arith.constant 2 : i32
    %601 = arith.addi %0, %c2_i32_227 : i32
    %602 = arith.index_cast %601 : i32 to index
    %603 = memref.load %arg2[%602] : memref<8xi32, #tpu.memory_space<smem>>
    %604 = vector.broadcast %603 : i32 to vector<8x8x128xi32>
    %605 = arith.select %600, %604, %598 : vector<8x8x128xi1>, vector<8x8x128xi32>
    %c3_i32_228 = arith.constant 3 : i32
    %606 = vector.broadcast %c3_i32_228 : i32 to vector<8x8x128xi32>
    %607 = arith.cmpi eq, %583, %606 : vector<8x8x128xi32>
    %c3_i32_229 = arith.constant 3 : i32
    %608 = arith.addi %0, %c3_i32_229 : i32
    %609 = arith.index_cast %608 : i32 to index
    %610 = memref.load %arg2[%609] : memref<8xi32, #tpu.memory_space<smem>>
    %611 = vector.broadcast %610 : i32 to vector<8x8x128xi32>
    %612 = arith.select %607, %611, %605 : vector<8x8x128xi1>, vector<8x8x128xi32>
    %c4_i32_230 = arith.constant 4 : i32
    %613 = vector.broadcast %c4_i32_230 : i32 to vector<8x8x128xi32>
    %614 = arith.cmpi eq, %583, %613 : vector<8x8x128xi32>
    %c4_i32_231 = arith.constant 4 : i32
    %615 = arith.addi %0, %c4_i32_231 : i32
    %616 = arith.index_cast %615 : i32 to index
    %617 = memref.load %arg2[%616] : memref<8xi32, #tpu.memory_space<smem>>
    %618 = vector.broadcast %617 : i32 to vector<8x8x128xi32>
    %619 = arith.select %614, %618, %612 : vector<8x8x128xi1>, vector<8x8x128xi32>
    %c5_i32_232 = arith.constant 5 : i32
    %620 = vector.broadcast %c5_i32_232 : i32 to vector<8x8x128xi32>
    %621 = arith.cmpi eq, %583, %620 : vector<8x8x128xi32>
    %c5_i32_233 = arith.constant 5 : i32
    %622 = arith.addi %0, %c5_i32_233 : i32
    %623 = arith.index_cast %622 : i32 to index
    %624 = memref.load %arg2[%623] : memref<8xi32, #tpu.memory_space<smem>>
    %625 = vector.broadcast %624 : i32 to vector<8x8x128xi32>
    %626 = arith.select %621, %625, %619 : vector<8x8x128xi1>, vector<8x8x128xi32>
    %c6_i32_234 = arith.constant 6 : i32
    %627 = vector.broadcast %c6_i32_234 : i32 to vector<8x8x128xi32>
    %628 = arith.cmpi eq, %583, %627 : vector<8x8x128xi32>
    %c6_i32_235 = arith.constant 6 : i32
    %629 = arith.addi %0, %c6_i32_235 : i32
    %630 = arith.index_cast %629 : i32 to index
    %631 = memref.load %arg2[%630] : memref<8xi32, #tpu.memory_space<smem>>
    %632 = vector.broadcast %631 : i32 to vector<8x8x128xi32>
    %633 = arith.select %628, %632, %626 : vector<8x8x128xi1>, vector<8x8x128xi32>
    %c7_i32_236 = arith.constant 7 : i32
    %634 = vector.broadcast %c7_i32_236 : i32 to vector<8x8x128xi32>
    %635 = arith.cmpi eq, %583, %634 : vector<8x8x128xi32>
    %c7_i32_237 = arith.constant 7 : i32
    %636 = arith.addi %0, %c7_i32_237 : i32
    %637 = arith.index_cast %636 : i32 to index
    %638 = memref.load %arg2[%637] : memref<8xi32, #tpu.memory_space<smem>>
    %639 = vector.broadcast %638 : i32 to vector<8x8x128xi32>
    %640 = arith.select %635, %639, %633 : vector<8x8x128xi1>, vector<8x8x128xi32>
    %641 = arith.cmpi slt, %582, %640 : vector<8x8x128xi32>
    %cst_238 = arith.constant 0.000000e+00 : f32
    %642 = vector.broadcast %cst_238 : f32 to vector<8x8x128xf32>
    %643 = arith.select %641, %581, %642 : vector<8x8x128xi1>, vector<8x8x128xf32>
    %644 = arith.truncf %643 : vector<8x8x128xf32> to vector<8x8x128xbf16>
    %645 = vector.shape_cast %644 : vector<8x8x128xbf16> to vector<64x128xbf16>
    %c0_239 = arith.constant 0 : index
    %c0_240 = arith.constant 0 : index
    %646 = vector.load %arg8[%c0_239, %c0_240] : memref<128x128xbf16, #tpu.memory_space<vmem>>, vector<128x128xbf16>
    %cst_241 = arith.constant dense<0.000000e+00> : vector<64x128xf32>
    %647 = tpu.matmul %645, %646, %cst_241 {dimension_numbers = #tpu.dot_dimension_numbers<[1], [0], [0], [1], [0, 0, 1, 1], [], []>} : vector<64x128xbf16>, vector<128x128xbf16>, vector<64x128xf32> -> vector<64x128xf32>
    %c0_242 = arith.constant 0 : index
    %c0_243 = arith.constant 0 : index
    %648 = vector.load %arg9[%c0_242, %c0_243] : memref<1x128xf32, #tpu.memory_space<vmem>>, vector<1x128xf32>
    %649 = vector.broadcast %648 : vector<1x128xf32> to vector<64x128xf32>
    %650 = arith.addf %647, %649 : vector<64x128xf32>
    %651 = vector.shape_cast %650 : vector<64x128xf32> to vector<8x8x128xf32>
    %652 = arith.truncf %651 : vector<8x8x128xf32> to vector<8x8x128xbf16>
    %c0_244 = arith.constant 0 : index
    %c0_245 = arith.constant 0 : index
    %c0_246 = arith.constant 0 : index
    %653 = vector.load %arg10[%c0_244, %c0_245, %c0_246] : memref<8x8x128xbf16, #tpu.memory_space<vmem>>, vector<8x8x128xbf16>
    tpu.vector_store %arg10[%c0_244, %c0_245, %c0_246], %652 {strides = array<i32>} : memref<8x8x128xbf16, #tpu.memory_space<vmem>>, vector<8x8x128xbf16>,
    return
  }
  func.func @transform_0(%arg0: i32, %arg1: memref<8x8xi32, #tpu.memory_space<smem>>, %arg2: memref<8xi32, #tpu.memory_space<smem>>) -> (i32, i32) {
    %c0_i32 = arith.constant 0 : i32
    %c0_i32_0 = arith.constant 0 : i32
    %c0_i32_1 = arith.constant 0 : i32
    return %c0_i32, %c0_i32_0 : i32, i32
  }
  func.func @transform_1(%arg0: i32, %arg1: memref<8x8xi32, #tpu.memory_space<smem>>, %arg2: memref<8xi32, #tpu.memory_space<smem>>) -> (i32, i32) {
    %c0_i32 = arith.constant 0 : i32
    %c0_i32_0 = arith.constant 0 : i32
    %c0_i32_1 = arith.constant 0 : i32
    return %c0_i32, %c0_i32_0 : i32, i32
  }
  func.func @transform_2(%arg0: i32, %arg1: memref<8x8xi32, #tpu.memory_space<smem>>, %arg2: memref<8xi32, #tpu.memory_space<smem>>) -> (i32, i32) {
    %c0_i32 = arith.constant 0 : i32
    %c0_i32_0 = arith.constant 0 : i32
    %c0_i32_1 = arith.constant 0 : i32
    return %c0_i32, %c0_i32_0 : i32, i32
  }
  func.func @transform_3(%arg0: i32, %arg1: memref<8x8xi32, #tpu.memory_space<smem>>, %arg2: memref<8xi32, #tpu.memory_space<smem>>) -> (i32, i32) {
    %c0_i32 = arith.constant 0 : i32
    %c0_i32_0 = arith.constant 0 : i32
    %c0_i32_1 = arith.constant 0 : i32
    return %c0_i32, %c0_i32_0 : i32, i32
  }
  func.func @transform_4(%arg0: i32, %arg1: memref<8x8xi32, #tpu.memory_space<smem>>, %arg2: memref<8xi32, #tpu.memory_space<smem>>) -> (i32, i32) {
    %c0_i32 = arith.constant 0 : i32
    %c0_i32_0 = arith.constant 0 : i32
    %c0_i32_1 = arith.constant 0 : i32
    return %c0_i32, %c0_i32_0 : i32, i32
  }
  func.func @transform_5(%arg0: i32, %arg1: memref<8x8xi32, #tpu.memory_space<smem>>, %arg2: memref<8xi32, #tpu.memory_space<smem>>) -> (i32, i32) {
    %c0_i32 = arith.constant 0 : i32
    %c0_i32_0 = arith.constant 0 : i32
    %c0_i32_1 = arith.constant 0 : i32
    return %c0_i32, %c0_i32_0 : i32, i32
  }
  func.func @transform_6(%arg0: i32, %arg1: memref<8x8xi32, #tpu.memory_space<smem>>, %arg2: memref<8xi32, #tpu.memory_space<smem>>) -> (i32, i32) {
    %c0_i32 = arith.constant 0 : i32
    %c0_i32_0 = arith.constant 0 : i32
    %c0_i32_1 = arith.constant 0 : i32
    return %c0_i32, %c0_i32_0 : i32, i32
  }
  func.func @transform_7(%arg0: i32, %arg1: memref<8x8xi32, #tpu.memory_space<smem>>, %arg2: memref<8xi32, #tpu.memory_space<smem>>) -> (i32, i32, i32) {
    %c0_i32 = arith.constant 0 : i32
    %c0_i32_0 = arith.constant 0 : i32
    %c0_i32_1 = arith.constant 0 : i32
    return %c0_i32, %arg0, %c0_i32_0 : i32, i32, i32
  }
}

</mosaic_0001>

<llo_original>
// kernel: tpu_custom_call.1
$region0: #{tpu_custom_call.1}
  #allocation0 [shape = 'u32[]', space=smem, size = 0x4, offset = 0x4, fixed_abs, tag = 'smem constant byte address 0x4 - core index']
  #allocation1 [shape = 'u32[144,128]{1,0:T(1,128)}', space=vmem, size = 0x12000, scoped, tag = 'internal scratch']
  #allocation2 [shape = 'f32[56,384]{1,0:T(8,128)}', space=vmem, size = 0x15000, scoped, tag = 'scratch operand']
  #allocation3 [shape = 's32[1]{0}', space=sflag, size = 0x4, scoped, tag = 'scoped memory for tpu_custom_call.1']
  #allocation4 [shape = 'u8[4096]{0}', space=smem, size = 0x1000, scoped, tag = 'prefetched SMEM operand 0']
  #allocation5 [shape = 'u8[512]{0}', space=smem, size = 0x200, scoped, tag = 'prefetched SMEM operand 1']
  %s0 = inlined_call_operand.hbm [shape: s32[8,8], index: 0, kind: input, shape index: {}]
  %s1 = inlined_call_operand.hbm [shape: s32[8], index: 1, kind: input, shape index: {}]
  %s2 = inlined_call_operand.vmem [shape: bf16[56,32], index: 2, kind: input, shape index: {}]
  %s3 = inlined_call_operand.vmem [shape: bf16[32,384], index: 3, kind: input, shape index: {}]
  %s4 = inlined_call_operand.hbm [shape: bf16[128,384], index: 4, kind: input, shape index: {}]
  %s5 = inlined_call_operand.vmem [shape: f32[1,384], index: 5, kind: input, shape index: {}]
  %s6 = inlined_call_operand.vmem [shape: f32[1,128], index: 6, kind: input, shape index: {}]
  %s7 = inlined_call_operand.hbm [shape: bf16[128,128], index: 7, kind: input, shape index: {}]
  %s8 = inlined_call_operand.vmem [shape: f32[1,128], index: 8, kind: input, shape index: {}]
  %s9 = inlined_call_operand.hbm [shape: bf16[8,8,128], index: 9, kind: output, shape index: {}]
  %s10 = sld [smem:[#allocation0]]
  $region46: #{tpu_custom_call.1} parent=0
    _
  %s12 = ssub.s32 1, %s10
  %s13 = scalar_select 0, %s12, %s10
  %15 = dma.hbm_to_smem %s0, 128, [#allocation4], [#allocation3]
  %17 = dma.hbm_to_smem %s1, 16, [#allocation5], [#allocation3]
  %18 = dma.done [#allocation3], 144
  %19 = sfence
  $region1: #{tpu_custom_call.1} parent=0
    #allocation6 [shape = 'u8[98304]{0}', space=vmem, size = 0x18000, scoped, tag = 'input window, operand 4, single buffered']
    #allocation7 [shape = 's32[1]{0}', space=sflag, size = 0x4, scoped, tag = 'scoped memory for tpu_custom_call.1']
    #allocation8 [shape = 's32[1]{0}', space=sflag, size = 0x4, scoped, tag = 'scoped memory for tpu_custom_call.1']
    #allocation9 [shape = 'u8[32768]{0}', space=vmem, size = 0x8000, scoped, tag = 'input window, operand 7, single buffered']
    #allocation10 [shape = 's32[1]{0}', space=sflag, size = 0x4, scoped, tag = 'scoped memory for tpu_custom_call.1']
    #allocation11 [shape = 'u8[16384]{0}', space=vmem, size = 0x4000, scoped, tag = 'output window, operand 0, single buffered']
    %20 = vsyncpa [#allocation7], 0
    %21 = vsyncpa [#allocation10], 0
    %22 = vsyncpa [#allocation8], 0
    // Predicated region
    $region2: #{tpu_custom_call.1} parent=1 // pred_check
      _
    $region3: #{tpu_custom_call.1} parent=1 // pred_check_branch
      %24 = sbr.rel (0) target = $region5
    $region4: #{tpu_custom_call.1} parent=1 // pred_region
      _
    $region5: #{tpu_custom_call.1} parent=1 // pred_fallthru
      _
    // Predicated region
    $region6: #{tpu_custom_call.1} parent=1 // pred_check
      _
    $region7: #{tpu_custom_call.1} parent=1 // pred_check_branch
      %26 = sbr.rel (0) target = $region9
    $region8: #{tpu_custom_call.1} parent=1 // pred_region
      _
    $region9: #{tpu_custom_call.1} parent=1 // pred_fallthru
      _
    // Predicated region
    $region10: #{tpu_custom_call.1} parent=1 // pred_check
      _
    $region11: #{tpu_custom_call.1} parent=1 // pred_check_branch
      %28 = sbr.rel (0) target = $region13
    $region12: #{tpu_custom_call.1} parent=1 // pred_region
      %s30 = ssub.s32 3072, 3072
      %31 = vsyncadd [#allocation7], %s30
      %s32 = sshll.u32 [#allocation6], 4
      %s33 = int_to_ptr.vmem [resolvable:$true] %s32
      %38 = dma.hbm_to_vmem [thread:$0]  %s4, 3072, %s33, [#allocation7], 192, 192, 12
    $region13: #{tpu_custom_call.1} parent=1 // pred_fallthru
      _
    // Predicated region
    $region14: #{tpu_custom_call.1} parent=1 // pred_check
      _
    $region15: #{tpu_custom_call.1} parent=1 // pred_check_branch
      %40 = sbr.rel (0) target = $region17
    $region16: #{tpu_custom_call.1} parent=1 // pred_region
      _
    $region17: #{tpu_custom_call.1} parent=1 // pred_fallthru
      _
    // Predicated region
    $region18: #{tpu_custom_call.1} parent=1 // pred_check
      _
    $region19: #{tpu_custom_call.1} parent=1 // pred_check_branch
      %42 = sbr.rel (0) target = $region21
    $region20: #{tpu_custom_call.1} parent=1 // pred_region
      _
    $region21: #{tpu_custom_call.1} parent=1 // pred_fallthru
      _
    // Predicated region
    $region22: #{tpu_custom_call.1} parent=1 // pred_check
      _
    $region23: #{tpu_custom_call.1} parent=1 // pred_check_branch
      %44 = sbr.rel (0) target = $region25
    $region24: #{tpu_custom_call.1} parent=1 // pred_region
      %s46 = ssub.s32 1024, 1024
      %47 = vsyncadd [#allocation10], %s46
      %s48 = sshll.u32 [#allocation9], 4
      %s49 = int_to_ptr.vmem [resolvable:$true] %s48
      %54 = dma.hbm_to_vmem [thread:$0]  %s7, 1024, %s49, [#allocation10], 64, 64, 4
    $region25: #{tpu_custom_call.1} parent=1 // pred_fallthru
      _
    // Predicated region
    $region26: #{tpu_custom_call.1} parent=1 // pred_check
      _
    $region27: #{tpu_custom_call.1} parent=1 // pred_check_branch
      %56 = sbr.rel (0) target = $region29
    $region28: #{tpu_custom_call.1} parent=1 // pred_region
      _
    $region29: #{tpu_custom_call.1} parent=1 // pred_fallthru
      _
    // Predicated region
    $region30: #{tpu_custom_call.1} parent=1 // pred_check
      _
    $region31: #{tpu_custom_call.1} parent=1 // pred_check_branch
      %58 = sbr.rel (0) target = $region33
    $region32: #{tpu_custom_call.1} parent=1 // pred_region
      %59 = dma.done [#allocation7], 3072
    $region33: #{tpu_custom_call.1} parent=1 // pred_fallthru
      _
    // Predicated region
    $region34: #{tpu_custom_call.1} parent=1 // pred_check
      _
    $region35: #{tpu_custom_call.1} parent=1 // pred_check_branch
      %61 = sbr.rel (0) target = $region37
    $region36: #{tpu_custom_call.1} parent=1 // pred_region
      %62 = dma.done [#allocation10], 1024
    $region37: #{tpu_custom_call.1} parent=1 // pred_fallthru
      _
    %s64 = smul.u32 0, 8
    %v65 = vld [vmem:[%s2] sm:$0xf]
    %v66 = vld [vmem:[%s2 + $0x4] sm:$0xf]
    %v67 = vld [vmem:[%s2 + $0x8] sm:$0xf]
    %v68 = vld [vmem:[%s2 + $0xc] sm:$0xf]
    %v69 = vld [vmem:[%s2 + $0x10] sm:$0xf]
    %v70 = vld [vmem:[%s2 + $0x14] sm:$0xf]
    %v71 = vld [vmem:[%s2 + $0x18] sm:$0xf]
    %v72 = vld [vmem:[%s3] sm:$0xff]
    %v73 = vld [vmem:[%s3 + $0x8] sm:$0xf]
    %v74 = vld [vmem:[%s3 + $0xc] sm:$0xff]
    %v75 = vld [vmem:[%s3 + $0x14] sm:$0xf]
    %v76 = vld [vmem:[%s3 + $0x18] sm:$0xff]
    %v77 = vld [vmem:[%s3 + $0x20] sm:$0xf]
    %v78 = vld [vmem:[%s3 + $0x24] sm:$0xff]
    %v79 = vld [vmem:[%s3 + $0x2c] sm:$0xf]
    %v80 = vld [vmem:[%s5] sm:$0x7]
    %v82 = vlaneseq
    %v83 = vshrl.u32 %v82, 7
    %v84 = vsub.s32 0, %v83
    %v85 = vrot.slane %v80, %v84
    %v86 = vlaneseq
    %v87 = vshrl.u32 %v86, 7
    %v88 = vsub.s32 1, %v87
    %v89 = vrot.slane %v80, %v88
    %v90 = vlaneseq
    %v91 = vshrl.u32 %v90, 7
    %v92 = vsub.s32 2, %v91
    %v93 = vrot.slane %v80, %v92
    %v104 = vunpack.c.l.b16 %v65
    %v105 = vunpack.c.l.b16 %v66
    %v106 = vunpack.c.l.b16 %v67
    %v107 = vunpack.c.l.b16 %v68
    %v108 = vunpack.c.l.b16 %v69
    %v109 = vunpack.c.l.b16 %v70
    %v110 = vunpack.c.l.b16 %v71
    %v111 = vpack.c.b16 %v105, %v104
    %v112 = vpack.c.b16 %v107, %v106
    %v113 = vpack.c.b16 %v109, %v108
    %v114 = vpack.c.b16 %v110, %v110
    %v123 = vunpack.c.l.b16 %v72
    %v124 = vunpack.c.h.b16 %v72
    %v125 = vunpack.c.l.b16 %v73
    %v126 = vunpack.c.l.b16 %v74
    %v127 = vunpack.c.h.b16 %v74
    %v128 = vunpack.c.l.b16 %v75
    %v129 = vunpack.c.l.b16 %v76
    %v130 = vunpack.c.h.b16 %v76
    %v131 = vunpack.c.l.b16 %v77
    %v132 = vunpack.c.l.b16 %v78
    %v133 = vunpack.c.h.b16 %v78
    %v134 = vunpack.c.l.b16 %v79
    %v135 = vpack.c.b16 %v126, %v123
    %v136 = vpack.c.b16 %v127, %v124
    %v137 = vpack.c.b16 %v128, %v125
    %v138 = vpack.c.b16 %v132, %v129
    %v139 = vpack.c.b16 %v133, %v130
    %v140 = vpack.c.b16 %v134, %v131
    %vm147 = vcmask 261120
    %v149 = vsel %vm147, %v111, 0
    %v152 = vsel %vm147, %v112, 0
    %v155 = vsel %vm147, %v113, 0
    %v158 = vsel %vm147, %v114, 0
    %160 = vmatprep.subr.bf16.mxu0 0
    %161 = vmatpush1.bf16.msra.mxu0 0
    %162 = vmatprep.subr.bf16.mxu0 0
    %163 = vmatpush1.bf16.msra.mxu0 0
    %164 = vmatprep.subr.bf16.mxu0 0
    %165 = vmatpush1.bf16.msra.mxu0 0
    %166 = vmatprep.subr.bf16.mxu0 0
    %167 = vmatpush1.bf16.msra.mxu0 0
    %168 = vmatprep.subr.bf16.mxu0 0
    %169 = vmatpush1.bf16.msra.mxu0 0
    %170 = vmatprep.subr.bf16.mxu0 0
    %171 = vmatpush1.bf16.msra.mxu0 0
    %172 = vmatprep.subr.bf16.mxu0 %v139
    %173 = vmatpush1.bf16.msra.mxu0 %v138
    %174 = vmatprep.subr.bf16.mxu0 %v136
    %175 = vmatpush1.bf16.msra.mxu0 %v135
    %176 = vmatprep.subr.bf16.mxu0 0
    %177 = vmatpush2.bf16.msra.mxu0 0
    %178 = vmatprep.subr.bf16.mxu0 0
    %179 = vmatpush2.bf16.msra.mxu0 0
    %180 = vmatprep.subr.bf16.mxu0 0
    %181 = vmatpush2.bf16.msra.mxu0 0
    %182 = vmatprep.subr.bf16.mxu0 0
    %183 = vmatpush2.bf16.msra.mxu0 0
    %184 = vmatprep.subr.bf16.mxu0 0
    %185 = vmatpush2.bf16.msra.mxu0 0
    %186 = vmatprep.subr.bf16.mxu0 0
    %187 = vmatpush2.bf16.msra.mxu0 0
    %188 = vmatprep.subr.bf16.mxu0 0
    %189 = vmatpush2.bf16.msra.mxu0 0
    %190 = vmatprep.subr.bf16.mxu0 0
    %191 = vmatpush2.bf16.msra.mxu0 0
    %192 = vmatprep.mubr.bf16.mxu0 0
    %193 = vmatmul.mubr.bf16.gmra.mxu0 %v149
    %v194 = vpop.f32.mrf.mxu0
    %v195 = vadd.f32 %v85, %v194
    %v196 = vpop.f32.mrf.mxu0
    %v197 = vadd.f32 %v89, %v196
    %v198 = vpop.f32.mrf.mxu0
    %v199 = vadd.f32 %v85, %v198
    %v200 = vpop.f32.mrf.mxu0
    %v201 = vadd.f32 %v89, %v200
    %202 = vmatprep.mubr.bf16.mxu0 0
    %203 = vmatmul.mubr.bf16.gmra.mxu0 %v152
    %v204 = vpop.f32.mrf.mxu0
    %v205 = vadd.f32 %v85, %v204
    %v206 = vpop.f32.mrf.mxu0
    %v207 = vadd.f32 %v89, %v206
    %v208 = vpop.f32.mrf.mxu0
    %v209 = vadd.f32 %v85, %v208
    %v210 = vpop.f32.mrf.mxu0
    %v211 = vadd.f32 %v89, %v210
    %212 = vmatprep.mubr.bf16.mxu0 0
    %213 = vmatmul.mubr.bf16.gmra.mxu0 %v155
    %v214 = vpop.f32.mrf.mxu0
    %v215 = vadd.f32 %v85, %v214
    %v216 = vpop.f32.mrf.mxu0
    %v217 = vadd.f32 %v89, %v216
    %v218 = vpop.f32.mrf.mxu0
    %v219 = vadd.f32 %v85, %v218
    %v220 = vpop.f32.mrf.mxu0
    %v221 = vadd.f32 %v89, %v220
    %222 = vmatprep.mubr.bf16.mxu0 0
    %223 = vmatmul.mubr.bf16.gmra.mxu0 %v158
    %v224 = vpop.f32.mrf.mxu0
    %v225 = vadd.f32 %v85, %v224
    %v226 = vpop.f32.mrf.mxu0
    %v227 = vadd.f32 %v89, %v226
    %v228 = vpop.f32.mrf.mxu0
    %v229 = vpop.f32.mrf.mxu0
    %230 = vdwg.mxu0
    %231 = vmatprep.subr.bf16.mxu0 0
    %232 = vmatpush1.bf16.msra.mxu0 0
    %233 = vmatprep.subr.bf16.mxu0 0
    %234 = vmatpush1.bf16.msra.mxu0 0
    %235 = vmatprep.subr.bf16.mxu0 0
    %236 = vmatpush1.bf16.msra.mxu0 0
    %237 = vmatprep.subr.bf16.mxu0 0
    %238 = vmatpush1.bf16.msra.mxu0 0
    %239 = vmatprep.subr.bf16.mxu0 0
    %240 = vmatpush1.bf16.msra.mxu0 0
    %241 = vmatprep.subr.bf16.mxu0 0
    %242 = vmatpush1.bf16.msra.mxu0 0
    %243 = vmatprep.subr.bf16.mxu0 0
    %244 = vmatpush1.bf16.msra.mxu0 %v140
    %245 = vmatprep.subr.bf16.mxu0 0
    %246 = vmatpush1.bf16.msra.mxu0 %v137
    %247 = vmatprep.subr.bf16.mxu0 0
    %248 = vmatpush2.bf16.msra.mxu0 0
    %249 = vmatprep.subr.bf16.mxu0 0
    %250 = vmatpush2.bf16.msra.mxu0 0
    %251 = vmatprep.subr.bf16.mxu0 0
    %252 = vmatpush2.bf16.msra.mxu0 0
    %253 = vmatprep.subr.bf16.mxu0 0
    %254 = vmatpush2.bf16.msra.mxu0 0
    %255 = vmatprep.subr.bf16.mxu0 0
    %256 = vmatpush2.bf16.msra.mxu0 0
    %257 = vmatprep.subr.bf16.mxu0 0
    %258 = vmatpush2.bf16.msra.mxu0 0
    %259 = vmatprep.subr.bf16.mxu0 0
    %260 = vmatpush2.bf16.msra.mxu0 0
    %261 = vmatprep.subr.bf16.mxu0 0
    %262 = vmatpush2.bf16.msra.mxu0 0
    %263 = vmatprep.mubr.bf16.mxu0 0
    %264 = vmatmul.mubr.bf16.gmra.mxu0 %v149
    %v265 = vpop.f32.mrf.mxu0
    %v266 = vadd.f32 %v93, %v265
    %v267 = vpop.f32.mrf.mxu0
    %v268 = vpop.f32.mrf.mxu0
    %v269 = vadd.f32 %v93, %v268
    %v270 = vpop.f32.mrf.mxu0
    %271 = vmatprep.mubr.bf16.mxu0 0
    %272 = vmatmul.mubr.bf16.gmra.mxu0 %v152
    %v273 = vpop.f32.mrf.mxu0
    %v274 = vadd.f32 %v93, %v273
    %v275 = vpop.f32.mrf.mxu0
    %v276 = vpop.f32.mrf.mxu0
    %v277 = vadd.f32 %v93, %v276
    %v278 = vpop.f32.mrf.mxu0
    %279 = vmatprep.mubr.bf16.mxu0 0
    %280 = vmatmul.mubr.bf16.gmra.mxu0 %v155
    %v281 = vpop.f32.mrf.mxu0
    %v282 = vadd.f32 %v93, %v281
    %v283 = vpop.f32.mrf.mxu0
    %v284 = vpop.f32.mrf.mxu0
    %v285 = vadd.f32 %v93, %v284
    %v286 = vpop.f32.mrf.mxu0
    %287 = vmatprep.mubr.bf16.mxu0 0
    %288 = vmatmul.mubr.bf16.gmra.mxu0 %v158
    %v289 = vpop.f32.mrf.mxu0
    %v290 = vadd.f32 %v93, %v289
    %v291 = vpop.f32.mrf.mxu0
    %v292 = vpop.f32.mrf.mxu0
    %v293 = vpop.f32.mrf.mxu0
    %294 = vdwg.mxu0
    %295 = vst [vmem:[#allocation2] sm:$0xff] %v195
    %296 = vst [vmem:[#allocation2 + $0x8] sm:$0xff] %v197
    %297 = vst [vmem:[#allocation2 + $0x10] sm:$0xff] %v266
    %298 = vst [vmem:[#allocation2 + $0x18] sm:$0xff] %v199
    %299 = vst [vmem:[#allocation2 + $0x20] sm:$0xff] %v201
    %300 = vst [vmem:[#allocation2 + $0x28] sm:$0xff] %v269
    %301 = vst [vmem:[#allocation2 + $0x30] sm:$0xff] %v205
    %302 = vst [vmem:[#allocation2 + $0x38] sm:$0xff] %v207
    %303 = vst [vmem:[#allocation2 + $0x40] sm:$0xff] %v274
    %304 = vst [vmem:[#allocation2 + $0x48] sm:$0xff] %v209
    %305 = vst [vmem:[#allocation2 + $0x50] sm:$0xff] %v211
    %306 = vst [vmem:[#allocation2 + $0x58] sm:$0xff] %v277
    %307 = vst [vmem:[#allocation2 + $0x60] sm:$0xff] %v215
    %308 = vst [vmem:[#allocation2 + $0x68] sm:$0xff] %v217
    %309 = vst [vmem:[#allocation2 + $0x70] sm:$0xff] %v282
    %310 = vst [vmem:[#allocation2 + $0x78] sm:$0xff] %v219
    %311 = vst [vmem:[#allocation2 + $0x80] sm:$0xff] %v221
    %312 = vst [vmem:[#allocation2 + $0x88] sm:$0xff] %v285
    %313 = vst [vmem:[#allocation2 + $0x90] sm:$0xff] %v225
    %314 = vst [vmem:[#allocation2 + $0x98] sm:$0xff] %v227
    %315 = vst [vmem:[#allocation2 + $0xa0] sm:$0xff] %v290
    %v316 = vld [vmem:[#allocation6] sm:$0xff]
    %v317 = vld [vmem:[#allocation6 + $0x8] sm:$0xf]
    %v318 = vld [vmem:[#allocation6 + $0xc] sm:$0xff]
    %v319 = vld [vmem:[#allocation6 + $0x14] sm:$0xf]
    %v320 = vld [vmem:[#allocation6 + $0x18] sm:$0xff]
    %v321 = vld [vmem:[#allocation6 + $0x20] sm:$0xf]
    %v322 = vld [vmem:[#allocation6 + $0x24] sm:$0xff]
    %v323 = vld [vmem:[#allocation6 + $0x2c] sm:$0xf]
    %v324 = vld [vmem:[#allocation6 + $0x30] sm:$0xff]
    %v325 = vld [vmem:[#allocation6 + $0x38] sm:$0xf]
    %v326 = vld [vmem:[#allocation6 + $0x3c] sm:$0xff]
    %v327 = vld [vmem:[#allocation6 + $0x44] sm:$0xf]
    %v328 = vld [vmem:[#allocation6 + $0x48] sm:$0xff]
    %v329 = vld [vmem:[#allocation6 + $0x50] sm:$0xf]
    %v330 = vld [vmem:[#allocation6 + $0x54] sm:$0xff]
    %v331 = vld [vmem:[#allocation6 + $0x5c] sm:$0xf]
    %v332 = vld [vmem:[#allocation6 + $0x60] sm:$0xff]
    %v333 = vld [vmem:[#allocation6 + $0x68] sm:$0xf]
    %v334 = vld [vmem:[#allocation6 + $0x6c] sm:$0xff]
    %v335 = vld [vmem:[#allocation6 + $0x74] sm:$0xf]
    %v336 = vld [vmem:[#allocation6 + $0x78] sm:$0xff]
    %v337 = vld [vmem:[#allocation6 + $0x80] sm:$0xf]
    %v338 = vld [vmem:[#allocation6 + $0x84] sm:$0xff]
    %v339 = vld [vmem:[#allocation6 + $0x8c] sm:$0xf]
    %v340 = vld [vmem:[#allocation6 + $0x90] sm:$0xff]
    %v341 = vld [vmem:[#allocation6 + $0x98] sm:$0xf]
    %v342 = vld [vmem:[#allocation6 + $0x9c] sm:$0xff]
    %v343 = vld [vmem:[#allocation6 + $0xa4] sm:$0xf]
    %v344 = vld [vmem:[#allocation6 + $0xa8] sm:$0xff]
    %v345 = vld [vmem:[#allocation6 + $0xb0] sm:$0xf]
    %v346 = vld [vmem:[#allocation6 + $0xb4] sm:$0xff]
    %v347 = vld [vmem:[#allocation6 + $0xbc] sm:$0xf]
    %v348 = vld [vmem:[%s6] sm:$0x1]
    %v350 = vlaneseq
    %v351 = vshrl.u32 %v350, 7
    %v352 = vsub.s32 0, %v351
    %v353 = vrot.slane %v348, %v352
    %s355 = sld [smem:[#allocation4 + %s64]]
    %s356 = sshra.s32 %s355, 3
    %s357 = sand.u32 %s355, 7
    %s358 = sshra.s32 %s355, 3
    %s359 = sand.u32 %s355, 7
    %s360 = smul.u32 %s356, 3
    %s361 = smul.u32 %s360, 8
    %s362 = sadd.s32 %s361, %s359
    %s363 = scalar_lea.vmem [#allocation2], %s362
    %v364 = vld [vmem:[%s363] ss:$8 sm:$0x7]
    %s365 = sadd.s32 %s64, 1
    %s366 = sld [smem:[#allocation4 + %s365]]
    %s367 = sshra.s32 %s366, 3
    %s368 = sand.u32 %s366, 7
    %s369 = sshra.s32 %s366, 3
    %s370 = sand.u32 %s366, 7
    %s371 = smul.u32 %s367, 3
    %s372 = smul.u32 %s371, 8
    %s373 = sadd.s32 %s372, %s370
    %s374 = scalar_lea.vmem [#allocation2], %s373
    %v375 = vld [vmem:[%s374] ss:$8 sm:$0x7]
    %s376 = sadd.s32 %s64, 2
    %s377 = sld [smem:[#allocation4 + %s376]]
    %s378 = sshra.s32 %s377, 3
    %s379 = sand.u32 %s377, 7
    %s380 = sshra.s32 %s377, 3
    %s381 = sand.u32 %s377, 7
    %s382 = smul.u32 %s378, 3
    %s383 = smul.u32 %s382, 8
    %s384 = sadd.s32 %s383, %s381
    %s385 = scalar_lea.vmem [#allocation2], %s384
    %v386 = vld [vmem:[%s385] ss:$8 sm:$0x7]
    %s387 = sadd.s32 %s64, 3
    %s388 = sld [smem:[#allocation4 + %s387]]
    %s389 = sshra.s32 %s388, 3
    %s390 = sand.u32 %s388, 7
    %s391 = sshra.s32 %s388, 3
    %s392 = sand.u32 %s388, 7
    %s393 = smul.u32 %s389, 3
    %s394 = smul.u32 %s393, 8
    %s395 = sadd.s32 %s394, %s392
    %s396 = scalar_lea.vmem [#allocation2], %s395
    %v397 = vld [vmem:[%s396] ss:$8 sm:$0x7]
    %s398 = sadd.s32 %s64, 4
    %s399 = sld [smem:[#allocation4 + %s398]]
    %s400 = sshra.s32 %s399, 3
    %s401 = sand.u32 %s399, 7
    %s402 = sshra.s32 %s399, 3
    %s403 = sand.u32 %s399, 7
    %s404 = smul.u32 %s400, 3
    %s405 = smul.u32 %s404, 8
    %s406 = sadd.s32 %s405, %s403
    %s407 = scalar_lea.vmem [#allocation2], %s406
    %v408 = vld [vmem:[%s407] ss:$8 sm:$0x7]
    %s409 = sadd.s32 %s64, 5
    %s410 = sld [smem:[#allocation4 + %s409]]
    %s411 = sshra.s32 %s410, 3
    %s412 = sand.u32 %s410, 7
    %s413 = sshra.s32 %s410, 3
    %s414 = sand.u32 %s410, 7
    %s415 = smul.u32 %s411, 3
    %s416 = smul.u32 %s415, 8
    %s417 = sadd.s32 %s416, %s414
    %s418 = scalar_lea.vmem [#allocation2], %s417
    %v419 = vld [vmem:[%s418] ss:$8 sm:$0x7]
    %s420 = sadd.s32 %s64, 6
    %s421 = sld [smem:[#allocation4 + %s420]]
    %s422 = sshra.s32 %s421, 3
    %s423 = sand.u32 %s421, 7
    %s424 = sshra.s32 %s421, 3
    %s425 = sand.u32 %s421, 7
    %s426 = smul.u32 %s422, 3
    %s427 = smul.u32 %s426, 8
    %s428 = sadd.s32 %s427, %s425
    %s429 = scalar_lea.vmem [#allocation2], %s428
    %v430 = vld [vmem:[%s429] ss:$8 sm:$0x7]
    %s431 = sadd.s32 %s64, 7
    %s432 = sld [smem:[#allocation4 + %s431]]
    %s433 = sshra.s32 %s432, 3
    %s434 = sand.u32 %s432, 7
    %s435 = sshra.s32 %s432, 3
    %s436 = sand.u32 %s432, 7
    %s437 = smul.u32 %s433, 3
    %s438 = smul.u32 %s437, 8
    %s439 = sadd.s32 %s438, %s436
    %s440 = scalar_lea.vmem [#allocation2], %s439
    %v441 = vld [vmem:[%s440] ss:$8 sm:$0x7]
    %v443 = vlaneseq
    %v444 = vshrl.u32 %v443, 7
    %v445 = vsub.s32 0, %v444
    %v446 = vrot.slane %v364, %v445
    %v447 = vlaneseq
    %v448 = vshrl.u32 %v447, 7
    %v449 = vsub.s32 1, %v448
    %v450 = vrot.slane %v364, %v449
    %v451 = vlaneseq
    %v452 = vshrl.u32 %v451, 7
    %v453 = vsub.s32 2, %v452
    %v454 = vrot.slane %v364, %v453
    %v459 = vlaneseq
    %v460 = vshrl.u32 %v459, 7
    %v461 = vsub.s32 0, %v460
    %v462 = vrot.slane %v375, %v461
    %v463 = vlaneseq
    %v464 = vshrl.u32 %v463, 7
    %v465 = vsub.s32 1, %v464
    %v466 = vrot.slane %v375, %v465
    %v467 = vlaneseq
    %v468 = vshrl.u32 %v467, 7
    %v469 = vsub.s32 2, %v468
    %v470 = vrot.slane %v375, %v469
    %v475 = vlaneseq
    %v476 = vshrl.u32 %v475, 7
    %v477 = vsub.s32 0, %v476
    %v478 = vrot.slane %v386, %v477
    %v479 = vlaneseq
    %v480 = vshrl.u32 %v479, 7
    %v481 = vsub.s32 1, %v480
    %v482 = vrot.slane %v386, %v481
    %v483 = vlaneseq
    %v484 = vshrl.u32 %v483, 7
    %v485 = vsub.s32 2, %v484
    %v486 = vrot.slane %v386, %v485
    %v491 = vlaneseq
    %v492 = vshrl.u32 %v491, 7
    %v493 = vsub.s32 0, %v492
    %v494 = vrot.slane %v397, %v493
    %v495 = vlaneseq
    %v496 = vshrl.u32 %v495, 7
    %v497 = vsub.s32 1, %v496
    %v498 = vrot.slane %v397, %v497
    %v499 = vlaneseq
    %v500 = vshrl.u32 %v499, 7
    %v501 = vsub.s32 2, %v500
    %v502 = vrot.slane %v397, %v501
    %v507 = vlaneseq
    %v508 = vshrl.u32 %v507, 7
    %v509 = vsub.s32 0, %v508
    %v510 = vrot.slane %v408, %v509
    %v511 = vlaneseq
    %v512 = vshrl.u32 %v511, 7
    %v513 = vsub.s32 1, %v512
    %v514 = vrot.slane %v408, %v513
    %v515 = vlaneseq
    %v516 = vshrl.u32 %v515, 7
    %v517 = vsub.s32 2, %v516
    %v518 = vrot.slane %v408, %v517
    %v523 = vlaneseq
    %v524 = vshrl.u32 %v523, 7
    %v525 = vsub.s32 0, %v524
    %v526 = vrot.slane %v419, %v525
    %v527 = vlaneseq
    %v528 = vshrl.u32 %v527, 7
    %v529 = vsub.s32 1, %v528
    %v530 = vrot.slane %v419, %v529
    %v531 = vlaneseq
    %v532 = vshrl.u32 %v531, 7
    %v533 = vsub.s32 2, %v532
    %v534 = vrot.slane %v419, %v533
    %v539 = vlaneseq
    %v540 = vshrl.u32 %v539, 7
    %v541 = vsub.s32 0, %v540
    %v542 = vrot.slane %v430, %v541
    %v543 = vlaneseq
    %v544 = vshrl.u32 %v543, 7
    %v545 = vsub.s32 1, %v544
    %v546 = vrot.slane %v430, %v545
    %v547 = vlaneseq
    %v548 = vshrl.u32 %v547, 7
    %v549 = vsub.s32 2, %v548
    %v550 = vrot.slane %v430, %v549
    %v555 = vlaneseq
    %v556 = vshrl.u32 %v555, 7
    %v557 = vsub.s32 0, %v556
    %v558 = vrot.slane %v441, %v557
    %v559 = vlaneseq
    %v560 = vshrl.u32 %v559, 7
    %v561 = vsub.s32 1, %v560
    %v562 = vrot.slane %v441, %v561
    %v563 = vlaneseq
    %v564 = vshrl.u32 %v563, 7
    %v565 = vsub.s32 2, %v564
    %v566 = vrot.slane %v441, %v565
    %vm570 = vcmask 1040384
    %v571 = vsel %vm570, %v446, %v462
    %v572 = vsel %vm570, %v450, %v466
    %v573 = vsel %vm570, %v454, %v470
    %vm574 = vcmask 1041408
    %v575 = vsel %vm574, %v571, %v478
    %v576 = vsel %vm574, %v572, %v482
    %v577 = vsel %vm574, %v573, %v486
    %vm578 = vcmask 1042432
    %v579 = vsel %vm578, %v575, %v494
    %v580 = vsel %vm578, %v576, %v498
    %v581 = vsel %vm578, %v577, %v502
    %vm582 = vcmask 1043456
    %v583 = vsel %vm582, %v579, %v510
    %v584 = vsel %vm582, %v580, %v514
    %v585 = vsel %vm582, %v581, %v518
    %vm586 = vcmask 1044480
    %v587 = vsel %vm586, %v583, %v526
    %v588 = vsel %vm586, %v584, %v530
    %v589 = vsel %vm586, %v585, %v534
    %vm590 = vcmask 1045504
    %v591 = vsel %vm590, %v587, %v542
    %v592 = vsel %vm590, %v588, %v546
    %v593 = vsel %vm590, %v589, %v550
    %vm594 = vcmask 1046528
    %v595 = vsel %vm594, %v591, %v558
    %v596 = vsel %vm594, %v592, %v562
    %v597 = vsel %vm594, %v593, %v566
    %v630 = vunpack.c.l.b16 %v316
    %v631 = vunpack.c.h.b16 %v316
    %v632 = vunpack.c.l.b16 %v317
    %v633 = vunpack.c.l.b16 %v318
    %v634 = vunpack.c.h.b16 %v318
    %v635 = vunpack.c.l.b16 %v319
    %v636 = vunpack.c.l.b16 %v320
    %v637 = vunpack.c.h.b16 %v320
    %v638 = vunpack.c.l.b16 %v321
    %v639 = vunpack.c.l.b16 %v322
    %v640 = vunpack.c.h.b16 %v322
    %v641 = vunpack.c.l.b16 %v323
    %v642 = vunpack.c.l.b16 %v324
    %v643 = vunpack.c.h.b16 %v324
    %v644 = vunpack.c.l.b16 %v325
    %v645 = vunpack.c.l.b16 %v326
    %v646 = vunpack.c.h.b16 %v326
    %v647 = vunpack.c.l.b16 %v327
    %v648 = vunpack.c.l.b16 %v328
    %v649 = vunpack.c.h.b16 %v328
    %v650 = vunpack.c.l.b16 %v329
    %v651 = vunpack.c.l.b16 %v330
    %v652 = vunpack.c.h.b16 %v330
    %v653 = vunpack.c.l.b16 %v331
    %v654 = vunpack.c.l.b16 %v332
    %v655 = vunpack.c.h.b16 %v332
    %v656 = vunpack.c.l.b16 %v333
    %v657 = vunpack.c.l.b16 %v334
    %v658 = vunpack.c.h.b16 %v334
    %v659 = vunpack.c.l.b16 %v335
    %v660 = vunpack.c.l.b16 %v336
    %v661 = vunpack.c.h.b16 %v336
    %v662 = vunpack.c.l.b16 %v337
    %v663 = vunpack.c.l.b16 %v338
    %v664 = vunpack.c.h.b16 %v338
    %v665 = vunpack.c.l.b16 %v339
    %v666 = vunpack.c.l.b16 %v340
    %v667 = vunpack.c.h.b16 %v340
    %v668 = vunpack.c.l.b16 %v341
    %v669 = vunpack.c.l.b16 %v342
    %v670 = vunpack.c.h.b16 %v342
    %v671 = vunpack.c.l.b16 %v343
    %v672 = vunpack.c.l.b16 %v344
    %v673 = vunpack.c.h.b16 %v344
    %v674 = vunpack.c.l.b16 %v345
    %v675 = vunpack.c.l.b16 %v346
    %v676 = vunpack.c.h.b16 %v346
    %v677 = vunpack.c.l.b16 %v347
    %v678 = vpack.c.b16 %v633, %v630
    %v679 = vpack.c.b16 %v634, %v631
    %v680 = vpack.c.b16 %v635, %v632
    %v681 = vpack.c.b16 %v639, %v636
    %v682 = vpack.c.b16 %v640, %v637
    %v683 = vpack.c.b16 %v641, %v638
    %v684 = vpack.c.b16 %v645, %v642
    %v685 = vpack.c.b16 %v646, %v643
    %v686 = vpack.c.b16 %v647, %v644
    %v687 = vpack.c.b16 %v651, %v648
    %v688 = vpack.c.b16 %v652, %v649
    %v689 = vpack.c.b16 %v653, %v650
    %v690 = vpack.c.b16 %v657, %v654
    %v691 = vpack.c.b16 %v658, %v655
    %v692 = vpack.c.b16 %v659, %v656
    %v693 = vpack.c.b16 %v663, %v660
    %v694 = vpack.c.b16 %v664, %v661
    %v695 = vpack.c.b16 %v665, %v662
    %v696 = vpack.c.b16 %v669, %v666
    %v697 = vpack.c.b16 %v670, %v667
    %v698 = vpack.c.b16 %v671, %v668
    %v699 = vpack.c.b16 %v675, %v672
    %v700 = vpack.c.b16 %v676, %v673
    %v701 = vpack.c.b16 %v677, %v674
    %726 = vmatprep.subr.bf16.mxu0 %v700
    %727 = vmatpush1.bf16.msra.mxu0 %v699
    %728 = vmatprep.subr.bf16.mxu0 %v697
    %729 = vmatpush1.bf16.msra.mxu0 %v696
    %730 = vmatprep.subr.bf16.mxu0 %v694
    %731 = vmatpush1.bf16.msra.mxu0 %v693
    %732 = vmatprep.subr.bf16.mxu0 %v691
    %733 = vmatpush1.bf16.msra.mxu0 %v690
    %734 = vmatprep.subr.bf16.mxu0 %v688
    %735 = vmatpush1.bf16.msra.mxu0 %v687
    %736 = vmatprep.subr.bf16.mxu0 %v685
    %737 = vmatpush1.bf16.msra.mxu0 %v684
    %738 = vmatprep.subr.bf16.mxu0 %v682
    %739 = vmatpush1.bf16.msra.mxu0 %v681
    %740 = vmatprep.subr.bf16.mxu0 %v679
    %741 = vmatpush1.bf16.msra.mxu0 %v678
    %742 = vmatprep.subr.bf16.mxu0 0
    %743 = vmatpush2.bf16.msra.mxu0 0
    %744 = vmatprep.subr.bf16.mxu0 0
    %745 = vmatpush2.bf16.msra.mxu0 0
    %746 = vmatprep.subr.bf16.mxu0 0
    %747 = vmatpush2.bf16.msra.mxu0 0
    %748 = vmatprep.subr.bf16.mxu0 0
    %749 = vmatpush2.bf16.msra.mxu0 0
    %750 = vmatprep.subr.bf16.mxu0 0
    %751 = vmatpush2.bf16.msra.mxu0 0
    %752 = vmatprep.subr.bf16.mxu0 0
    %753 = vmatpush2.bf16.msra.mxu0 0
    %754 = vmatprep.subr.bf16.mxu0 0
    %755 = vmatpush2.bf16.msra.mxu0 0
    %756 = vmatprep.subr.bf16.mxu0 0
    %757 = vmatpush2.bf16.msra.mxu0 0
    %758 = vmatprep.mubr.bf16.mxu0 0
    %759 = vmatmul.mubr.bf16.gmra.mxu0 0
    %v760 = vpop.f32.mrf.mxu0
    %v761 = vadd.f32 0.0, %v760
    %v762 = vpop.f32.mrf.mxu0
    %v763 = vadd.f32 0.0, %v762
    %v764 = vpop.f32.mrf.mxu0
    %v765 = vpop.f32.mrf.mxu0
    %766 = vdwg.mxu0
    %767 = vmatprep.subr.bf16.mxu0 0
    %768 = vmatpush1.bf16.msra.mxu0 %v701
    %769 = vmatprep.subr.bf16.mxu0 0
    %770 = vmatpush1.bf16.msra.mxu0 %v698
    %771 = vmatprep.subr.bf16.mxu0 0
    %772 = vmatpush1.bf16.msra.mxu0 %v695
    %773 = vmatprep.subr.bf16.mxu0 0
    %774 = vmatpush1.bf16.msra.mxu0 %v692
    %775 = vmatprep.subr.bf16.mxu0 0
    %776 = vmatpush1.bf16.msra.mxu0 %v689
    %777 = vmatprep.subr.bf16.mxu0 0
    %778 = vmatpush1.bf16.msra.mxu0 %v686
    %779 = vmatprep.subr.bf16.mxu0 0
    %780 = vmatpush1.bf16.msra.mxu0 %v683
    %781 = vmatprep.subr.bf16.mxu0 0
    %782 = vmatpush1.bf16.msra.mxu0 %v680
    %783 = vmatprep.subr.bf16.mxu0 0
    %784 = vmatpush2.bf16.msra.mxu0 0
    %785 = vmatprep.subr.bf16.mxu0 0
    %786 = vmatpush2.bf16.msra.mxu0 0
    %787 = vmatprep.subr.bf16.mxu0 0
    %788 = vmatpush2.bf16.msra.mxu0 0
    %789 = vmatprep.subr.bf16.mxu0 0
    %790 = vmatpush2.bf16.msra.mxu0 0
    %791 = vmatprep.subr.bf16.mxu0 0
    %792 = vmatpush2.bf16.msra.mxu0 0
    %793 = vmatprep.subr.bf16.mxu0 0
    %794 = vmatpush2.bf16.msra.mxu0 0
    %795 = vmatprep.subr.bf16.mxu0 0
    %796 = vmatpush2.bf16.msra.mxu0 0
    %797 = vmatprep.subr.bf16.mxu0 0
    %798 = vmatpush2.bf16.msra.mxu0 0
    %799 = vmatprep.mubr.bf16.mxu0 0
    %800 = vmatmul.mubr.bf16.gmra.mxu0 0
    %v801 = vpop.f32.mrf.mxu0
    %v802 = vadd.f32 0.0, %v801
    %v803 = vpop.f32.mrf.mxu0
    %v804 = vpop.f32.mrf.mxu0
    %v805 = vpop.f32.mrf.mxu0
    %806 = vdwg.mxu0
    %v807 = vadd.f32 %v595, %v761
    %v808 = vxor.u32 %v807, 2147483648
    %v809 = vmul.f32 %v808, 1.442695
    %v810 = vpow.pop %v809
    %v811 = vadd.f32 %v810, 1.0
    %v812 = vrcp.pop %v811
    %v813 = vmul.f32 1.0, %v812
    %v814 = vadd.f32 %v596, %v763
    %v815 = vxor.u32 %v814, 2147483648
    %v816 = vmul.f32 %v815, 1.442695
    %v817 = vpow.pop %v816
    %v818 = vadd.f32 %v817, 1.0
    %v819 = vrcp.pop %v818
    %v820 = vmul.f32 1.0, %v819
    %v821 = vadd.f32 %v802, %v353
    %v822 = vmul.f32 %v813, %v821
    %v823 = vadd.f32 %v597, %v822
    %v824 = vtanh.pop %v823
    %v825 = vsub.f32 1.0, %v820
    %v826 = vmul.f32 %v825, %v824
    %v827 = vmul.f32 %v820, 0.0
    %v828 = vadd.f32 %v826, %v827
    %s829 = sshra.s32 %s64, 7
    %s830 = sand.u32 %s64, 127
    %s831 = sadd.s32 %s829, 1
    %s832 = smul.u32 %s831, 128
    %s833 = sshra.s32 %s64, 7
    %s834 = sand.u32 %s64, 127
    %s835 = sadd.s32 %s832, %s834
    %s836 = sld [smem:[#allocation4 + %s835]]
    %s837 = sshra.s32 %s836, 3
    %s838 = sand.u32 %s836, 7
    %s839 = sshra.s32 %s836, 3
    %s840 = sand.u32 %s836, 7
    %s841 = smul.u32 %s837, 3
    %s842 = smul.u32 %s841, 8
    %s843 = sadd.s32 %s842, %s840
    %s844 = scalar_lea.vmem [#allocation2], %s843
    %v845 = vld [vmem:[%s844] ss:$8 sm:$0x7]
    %s846 = sshra.s32 %s365, 7
    %s847 = sand.u32 %s365, 127
    %s848 = sadd.s32 %s846, 1
    %s849 = smul.u32 %s848, 128
    %s850 = sshra.s32 %s365, 7
    %s851 = sand.u32 %s365, 127
    %s852 = sadd.s32 %s849, %s851
    %s853 = sld [smem:[#allocation4 + %s852]]
    %s854 = sshra.s32 %s853, 3
    %s855 = sand.u32 %s853, 7
    %s856 = sshra.s32 %s853, 3
    %s857 = sand.u32 %s853, 7
    %s858 = smul.u32 %s854, 3
    %s859 = smul.u32 %s858, 8
    %s860 = sadd.s32 %s859, %s857
    %s861 = scalar_lea.vmem [#allocation2], %s860
    %v862 = vld [vmem:[%s861] ss:$8 sm:$0x7]
    %s863 = sshra.s32 %s376, 7
    %s864 = sand.u32 %s376, 127
    %s865 = sadd.s32 %s863, 1
    %s866 = smul.u32 %s865, 128
    %s867 = sshra.s32 %s376, 7
    %s868 = sand.u32 %s376, 127
    %s869 = sadd.s32 %s866, %s868
    %s870 = sld [smem:[#allocation4 + %s869]]
    %s871 = sshra.s32 %s870, 3
    %s872 = sand.u32 %s870, 7
    %s873 = sshra.s32 %s870, 3
    %s874 = sand.u32 %s870, 7
    %s875 = smul.u32 %s871, 3
    %s876 = smul.u32 %s875, 8
    %s877 = sadd.s32 %s876, %s874
    %s878 = scalar_lea.vmem [#allocation2], %s877
    %v879 = vld [vmem:[%s878] ss:$8 sm:$0x7]
    %s880 = sshra.s32 %s387, 7
    %s881 = sand.u32 %s387, 127
    %s882 = sadd.s32 %s880, 1
    %s883 = smul.u32 %s882, 128
    %s884 = sshra.s32 %s387, 7
    %s885 = sand.u32 %s387, 127
    %s886 = sadd.s32 %s883, %s885
    %s887 = sld [smem:[#allocation4 + %s886]]
    %s888 = sshra.s32 %s887, 3
    %s889 = sand.u32 %s887, 7
    %s890 = sshra.s32 %s887, 3
    %s891 = sand.u32 %s887, 7
    %s892 = smul.u32 %s888, 3
    %s893 = smul.u32 %s892, 8
    %s894 = sadd.s32 %s893, %s891
    %s895 = scalar_lea.vmem [#allocation2], %s894
    %v896 = vld [vmem:[%s895] ss:$8 sm:$0x7]
    %s897 = sshra.s32 %s398, 7
    %s898 = sand.u32 %s398, 127
    %s899 = sadd.s32 %s897, 1
    %s900 = smul.u32 %s899, 128
    %s901 = sshra.s32 %s398, 7
    %s902 = sand.u32 %s398, 127
    %s903 = sadd.s32 %s900, %s902
    %s904 = sld [smem:[#allocation4 + %s903]]
    %s905 = sshra.s32 %s904, 3
    %s906 = sand.u32 %s904, 7
    %s907 = sshra.s32 %s904, 3
    %s908 = sand.u32 %s904, 7
    %s909 = smul.u32 %s905, 3
    %s910 = smul.u32 %s909, 8
    %s911 = sadd.s32 %s910, %s908
    %s912 = scalar_lea.vmem [#allocation2], %s911
    %v913 = vld [vmem:[%s912] ss:$8 sm:$0x7]
    %s914 = sshra.s32 %s409, 7
    %s915 = sand.u32 %s409, 127
    %s916 = sadd.s32 %s914, 1
    %s917 = smul.u32 %s916, 128
    %s918 = sshra.s32 %s409, 7
    %s919 = sand.u32 %s409, 127
    %s920 = sadd.s32 %s917, %s919
    %s921 = sld [smem:[#allocation4 + %s920]]
    %s922 = sshra.s32 %s921, 3
    %s923 = sand.u32 %s921, 7
    %s924 = sshra.s32 %s921, 3
    %s925 = sand.u32 %s921, 7
    %s926 = smul.u32 %s922, 3
    %s927 = smul.u32 %s926, 8
    %s928 = sadd.s32 %s927, %s925
    %s929 = scalar_lea.vmem [#allocation2], %s928
    %v930 = vld [vmem:[%s929] ss:$8 sm:$0x7]
    %s931 = sshra.s32 %s420, 7
    %s932 = sand.u32 %s420, 127
    %s933 = sadd.s32 %s931, 1
    %s934 = smul.u32 %s933, 128
    %s935 = sshra.s32 %s420, 7
    %s936 = sand.u32 %s420, 127
    %s937 = sadd.s32 %s934, %s936
    %s938 = sld [smem:[#allocation4 + %s937]]
    %s939 = sshra.s32 %s938, 3
    %s940 = sand.u32 %s938, 7
    %s941 = sshra.s32 %s938, 3
    %s942 = sand.u32 %s938, 7
    %s943 = smul.u32 %s939, 3
    %s944 = smul.u32 %s943, 8
    %s945 = sadd.s32 %s944, %s942
    %s946 = scalar_lea.vmem [#allocation2], %s945
    %v947 = vld [vmem:[%s946] ss:$8 sm:$0x7]
    %s948 = sshra.s32 %s431, 7
    %s949 = sand.u32 %s431, 127
    %s950 = sadd.s32 %s948, 1
    %s951 = smul.u32 %s950, 128
    %s952 = sshra.s32 %s431, 7
    %s953 = sand.u32 %s431, 127
    %s954 = sadd.s32 %s951, %s953
    %s955 = sld [smem:[#allocation4 + %s954]]
    %s956 = sshra.s32 %s955, 3
    %s957 = sand.u32 %s955, 7
    %s958 = sshra.s32 %s955, 3
    %s959 = sand.u32 %s955, 7
    %s960 = smul.u32 %s956, 3
    %s961 = smul.u32 %s960, 8
    %s962 = sadd.s32 %s961, %s959
    %s963 = scalar_lea.vmem [#allocation2], %s962
    %v964 = vld [vmem:[%s963] ss:$8 sm:$0x7]
    %v966 = vlaneseq
    %v967 = vshrl.u32 %v966, 7
    %v968 = vsub.s32 0, %v967
    %v969 = vrot.slane %v845, %v968
    %v970 = vlaneseq
    %v971 = vshrl.u32 %v970, 7
    %v972 = vsub.s32 1, %v971
    %v973 = vrot.slane %v845, %v972
    %v974 = vlaneseq
    %v975 = vshrl.u32 %v974, 7
    %v976 = vsub.s32 2, %v975
    %v977 = vrot.slane %v845, %v976
    %v982 = vlaneseq
    %v983 = vshrl.u32 %v982, 7
    %v984 = vsub.s32 0, %v983
    %v985 = vrot.slane %v862, %v984
    %v986 = vlaneseq
    %v987 = vshrl.u32 %v986, 7
    %v988 = vsub.s32 1, %v987
    %v989 = vrot.slane %v862, %v988
    %v990 = vlaneseq
    %v991 = vshrl.u32 %v990, 7
    %v992 = vsub.s32 2, %v991
    %v993 = vrot.slane %v862, %v992
    %v998 = vlaneseq
    %v999 = vshrl.u32 %v998, 7
    %v1000 = vsub.s32 0, %v999
    %v1001 = vrot.slane %v879, %v1000
    %v1002 = vlaneseq
    %v1003 = vshrl.u32 %v1002, 7
    %v1004 = vsub.s32 1, %v1003
    %v1005 = vrot.slane %v879, %v1004
    %v1006 = vlaneseq
    %v1007 = vshrl.u32 %v1006, 7
    %v1008 = vsub.s32 2, %v1007
    %v1009 = vrot.slane %v879, %v1008
    %v1014 = vlaneseq
    %v1015 = vshrl.u32 %v1014, 7
    %v1016 = vsub.s32 0, %v1015
    %v1017 = vrot.slane %v896, %v1016
    %v1018 = vlaneseq
    %v1019 = vshrl.u32 %v1018, 7
    %v1020 = vsub.s32 1, %v1019
    %v1021 = vrot.slane %v896, %v1020
    %v1022 = vlaneseq
    %v1023 = vshrl.u32 %v1022, 7
    %v1024 = vsub.s32 2, %v1023
    %v1025 = vrot.slane %v896, %v1024
    %v1030 = vlaneseq
    %v1031 = vshrl.u32 %v1030, 7
    %v1032 = vsub.s32 0, %v1031
    %v1033 = vrot.slane %v913, %v1032
    %v1034 = vlaneseq
    %v1035 = vshrl.u32 %v1034, 7
    %v1036 = vsub.s32 1, %v1035
    %v1037 = vrot.slane %v913, %v1036
    %v1038 = vlaneseq
    %v1039 = vshrl.u32 %v1038, 7
    %v1040 = vsub.s32 2, %v1039
    %v1041 = vrot.slane %v913, %v1040
    %v1046 = vlaneseq
    %v1047 = vshrl.u32 %v1046, 7
    %v1048 = vsub.s32 0, %v1047
    %v1049 = vrot.slane %v930, %v1048
    %v1050 = vlaneseq
    %v1051 = vshrl.u32 %v1050, 7
    %v1052 = vsub.s32 1, %v1051
    %v1053 = vrot.slane %v930, %v1052
    %v1054 = vlaneseq
    %v1055 = vshrl.u32 %v1054, 7
    %v1056 = vsub.s32 2, %v1055
    %v1057 = vrot.slane %v930, %v1056
    %v1062 = vlaneseq
    %v1063 = vshrl.u32 %v1062, 7
    %v1064 = vsub.s32 0, %v1063
    %v1065 = vrot.slane %v947, %v1064
    %v1066 = vlaneseq
    %v1067 = vshrl.u32 %v1066, 7
    %v1068 = vsub.s32 1, %v1067
    %v1069 = vrot.slane %v947, %v1068
    %v1070 = vlaneseq
    %v1071 = vshrl.u32 %v1070, 7
    %v1072 = vsub.s32 2, %v1071
    %v1073 = vrot.slane %v947, %v1072
    %v1078 = vlaneseq
    %v1079 = vshrl.u32 %v1078, 7
    %v1080 = vsub.s32 0, %v1079
    %v1081 = vrot.slane %v964, %v1080
    %v1082 = vlaneseq
    %v1083 = vshrl.u32 %v1082, 7
    %v1084 = vsub.s32 1, %v1083
    %v1085 = vrot.slane %v964, %v1084
    %v1086 = vlaneseq
    %v1087 = vshrl.u32 %v1086, 7
    %v1088 = vsub.s32 2, %v1087
    %v1089 = vrot.slane %v964, %v1088
    %v1093 = vsel %vm570, %v969, %v985
    %v1094 = vsel %vm570, %v973, %v989
    %v1095 = vsel %vm570, %v977, %v993
    %v1096 = vsel %vm574, %v1093, %v1001
    %v1097 = vsel %vm574, %v1094, %v1005
    %v1098 = vsel %vm574, %v1095, %v1009
    %v1099 = vsel %vm578, %v1096, %v1017
    %v1100 = vsel %vm578, %v1097, %v1021
    %v1101 = vsel %vm578, %v1098, %v1025
    %v1102 = vsel %vm582, %v1099, %v1033
    %v1103 = vsel %vm582, %v1100, %v1037
    %v1104 = vsel %vm582, %v1101, %v1041
    %v1105 = vsel %vm586, %v1102, %v1049
    %v1106 = vsel %vm586, %v1103, %v1053
    %v1107 = vsel %vm586, %v1104, %v1057
    %v1108 = vsel %vm590, %v1105, %v1065
    %v1109 = vsel %vm590, %v1106, %v1069
    %v1110 = vsel %vm590, %v1107, %v1073
    %v1111 = vsel %vm594, %v1108, %v1081
    %v1112 = vsel %vm594, %v1109, %v1085
    %v1113 = vsel %vm594, %v1110, %v1089
    %v1114 = vpack.c.bf16 %v828, %v828
    %1115 = vmatprep.subr.bf16.mxu0 %v700
    %1116 = vmatpush1.bf16.msra.mxu0 %v699
    %1117 = vmatprep.subr.bf16.mxu0 %v697
    %1118 = vmatpush1.bf16.msra.mxu0 %v696
    %1119 = vmatprep.subr.bf16.mxu0 %v694
    %1120 = vmatpush1.bf16.msra.mxu0 %v693
    %1121 = vmatprep.subr.bf16.mxu0 %v691
    %1122 = vmatpush1.bf16.msra.mxu0 %v690
    %1123 = vmatprep.subr.bf16.mxu0 %v688
    %1124 = vmatpush1.bf16.msra.mxu0 %v687
    %1125 = vmatprep.subr.bf16.mxu0 %v685
    %1126 = vmatpush1.bf16.msra.mxu0 %v684
    %1127 = vmatprep.subr.bf16.mxu0 %v682
    %1128 = vmatpush1.bf16.msra.mxu0 %v681
    %1129 = vmatprep.subr.bf16.mxu0 %v679
    %1130 = vmatpush1.bf16.msra.mxu0 %v678
    %1131 = vmatprep.subr.bf16.mxu0 0
    %1132 = vmatpush2.bf16.msra.mxu0 0
    %1133 = vmatprep.subr.bf16.mxu0 0
    %1134 = vmatpush2.bf16.msra.mxu0 0
    %1135 = vmatprep.subr.bf16.mxu0 0
    %1136 = vmatpush2.bf16.msra.mxu0 0
    %1137 = vmatprep.subr.bf16.mxu0 0
    %1138 = vmatpush2.bf16.msra.mxu0 0
    %1139 = vmatprep.subr.bf16.mxu0 0
    %1140 = vmatpush2.bf16.msra.mxu0 0
    %1141 = vmatprep.subr.bf16.mxu0 0
    %1142 = vmatpush2.bf16.msra.mxu0 0
    %1143 = vmatprep.subr.bf16.mxu0 0
    %1144 = vmatpush2.bf16.msra.mxu0 0
    %1145 = vmatprep.subr.bf16.mxu0 0
    %1146 = vmatpush2.bf16.msra.mxu0 0
    %1147 = vmatprep.mubr.bf16.mxu0 0
    %1148 = vmatmul.mubr.bf16.gmra.mxu0 %v1114
    %v1149 = vpop.f32.mrf.mxu0
    %v1150 = vadd.f32 0.0, %v1149
    %v1151 = vpop.f32.mrf.mxu0
    %v1152 = vadd.f32 0.0, %v1151
    %v1153 = vpop.f32.mrf.mxu0
    %v1154 = vpop.f32.mrf.mxu0
    %1155 = vdwg.mxu0
    %1156 = vmatprep.subr.bf16.mxu0 0
    %1157 = vmatpush1.bf16.msra.mxu0 %v701
    %1158 = vmatprep.subr.bf16.mxu0 0
    %1159 = vmatpush1.bf16.msra.mxu0 %v698
    %1160 = vmatprep.subr.bf16.mxu0 0
    %1161 = vmatpush1.bf16.msra.mxu0 %v695
    %1162 = vmatprep.subr.bf16.mxu0 0
    %1163 = vmatpush1.bf16.msra.mxu0 %v692
    %1164 = vmatprep.subr.bf16.mxu0 0
    %1165 = vmatpush1.bf16.msra.mxu0 %v689
    %1166 = vmatprep.subr.bf16.mxu0 0
    %1167 = vmatpush1.bf16.msra.mxu0 %v686
    %1168 = vmatprep.subr.bf16.mxu0 0
    %1169 = vmatpush1.bf16.msra.mxu0 %v683
    %1170 = vmatprep.subr.bf16.mxu0 0
    %1171 = vmatpush1.bf16.msra.mxu0 %v680
    %1172 = vmatprep.subr.bf16.mxu0 0
    %1173 = vmatpush2.bf16.msra.mxu0 0
    %1174 = vmatprep.subr.bf16.mxu0 0
    %1175 = vmatpush2.bf16.msra.mxu0 0
    %1176 = vmatprep.subr.bf16.mxu0 0
    %1177 = vmatpush2.bf16.msra.mxu0 0
    %1178 = vmatprep.subr.bf16.mxu0 0
    %1179 = vmatpush2.bf16.msra.mxu0 0
    %1180 = vmatprep.subr.bf16.mxu0 0
    %1181 = vmatpush2.bf16.msra.mxu0 0
    %1182 = vmatprep.subr.bf16.mxu0 0
    %1183 = vmatpush2.bf16.msra.mxu0 0
    %1184 = vmatprep.subr.bf16.mxu0 0
    %1185 = vmatpush2.bf16.msra.mxu0 0
    %1186 = vmatprep.subr.bf16.mxu0 0
    %1187 = vmatpush2.bf16.msra.mxu0 0
    %1188 = vmatprep.mubr.bf16.mxu0 0
    %1189 = vmatmul.mubr.bf16.gmra.mxu0 %v1114
    %v1190 = vpop.f32.mrf.mxu0
    %v1191 = vadd.f32 0.0, %v1190
    %v1192 = vpop.f32.mrf.mxu0
    %v1193 = vpop.f32.mrf.mxu0
    %v1194 = vpop.f32.mrf.mxu0
    %1195 = vdwg.mxu0
    %v1196 = vadd.f32 %v1111, %v1150
    %v1197 = vxor.u32 %v1196, 2147483648
    %v1198 = vmul.f32 %v1197, 1.442695
    %v1199 = vpow.pop %v1198
    %v1200 = vadd.f32 %v1199, 1.0
    %v1201 = vrcp.pop %v1200
    %v1202 = vmul.f32 1.0, %v1201
    %v1203 = vadd.f32 %v1112, %v1152
    %v1204 = vxor.u32 %v1203, 2147483648
    %v1205 = vmul.f32 %v1204, 1.442695
    %v1206 = vpow.pop %v1205
    %v1207 = vadd.f32 %v1206, 1.0
    %v1208 = vrcp.pop %v1207
    %v1209 = vmul.f32 1.0, %v1208
    %v1210 = vadd.f32 %v1191, %v353
    %v1211 = vmul.f32 %v1202, %v1210
    %v1212 = vadd.f32 %v1113, %v1211
    %v1213 = vtanh.pop %v1212
    %v1214 = vsub.f32 1.0, %v1209
    %v1215 = vmul.f32 %v1214, %v1213
    %v1216 = vmul.f32 %v1209, %v828
    %v1217 = vadd.f32 %v1215, %v1216
    %s1218 = sadd.s32 %s829, 2
    %s1219 = smul.u32 %s1218, 128
    %s1220 = sadd.s32 %s1219, %s834
    %s1221 = sld [smem:[#allocation4 + %s1220]]
    %s1222 = sshra.s32 %s1221, 3
    %s1223 = sand.u32 %s1221, 7
    %s1224 = sshra.s32 %s1221, 3
    %s1225 = sand.u32 %s1221, 7
    %s1226 = smul.u32 %s1222, 3
    %s1227 = smul.u32 %s1226, 8
    %s1228 = sadd.s32 %s1227, %s1225
    %s1229 = scalar_lea.vmem [#allocation2], %s1228
    %v1230 = vld [vmem:[%s1229] ss:$8 sm:$0x7]
    %s1231 = sadd.s32 %s846, 2
    %s1232 = smul.u32 %s1231, 128
    %s1233 = sadd.s32 %s1232, %s851
    %s1234 = sld [smem:[#allocation4 + %s1233]]
    %s1235 = sshra.s32 %s1234, 3
    %s1236 = sand.u32 %s1234, 7
    %s1237 = sshra.s32 %s1234, 3
    %s1238 = sand.u32 %s1234, 7
    %s1239 = smul.u32 %s1235, 3
    %s1240 = smul.u32 %s1239, 8
    %s1241 = sadd.s32 %s1240, %s1238
    %s1242 = scalar_lea.vmem [#allocation2], %s1241
    %v1243 = vld [vmem:[%s1242] ss:$8 sm:$0x7]
    %s1244 = sadd.s32 %s863, 2
    %s1245 = smul.u32 %s1244, 128
    %s1246 = sadd.s32 %s1245, %s868
    %s1247 = sld [smem:[#allocation4 + %s1246]]
    %s1248 = sshra.s32 %s1247, 3
    %s1249 = sand.u32 %s1247, 7
    %s1250 = sshra.s32 %s1247, 3
    %s1251 = sand.u32 %s1247, 7
    %s1252 = smul.u32 %s1248, 3
    %s1253 = smul.u32 %s1252, 8
    %s1254 = sadd.s32 %s1253, %s1251
    %s1255 = scalar_lea.vmem [#allocation2], %s1254
    %v1256 = vld [vmem:[%s1255] ss:$8 sm:$0x7]
    %s1257 = sadd.s32 %s880, 2
    %s1258 = smul.u32 %s1257, 128
    %s1259 = sadd.s32 %s1258, %s885
    %s1260 = sld [smem:[#allocation4 + %s1259]]
    %s1261 = sshra.s32 %s1260, 3
    %s1262 = sand.u32 %s1260, 7
    %s1263 = sshra.s32 %s1260, 3
    %s1264 = sand.u32 %s1260, 7
    %s1265 = smul.u32 %s1261, 3
    %s1266 = smul.u32 %s1265, 8
    %s1267 = sadd.s32 %s1266, %s1264
    %s1268 = scalar_lea.vmem [#allocation2], %s1267
    %v1269 = vld [vmem:[%s1268] ss:$8 sm:$0x7]
    %s1270 = sadd.s32 %s897, 2
    %s1271 = smul.u32 %s1270, 128
    %s1272 = sadd.s32 %s1271, %s902
    %s1273 = sld [smem:[#allocation4 + %s1272]]
    %s1274 = sshra.s32 %s1273, 3
    %s1275 = sand.u32 %s1273, 7
    %s1276 = sshra.s32 %s1273, 3
    %s1277 = sand.u32 %s1273, 7
    %s1278 = smul.u32 %s1274, 3
    %s1279 = smul.u32 %s1278, 8
    %s1280 = sadd.s32 %s1279, %s1277
    %s1281 = scalar_lea.vmem [#allocation2], %s1280
    %v1282 = vld [vmem:[%s1281] ss:$8 sm:$0x7]
    %s1283 = sadd.s32 %s914, 2
    %s1284 = smul.u32 %s1283, 128
    %s1285 = sadd.s32 %s1284, %s919
    %s1286 = sld [smem:[#allocation4 + %s1285]]
    %s1287 = sshra.s32 %s1286, 3
    %s1288 = sand.u32 %s1286, 7
    %s1289 = sshra.s32 %s1286, 3
    %s1290 = sand.u32 %s1286, 7
    %s1291 = smul.u32 %s1287, 3
    %s1292 = smul.u32 %s1291, 8
    %s1293 = sadd.s32 %s1292, %s1290
    %s1294 = scalar_lea.vmem [#allocation2], %s1293
    %v1295 = vld [vmem:[%s1294] ss:$8 sm:$0x7]
    %s1296 = sadd.s32 %s931, 2
    %s1297 = smul.u32 %s1296, 128
    %s1298 = sadd.s32 %s1297, %s936
    %s1299 = sld [smem:[#allocation4 + %s1298]]
    %s1300 = sshra.s32 %s1299, 3
    %s1301 = sand.u32 %s1299, 7
    %s1302 = sshra.s32 %s1299, 3
    %s1303 = sand.u32 %s1299, 7
    %s1304 = smul.u32 %s1300, 3
    %s1305 = smul.u32 %s1304, 8
    %s1306 = sadd.s32 %s1305, %s1303
    %s1307 = scalar_lea.vmem [#allocation2], %s1306
    %v1308 = vld [vmem:[%s1307] ss:$8 sm:$0x7]
    %s1309 = sadd.s32 %s948, 2
    %s1310 = smul.u32 %s1309, 128
    %s1311 = sadd.s32 %s1310, %s953
    %s1312 = sld [smem:[#allocation4 + %s1311]]
    %s1313 = sshra.s32 %s1312, 3
    %s1314 = sand.u32 %s1312, 7
    %s1315 = sshra.s32 %s1312, 3
    %s1316 = sand.u32 %s1312, 7
    %s1317 = smul.u32 %s1313, 3
    %s1318 = smul.u32 %s1317, 8
    %s1319 = sadd.s32 %s1318, %s1316
    %s1320 = scalar_lea.vmem [#allocation2], %s1319
    %v1321 = vld [vmem:[%s1320] ss:$8 sm:$0x7]
    %v1323 = vlaneseq
    %v1324 = vshrl.u32 %v1323, 7
    %v1325 = vsub.s32 0, %v1324
    %v1326 = vrot.slane %v1230, %v1325
    %v1327 = vlaneseq
    %v1328 = vshrl.u32 %v1327, 7
    %v1329 = vsub.s32 1, %v1328
    %v1330 = vrot.slane %v1230, %v1329
    %v1331 = vlaneseq
    %v1332 = vshrl.u32 %v1331, 7
    %v1333 = vsub.s32 2, %v1332
    %v1334 = vrot.slane %v1230, %v1333
    %v1339 = vlaneseq
    %v1340 = vshrl.u32 %v1339, 7
    %v1341 = vsub.s32 0, %v1340
    %v1342 = vrot.slane %v1243, %v1341
    %v1343 = vlaneseq
    %v1344 = vshrl.u32 %v1343, 7
    %v1345 = vsub.s32 1, %v1344
    %v1346 = vrot.slane %v1243, %v1345
    %v1347 = vlaneseq
    %v1348 = vshrl.u32 %v1347, 7
    %v1349 = vsub.s32 2, %v1348
    %v1350 = vrot.slane %v1243, %v1349
    %v1355 = vlaneseq
    %v1356 = vshrl.u32 %v1355, 7
    %v1357 = vsub.s32 0, %v1356
    %v1358 = vrot.slane %v1256, %v1357
    %v1359 = vlaneseq
    %v1360 = vshrl.u32 %v1359, 7
    %v1361 = vsub.s32 1, %v1360
    %v1362 = vrot.slane %v1256, %v1361
    %v1363 = vlaneseq
    %v1364 = vshrl.u32 %v1363, 7
    %v1365 = vsub.s32 2, %v1364
    %v1366 = vrot.slane %v1256, %v1365
    %v1371 = vlaneseq
    %v1372 = vshrl.u32 %v1371, 7
    %v1373 = vsub.s32 0, %v1372
    %v1374 = vrot.slane %v1269, %v1373
    %v1375 = vlaneseq
    %v1376 = vshrl.u32 %v1375, 7
    %v1377 = vsub.s32 1, %v1376
    %v1378 = vrot.slane %v1269, %v1377
    %v1379 = vlaneseq
    %v1380 = vshrl.u32 %v1379, 7
    %v1381 = vsub.s32 2, %v1380
    %v1382 = vrot.slane %v1269, %v1381
    %v1387 = vlaneseq
    %v1388 = vshrl.u32 %v1387, 7
    %v1389 = vsub.s32 0, %v1388
    %v1390 = vrot.slane %v1282, %v1389
    %v1391 = vlaneseq
    %v1392 = vshrl.u32 %v1391, 7
    %v1393 = vsub.s32 1, %v1392
    %v1394 = vrot.slane %v1282, %v1393
    %v1395 = vlaneseq
    %v1396 = vshrl.u32 %v1395, 7
    %v1397 = vsub.s32 2, %v1396
    %v1398 = vrot.slane %v1282, %v1397
    %v1403 = vlaneseq
    %v1404 = vshrl.u32 %v1403, 7
    %v1405 = vsub.s32 0, %v1404
    %v1406 = vrot.slane %v1295, %v1405
    %v1407 = vlaneseq
    %v1408 = vshrl.u32 %v1407, 7
    %v1409 = vsub.s32 1, %v1408
    %v1410 = vrot.slane %v1295, %v1409
    %v1411 = vlaneseq
    %v1412 = vshrl.u32 %v1411, 7
    %v1413 = vsub.s32 2, %v1412
    %v1414 = vrot.slane %v1295, %v1413
    %v1419 = vlaneseq
    %v1420 = vshrl.u32 %v1419, 7
    %v1421 = vsub.s32 0, %v1420
    %v1422 = vrot.slane %v1308, %v1421
    %v1423 = vlaneseq
    %v1424 = vshrl.u32 %v1423, 7
    %v1425 = vsub.s32 1, %v1424
    %v1426 = vrot.slane %v1308, %v1425
    %v1427 = vlaneseq
    %v1428 = vshrl.u32 %v1427, 7
    %v1429 = vsub.s32 2, %v1428
    %v1430 = vrot.slane %v1308, %v1429
    %v1435 = vlaneseq
    %v1436 = vshrl.u32 %v1435, 7
    %v1437 = vsub.s32 0, %v1436
    %v1438 = vrot.slane %v1321, %v1437
    %v1439 = vlaneseq
    %v1440 = vshrl.u32 %v1439, 7
    %v1441 = vsub.s32 1, %v1440
    %v1442 = vrot.slane %v1321, %v1441
    %v1443 = vlaneseq
    %v1444 = vshrl.u32 %v1443, 7
    %v1445 = vsub.s32 2, %v1444
    %v1446 = vrot.slane %v1321, %v1445
    %v1450 = vsel %vm570, %v1326, %v1342
    %v1451 = vsel %vm570, %v1330, %v1346
    %v1452 = vsel %vm570, %v1334, %v1350
    %v1453 = vsel %vm574, %v1450, %v1358
    %v1454 = vsel %vm574, %v1451, %v1362
    %v1455 = vsel %vm574, %v1452, %v1366
    %v1456 = vsel %vm578, %v1453, %v1374
    %v1457 = vsel %vm578, %v1454, %v1378
    %v1458 = vsel %vm578, %v1455, %v1382
    %v1459 = vsel %vm582, %v1456, %v1390
    %v1460 = vsel %vm582, %v1457, %v1394
    %v1461 = vsel %vm582, %v1458, %v1398
    %v1462 = vsel %vm586, %v1459, %v1406
    %v1463 = vsel %vm586, %v1460, %v1410
    %v1464 = vsel %vm586, %v1461, %v1414
    %v1465 = vsel %vm590, %v1462, %v1422
    %v1466 = vsel %vm590, %v1463, %v1426
    %v1467 = vsel %vm590, %v1464, %v1430
    %v1468 = vsel %vm594, %v1465, %v1438
    %v1469 = vsel %vm594, %v1466, %v1442
    %v1470 = vsel %vm594, %v1467, %v1446
    %v1471 = vpack.c.bf16 %v1217, %v1217
    %1472 = vmatprep.subr.bf16.mxu0 %v700
    %1473 = vmatpush1.bf16.msra.mxu0 %v699
    %1474 = vmatprep.subr.bf16.mxu0 %v697
    %1475 = vmatpush1.bf16.msra.mxu0 %v696
    %1476 = vmatprep.subr.bf16.mxu0 %v694
    %1477 = vmatpush1.bf16.msra.mxu0 %v693
    %1478 = vmatprep.subr.bf16.mxu0 %v691
    %1479 = vmatpush1.bf16.msra.mxu0 %v690
    %1480 = vmatprep.subr.bf16.mxu0 %v688
    %1481 = vmatpush1.bf16.msra.mxu0 %v687
    %1482 = vmatprep.subr.bf16.mxu0 %v685
    %1483 = vmatpush1.bf16.msra.mxu0 %v684
    %1484 = vmatprep.subr.bf16.mxu0 %v682
    %1485 = vmatpush1.bf16.msra.mxu0 %v681
    %1486 = vmatprep.subr.bf16.mxu0 %v679
    %1487 = vmatpush1.bf16.msra.mxu0 %v678
    %1488 = vmatprep.subr.bf16.mxu0 0
    %1489 = vmatpush2.bf16.msra.mxu0 0
    %1490 = vmatprep.subr.bf16.mxu0 0
    %1491 = vmatpush2.bf16.msra.mxu0 0
    %1492 = vmatprep.subr.bf16.mxu0 0
    %1493 = vmatpush2.bf16.msra.mxu0 0
    %1494 = vmatprep.subr.bf16.mxu0 0
    %1495 = vmatpush2.bf16.msra.mxu0 0
    %1496 = vmatprep.subr.bf16.mxu0 0
    %1497 = vmatpush2.bf16.msra.mxu0 0
    %1498 = vmatprep.subr.bf16.mxu0 0
    %1499 = vmatpush2.bf16.msra.mxu0 0
    %1500 = vmatprep.subr.bf16.mxu0 0
    %1501 = vmatpush2.bf16.msra.mxu0 0
    %1502 = vmatprep.subr.bf16.mxu0 0
    %1503 = vmatpush2.bf16.msra.mxu0 0
    %1504 = vmatprep.mubr.bf16.mxu0 0
    %1505 = vmatmul.mubr.bf16.gmra.mxu0 %v1471
    %v1506 = vpop.f32.mrf.mxu0
    %v1507 = vadd.f32 0.0, %v1506
    %v1508 = vpop.f32.mrf.mxu0
    %v1509 = vadd.f32 0.0, %v1508
    %v1510 = vpop.f32.mrf.mxu0
    %v1511 = vpop.f32.mrf.mxu0
    %1512 = vdwg.mxu0
    %1513 = vmatprep.subr.bf16.mxu0 0
    %1514 = vmatpush1.bf16.msra.mxu0 %v701
    %1515 = vmatprep.subr.bf16.mxu0 0
    %1516 = vmatpush1.bf16.msra.mxu0 %v698
    %1517 = vmatprep.subr.bf16.mxu0 0
    %1518 = vmatpush1.bf16.msra.mxu0 %v695
    %1519 = vmatprep.subr.bf16.mxu0 0
    %1520 = vmatpush1.bf16.msra.mxu0 %v692
    %1521 = vmatprep.subr.bf16.mxu0 0
    %1522 = vmatpush1.bf16.msra.mxu0 %v689
    %1523 = vmatprep.subr.bf16.mxu0 0
    %1524 = vmatpush1.bf16.msra.mxu0 %v686
    %1525 = vmatprep.subr.bf16.mxu0 0
    %1526 = vmatpush1.bf16.msra.mxu0 %v683
    %1527 = vmatprep.subr.bf16.mxu0 0
    %1528 = vmatpush1.bf16.msra.mxu0 %v680
    %1529 = vmatprep.subr.bf16.mxu0 0
    %1530 = vmatpush2.bf16.msra.mxu0 0
    %1531 = vmatprep.subr.bf16.mxu0 0
    %1532 = vmatpush2.bf16.msra.mxu0 0
    %1533 = vmatprep.subr.bf16.mxu0 0
    %1534 = vmatpush2.bf16.msra.mxu0 0
    %1535 = vmatprep.subr.bf16.mxu0 0
    %1536 = vmatpush2.bf16.msra.mxu0 0
    %1537 = vmatprep.subr.bf16.mxu0 0
    %1538 = vmatpush2.bf16.msra.mxu0 0
    %1539 = vmatprep.subr.bf16.mxu0 0
    %1540 = vmatpush2.bf16.msra.mxu0 0
    %1541 = vmatprep.subr.bf16.mxu0 0
    %1542 = vmatpush2.bf16.msra.mxu0 0
    %1543 = vmatprep.subr.bf16.mxu0 0
    %1544 = vmatpush2.bf16.msra.mxu0 0
    %1545 = vmatprep.mubr.bf16.mxu0 0
    %1546 = vmatmul.mubr.bf16.gmra.mxu0 %v1471
    %v1547 = vpop.f32.mrf.mxu0
    %v1548 = vadd.f32 0.0, %v1547
    %v1549 = vpop.f32.mrf.mxu0
    %v1550 = vpop.f32.mrf.mxu0
    %v1551 = vpop.f32.mrf.mxu0
    %1552 = vdwg.mxu0
    %v1553 = vadd.f32 %v1468, %v1507
    %v1554 = vxor.u32 %v1553, 2147483648
    %v1555 = vmul.f32 %v1554, 1.442695
    %v1556 = vpow.pop %v1555
    %v1557 = vadd.f32 %v1556, 1.0
    %v1558 = vrcp.pop %v1557
    %v1559 = vmul.f32 1.0, %v1558
    %v1560 = vadd.f32 %v1469, %v1509
    %v1561 = vxor.u32 %v1560, 2147483648
    %v1562 = vmul.f32 %v1561, 1.442695
    %v1563 = vpow.pop %v1562
    %v1564 = vadd.f32 %v1563, 1.0
    %v1565 = vrcp.pop %v1564
    %v1566 = vmul.f32 1.0, %v1565
    %v1567 = vadd.f32 %v1548, %v353
    %v1568 = vmul.f32 %v1559, %v1567
    %v1569 = vadd.f32 %v1470, %v1568
    %v1570 = vtanh.pop %v1569
    %v1571 = vsub.f32 1.0, %v1566
    %v1572 = vmul.f32 %v1571, %v1570
    %v1573 = vmul.f32 %v1566, %v1217
    %v1574 = vadd.f32 %v1572, %v1573
    %s1575 = sadd.s32 %s829, 3
    %s1576 = smul.u32 %s1575, 128
    %s1577 = sadd.s32 %s1576, %s834
    %s1578 = sld [smem:[#allocation4 + %s1577]]
    %s1579 = sshra.s32 %s1578, 3
    %s1580 = sand.u32 %s1578, 7
    %s1581 = sshra.s32 %s1578, 3
    %s1582 = sand.u32 %s1578, 7
    %s1583 = smul.u32 %s1579, 3
    %s1584 = smul.u32 %s1583, 8
    %s1585 = sadd.s32 %s1584, %s1582
    %s1586 = scalar_lea.vmem [#allocation2], %s1585
    %v1587 = vld [vmem:[%s1586] ss:$8 sm:$0x7]
    %s1588 = sadd.s32 %s846, 3
    %s1589 = smul.u32 %s1588, 128
    %s1590 = sadd.s32 %s1589, %s851
    %s1591 = sld [smem:[#allocation4 + %s1590]]
    %s1592 = sshra.s32 %s1591, 3
    %s1593 = sand.u32 %s1591, 7
    %s1594 = sshra.s32 %s1591, 3
    %s1595 = sand.u32 %s1591, 7
    %s1596 = smul.u32 %s1592, 3
    %s1597 = smul.u32 %s1596, 8
    %s1598 = sadd.s32 %s1597, %s1595
    %s1599 = scalar_lea.vmem [#allocation2], %s1598
    %v1600 = vld [vmem:[%s1599] ss:$8 sm:$0x7]
    %s1601 = sadd.s32 %s863, 3
    %s1602 = smul.u32 %s1601, 128
    %s1603 = sadd.s32 %s1602, %s868
    %s1604 = sld [smem:[#allocation4 + %s1603]]
    %s1605 = sshra.s32 %s1604, 3
    %s1606 = sand.u32 %s1604, 7
    %s1607 = sshra.s32 %s1604, 3
    %s1608 = sand.u32 %s1604, 7
    %s1609 = smul.u32 %s1605, 3
    %s1610 = smul.u32 %s1609, 8
    %s1611 = sadd.s32 %s1610, %s1608
    %s1612 = scalar_lea.vmem [#allocation2], %s1611
    %v1613 = vld [vmem:[%s1612] ss:$8 sm:$0x7]
    %s1614 = sadd.s32 %s880, 3
    %s1615 = smul.u32 %s1614, 128
    %s1616 = sadd.s32 %s1615, %s885
    %s1617 = sld [smem:[#allocation4 + %s1616]]
    %s1618 = sshra.s32 %s1617, 3
    %s1619 = sand.u32 %s1617, 7
    %s1620 = sshra.s32 %s1617, 3
    %s1621 = sand.u32 %s1617, 7
    %s1622 = smul.u32 %s1618, 3
    %s1623 = smul.u32 %s1622, 8
    %s1624 = sadd.s32 %s1623, %s1621
    %s1625 = scalar_lea.vmem [#allocation2], %s1624
    %v1626 = vld [vmem:[%s1625] ss:$8 sm:$0x7]
    %s1627 = sadd.s32 %s897, 3
    %s1628 = smul.u32 %s1627, 128
    %s1629 = sadd.s32 %s1628, %s902
    %s1630 = sld [smem:[#allocation4 + %s1629]]
    %s1631 = sshra.s32 %s1630, 3
    %s1632 = sand.u32 %s1630, 7
    %s1633 = sshra.s32 %s1630, 3
    %s1634 = sand.u32 %s1630, 7
    %s1635 = smul.u32 %s1631, 3
    %s1636 = smul.u32 %s1635, 8
    %s1637 = sadd.s32 %s1636, %s1634
    %s1638 = scalar_lea.vmem [#allocation2], %s1637
    %v1639 = vld [vmem:[%s1638] ss:$8 sm:$0x7]
    %s1640 = sadd.s32 %s914, 3
    %s1641 = smul.u32 %s1640, 128
    %s1642 = sadd.s32 %s1641, %s919
    %s1643 = sld [smem:[#allocation4 + %s1642]]
    %s1644 = sshra.s32 %s1643, 3
    %s1645 = sand.u32 %s1643, 7
    %s1646 = sshra.s32 %s1643, 3
    %s1647 = sand.u32 %s1643, 7
    %s1648 = smul.u32 %s1644, 3
    %s1649 = smul.u32 %s1648, 8
    %s1650 = sadd.s32 %s1649, %s1647
    %s1651 = scalar_lea.vmem [#allocation2], %s1650
    %v1652 = vld [vmem:[%s1651] ss:$8 sm:$0x7]
    %s1653 = sadd.s32 %s931, 3
    %s1654 = smul.u32 %s1653, 128
    %s1655 = sadd.s32 %s1654, %s936
    %s1656 = sld [smem:[#allocation4 + %s1655]]
    %s1657 = sshra.s32 %s1656, 3
    %s1658 = sand.u32 %s1656, 7
    %s1659 = sshra.s32 %s1656, 3
    %s1660 = sand.u32 %s1656, 7
    %s1661 = smul.u32 %s1657, 3
    %s1662 = smul.u32 %s1661, 8
    %s1663 = sadd.s32 %s1662, %s1660
    %s1664 = scalar_lea.vmem [#allocation2], %s1663
    %v1665 = vld [vmem:[%s1664] ss:$8 sm:$0x7]
    %s1666 = sadd.s32 %s948, 3
    %s1667 = smul.u32 %s1666, 128
    %s1668 = sadd.s32 %s1667, %s953
    %s1669 = sld [smem:[#allocation4 + %s1668]]
    %s1670 = sshra.s32 %s1669, 3
    %s1671 = sand.u32 %s1669, 7
    %s1672 = sshra.s32 %s1669, 3
    %s1673 = sand.u32 %s1669, 7
    %s1674 = smul.u32 %s1670, 3
    %s1675 = smul.u32 %s1674, 8
    %s1676 = sadd.s32 %s1675, %s1673
    %s1677 = scalar_lea.vmem [#allocation2], %s1676
    %v1678 = vld [vmem:[%s1677] ss:$8 sm:$0x7]
    %v1680 = vlaneseq
    %v1681 = vshrl.u32 %v1680, 7
    %v1682 = vsub.s32 0, %v1681
    %v1683 = vrot.slane %v1587, %v1682
    %v1684 = vlaneseq
    %v1685 = vshrl.u32 %v1684, 7
    %v1686 = vsub.s32 1, %v1685
    %v1687 = vrot.slane %v1587, %v1686
    %v1688 = vlaneseq
    %v1689 = vshrl.u32 %v1688, 7
    %v1690 = vsub.s32 2, %v1689
    %v1691 = vrot.slane %v1587, %v1690
    %v1696 = vlaneseq
    %v1697 = vshrl.u32 %v1696, 7
    %v1698 = vsub.s32 0, %v1697
    %v1699 = vrot.slane %v1600, %v1698
    %v1700 = vlaneseq
    %v1701 = vshrl.u32 %v1700, 7
    %v1702 = vsub.s32 1, %v1701
    %v1703 = vrot.slane %v1600, %v1702
    %v1704 = vlaneseq
    %v1705 = vshrl.u32 %v1704, 7
    %v1706 = vsub.s32 2, %v1705
    %v1707 = vrot.slane %v1600, %v1706
    %v1712 = vlaneseq
    %v1713 = vshrl.u32 %v1712, 7
    %v1714 = vsub.s32 0, %v1713
    %v1715 = vrot.slane %v1613, %v1714
    %v1716 = vlaneseq
    %v1717 = vshrl.u32 %v1716, 7
    %v1718 = vsub.s32 1, %v1717
    %v1719 = vrot.slane %v1613, %v1718
    %v1720 = vlaneseq
    %v1721 = vshrl.u32 %v1720, 7
    %v1722 = vsub.s32 2, %v1721
    %v1723 = vrot.slane %v1613, %v1722
    %v1728 = vlaneseq
    %v1729 = vshrl.u32 %v1728, 7
    %v1730 = vsub.s32 0, %v1729
    %v1731 = vrot.slane %v1626, %v1730
    %v1732 = vlaneseq
    %v1733 = vshrl.u32 %v1732, 7
    %v1734 = vsub.s32 1, %v1733
    %v1735 = vrot.slane %v1626, %v1734
    %v1736 = vlaneseq
    %v1737 = vshrl.u32 %v1736, 7
    %v1738 = vsub.s32 2, %v1737
    %v1739 = vrot.slane %v1626, %v1738
    %v1744 = vlaneseq
    %v1745 = vshrl.u32 %v1744, 7
    %v1746 = vsub.s32 0, %v1745
    %v1747 = vrot.slane %v1639, %v1746
    %v1748 = vlaneseq
    %v1749 = vshrl.u32 %v1748, 7
    %v1750 = vsub.s32 1, %v1749
    %v1751 = vrot.slane %v1639, %v1750
    %v1752 = vlaneseq
    %v1753 = vshrl.u32 %v1752, 7
    %v1754 = vsub.s32 2, %v1753
    %v1755 = vrot.slane %v1639, %v1754
    %v1760 = vlaneseq
    %v1761 = vshrl.u32 %v1760, 7
    %v1762 = vsub.s32 0, %v1761
    %v1763 = vrot.slane %v1652, %v1762
    %v1764 = vlaneseq
    %v1765 = vshrl.u32 %v1764, 7
    %v1766 = vsub.s32 1, %v1765
    %v1767 = vrot.slane %v1652, %v1766
    %v1768 = vlaneseq
    %v1769 = vshrl.u32 %v1768, 7
    %v1770 = vsub.s32 2, %v1769
    %v1771 = vrot.slane %v1652, %v1770
    %v1776 = vlaneseq
    %v1777 = vshrl.u32 %v1776, 7
    %v1778 = vsub.s32 0, %v1777
    %v1779 = vrot.slane %v1665, %v1778
    %v1780 = vlaneseq
    %v1781 = vshrl.u32 %v1780, 7
    %v1782 = vsub.s32 1, %v1781
    %v1783 = vrot.slane %v1665, %v1782
    %v1784 = vlaneseq
    %v1785 = vshrl.u32 %v1784, 7
    %v1786 = vsub.s32 2, %v1785
    %v1787 = vrot.slane %v1665, %v1786
    %v1792 = vlaneseq
    %v1793 = vshrl.u32 %v1792, 7
    %v1794 = vsub.s32 0, %v1793
    %v1795 = vrot.slane %v1678, %v1794
    %v1796 = vlaneseq
    %v1797 = vshrl.u32 %v1796, 7
    %v1798 = vsub.s32 1, %v1797
    %v1799 = vrot.slane %v1678, %v1798
    %v1800 = vlaneseq
    %v1801 = vshrl.u32 %v1800, 7
    %v1802 = vsub.s32 2, %v1801
    %v1803 = vrot.slane %v1678, %v1802
    %v1807 = vsel %vm570, %v1683, %v1699
    %v1808 = vsel %vm570, %v1687, %v1703
    %v1809 = vsel %vm570, %v1691, %v1707
    %v1810 = vsel %vm574, %v1807, %v1715
    %v1811 = vsel %vm574, %v1808, %v1719
    %v1812 = vsel %vm574, %v1809, %v1723
    %v1813 = vsel %vm578, %v1810, %v1731
    %v1814 = vsel %vm578, %v1811, %v1735
    %v1815 = vsel %vm578, %v1812, %v1739
    %v1816 = vsel %vm582, %v1813, %v1747
    %v1817 = vsel %vm582, %v1814, %v1751
    %v1818 = vsel %vm582, %v1815, %v1755
    %v1819 = vsel %vm586, %v1816, %v1763
    %v1820 = vsel %vm586, %v1817, %v1767
    %v1821 = vsel %vm586, %v1818, %v1771
    %v1822 = vsel %vm590, %v1819, %v1779
    %v1823 = vsel %vm590, %v1820, %v1783
    %v1824 = vsel %vm590, %v1821, %v1787
    %v1825 = vsel %vm594, %v1822, %v1795
    %v1826 = vsel %vm594, %v1823, %v1799
    %v1827 = vsel %vm594, %v1824, %v1803
    %v1828 = vpack.c.bf16 %v1574, %v1574
    %1829 = vmatprep.subr.bf16.mxu0 %v700
    %1830 = vmatpush1.bf16.msra.mxu0 %v699
    %1831 = vmatprep.subr.bf16.mxu0 %v697
    %1832 = vmatpush1.bf16.msra.mxu0 %v696
    %1833 = vmatprep.subr.bf16.mxu0 %v694
    %1834 = vmatpush1.bf16.msra.mxu0 %v693
    %1835 = vmatprep.subr.bf16.mxu0 %v691
    %1836 = vmatpush1.bf16.msra.mxu0 %v690
    %1837 = vmatprep.subr.bf16.mxu0 %v688
    %1838 = vmatpush1.bf16.msra.mxu0 %v687
    %1839 = vmatprep.subr.bf16.mxu0 %v685
    %1840 = vmatpush1.bf16.msra.mxu0 %v684
    %1841 = vmatprep.subr.bf16.mxu0 %v682
    %1842 = vmatpush1.bf16.msra.mxu0 %v681
    %1843 = vmatprep.subr.bf16.mxu0 %v679
    %1844 = vmatpush1.bf16.msra.mxu0 %v678
    %1845 = vmatprep.subr.bf16.mxu0 0
    %1846 = vmatpush2.bf16.msra.mxu0 0
    %1847 = vmatprep.subr.bf16.mxu0 0
    %1848 = vmatpush2.bf16.msra.mxu0 0
    %1849 = vmatprep.subr.bf16.mxu0 0
    %1850 = vmatpush2.bf16.msra.mxu0 0
    %1851 = vmatprep.subr.bf16.mxu0 0
    %1852 = vmatpush2.bf16.msra.mxu0 0
    %1853 = vmatprep.subr.bf16.mxu0 0
    %1854 = vmatpush2.bf16.msra.mxu0 0
    %1855 = vmatprep.subr.bf16.mxu0 0
    %1856 = vmatpush2.bf16.msra.mxu0 0
    %1857 = vmatprep.subr.bf16.mxu0 0
    %1858 = vmatpush2.bf16.msra.mxu0 0
    %1859 = vmatprep.subr.bf16.mxu0 0
    %1860 = vmatpush2.bf16.msra.mxu0 0
    %1861 = vmatprep.mubr.bf16.mxu0 0
    %1862 = vmatmul.mubr.bf16.gmra.mxu0 %v1828
    %v1863 = vpop.f32.mrf.mxu0
    %v1864 = vadd.f32 0.0, %v1863
    %v1865 = vpop.f32.mrf.mxu0
    %v1866 = vadd.f32 0.0, %v1865
    %v1867 = vpop.f32.mrf.mxu0
    %v1868 = vpop.f32.mrf.mxu0
    %1869 = vdwg.mxu0
    %1870 = vmatprep.subr.bf16.mxu0 0
    %1871 = vmatpush1.bf16.msra.mxu0 %v701
    %1872 = vmatprep.subr.bf16.mxu0 0
    %1873 = vmatpush1.bf16.msra.mxu0 %v698
    %1874 = vmatprep.subr.bf16.mxu0 0
    %1875 = vmatpush1.bf16.msra.mxu0 %v695
    %1876 = vmatprep.subr.bf16.mxu0 0
    %1877 = vmatpush1.bf16.msra.mxu0 %v692
    %1878 = vmatprep.subr.bf16.mxu0 0
    %1879 = vmatpush1.bf16.msra.mxu0 %v689
    %1880 = vmatprep.subr.bf16.mxu0 0
    %1881 = vmatpush1.bf16.msra.mxu0 %v686
    %1882 = vmatprep.subr.bf16.mxu0 0
    %1883 = vmatpush1.bf16.msra.mxu0 %v683
    %1884 = vmatprep.subr.bf16.mxu0 0
    %1885 = vmatpush1.bf16.msra.mxu0 %v680
    %1886 = vmatprep.subr.bf16.mxu0 0
    %1887 = vmatpush2.bf16.msra.mxu0 0
    %1888 = vmatprep.subr.bf16.mxu0 0
    %1889 = vmatpush2.bf16.msra.mxu0 0
    %1890 = vmatprep.subr.bf16.mxu0 0
    %1891 = vmatpush2.bf16.msra.mxu0 0
    %1892 = vmatprep.subr.bf16.mxu0 0
    %1893 = vmatpush2.bf16.msra.mxu0 0
    %1894 = vmatprep.subr.bf16.mxu0 0
    %1895 = vmatpush2.bf16.msra.mxu0 0
    %1896 = vmatprep.subr.bf16.mxu0 0
    %1897 = vmatpush2.bf16.msra.mxu0 0
    %1898 = vmatprep.subr.bf16.mxu0 0
    %1899 = vmatpush2.bf16.msra.mxu0 0
    %1900 = vmatprep.subr.bf16.mxu0 0
    %1901 = vmatpush2.bf16.msra.mxu0 0
    %1902 = vmatprep.mubr.bf16.mxu0 0
    %1903 = vmatmul.mubr.bf16.gmra.mxu0 %v1828
    %v1904 = vpop.f32.mrf.mxu0
    %v1905 = vadd.f32 0.0, %v1904
    %v1906 = vpop.f32.mrf.mxu0
    %v1907 = vpop.f32.mrf.mxu0
    %v1908 = vpop.f32.mrf.mxu0
    %1909 = vdwg.mxu0
    %v1910 = vadd.f32 %v1825, %v1864
    %v1911 = vxor.u32 %v1910, 2147483648
    %v1912 = vmul.f32 %v1911, 1.442695
    %v1913 = vpow.pop %v1912
    %v1914 = vadd.f32 %v1913, 1.0
    %v1915 = vrcp.pop %v1914
    %v1916 = vmul.f32 1.0, %v1915
    %v1917 = vadd.f32 %v1826, %v1866
    %v1918 = vxor.u32 %v1917, 2147483648
    %v1919 = vmul.f32 %v1918, 1.442695
    %v1920 = vpow.pop %v1919
    %v1921 = vadd.f32 %v1920, 1.0
    %v1922 = vrcp.pop %v1921
    %v1923 = vmul.f32 1.0, %v1922
    %v1924 = vadd.f32 %v1905, %v353
    %v1925 = vmul.f32 %v1916, %v1924
    %v1926 = vadd.f32 %v1827, %v1925
    %v1927 = vtanh.pop %v1926
    %v1928 = vsub.f32 1.0, %v1923
    %v1929 = vmul.f32 %v1928, %v1927
    %v1930 = vmul.f32 %v1923, %v1574
    %v1931 = vadd.f32 %v1929, %v1930
    %s1932 = sadd.s32 %s829, 4
    %s1933 = smul.u32 %s1932, 128
    %s1934 = sadd.s32 %s1933, %s834
    %s1935 = sld [smem:[#allocation4 + %s1934]]
    %s1936 = sshra.s32 %s1935, 3
    %s1937 = sand.u32 %s1935, 7
    %s1938 = sshra.s32 %s1935, 3
    %s1939 = sand.u32 %s1935, 7
    %s1940 = smul.u32 %s1936, 3
    %s1941 = smul.u32 %s1940, 8
    %s1942 = sadd.s32 %s1941, %s1939
    %s1943 = scalar_lea.vmem [#allocation2], %s1942
    %v1944 = vld [vmem:[%s1943] ss:$8 sm:$0x7]
    %s1945 = sadd.s32 %s846, 4
    %s1946 = smul.u32 %s1945, 128
    %s1947 = sadd.s32 %s1946, %s851
    %s1948 = sld [smem:[#allocation4 + %s1947]]
    %s1949 = sshra.s32 %s1948, 3
    %s1950 = sand.u32 %s1948, 7
    %s1951 = sshra.s32 %s1948, 3
    %s1952 = sand.u32 %s1948, 7
    %s1953 = smul.u32 %s1949, 3
    %s1954 = smul.u32 %s1953, 8
    %s1955 = sadd.s32 %s1954, %s1952
    %s1956 = scalar_lea.vmem [#allocation2], %s1955
    %v1957 = vld [vmem:[%s1956] ss:$8 sm:$0x7]
    %s1958 = sadd.s32 %s863, 4
    %s1959 = smul.u32 %s1958, 128
    %s1960 = sadd.s32 %s1959, %s868
    %s1961 = sld [smem:[#allocation4 + %s1960]]
    %s1962 = sshra.s32 %s1961, 3
    %s1963 = sand.u32 %s1961, 7
    %s1964 = sshra.s32 %s1961, 3
    %s1965 = sand.u32 %s1961, 7
    %s1966 = smul.u32 %s1962, 3
    %s1967 = smul.u32 %s1966, 8
    %s1968 = sadd.s32 %s1967, %s1965
    %s1969 = scalar_lea.vmem [#allocation2], %s1968
    %v1970 = vld [vmem:[%s1969] ss:$8 sm:$0x7]
    %s1971 = sadd.s32 %s880, 4
    %s1972 = smul.u32 %s1971, 128
    %s1973 = sadd.s32 %s1972, %s885
    %s1974 = sld [smem:[#allocation4 + %s1973]]
    %s1975 = sshra.s32 %s1974, 3
    %s1976 = sand.u32 %s1974, 7
    %s1977 = sshra.s32 %s1974, 3
    %s1978 = sand.u32 %s1974, 7
    %s1979 = smul.u32 %s1975, 3
    %s1980 = smul.u32 %s1979, 8
    %s1981 = sadd.s32 %s1980, %s1978
    %s1982 = scalar_lea.vmem [#allocation2], %s1981
    %v1983 = vld [vmem:[%s1982] ss:$8 sm:$0x7]
    %s1984 = sadd.s32 %s897, 4
    %s1985 = smul.u32 %s1984, 128
    %s1986 = sadd.s32 %s1985, %s902
    %s1987 = sld [smem:[#allocation4 + %s1986]]
    %s1988 = sshra.s32 %s1987, 3
    %s1989 = sand.u32 %s1987, 7
    %s1990 = sshra.s32 %s1987, 3
    %s1991 = sand.u32 %s1987, 7
    %s1992 = smul.u32 %s1988, 3
    %s1993 = smul.u32 %s1992, 8
    %s1994 = sadd.s32 %s1993, %s1991
    %s1995 = scalar_lea.vmem [#allocation2], %s1994
    %v1996 = vld [vmem:[%s1995] ss:$8 sm:$0x7]
    %s1997 = sadd.s32 %s914, 4
    %s1998 = smul.u32 %s1997, 128
    %s1999 = sadd.s32 %s1998, %s919
    %s2000 = sld [smem:[#allocation4 + %s1999]]
    %s2001 = sshra.s32 %s2000, 3
    %s2002 = sand.u32 %s2000, 7
    %s2003 = sshra.s32 %s2000, 3
    %s2004 = sand.u32 %s2000, 7
    %s2005 = smul.u32 %s2001, 3
    %s2006 = smul.u32 %s2005, 8
    %s2007 = sadd.s32 %s2006, %s2004
    %s2008 = scalar_lea.vmem [#allocation2], %s2007
    %v2009 = vld [vmem:[%s2008] ss:$8 sm:$0x7]
    %s2010 = sadd.s32 %s931, 4
    %s2011 = smul.u32 %s2010, 128
    %s2012 = sadd.s32 %s2011, %s936
    %s2013 = sld [smem:[#allocation4 + %s2012]]
    %s2014 = sshra.s32 %s2013, 3
    %s2015 = sand.u32 %s2013, 7
    %s2016 = sshra.s32 %s2013, 3
    %s2017 = sand.u32 %s2013, 7
    %s2018 = smul.u32 %s2014, 3
    %s2019 = smul.u32 %s2018, 8
    %s2020 = sadd.s32 %s2019, %s2017
    %s2021 = scalar_lea.vmem [#allocation2], %s2020
    %v2022 = vld [vmem:[%s2021] ss:$8 sm:$0x7]
    %s2023 = sadd.s32 %s948, 4
    %s2024 = smul.u32 %s2023, 128
    %s2025 = sadd.s32 %s2024, %s953
    %s2026 = sld [smem:[#allocation4 + %s2025]]
    %s2027 = sshra.s32 %s2026, 3
    %s2028 = sand.u32 %s2026, 7
    %s2029 = sshra.s32 %s2026, 3
    %s2030 = sand.u32 %s2026, 7
    %s2031 = smul.u32 %s2027, 3
    %s2032 = smul.u32 %s2031, 8
    %s2033 = sadd.s32 %s2032, %s2030
    %s2034 = scalar_lea.vmem [#allocation2], %s2033
    %v2035 = vld [vmem:[%s2034] ss:$8 sm:$0x7]
    %v2037 = vlaneseq
    %v2038 = vshrl.u32 %v2037, 7
    %v2039 = vsub.s32 0, %v2038
    %v2040 = vrot.slane %v1944, %v2039
    %v2041 = vlaneseq
    %v2042 = vshrl.u32 %v2041, 7
    %v2043 = vsub.s32 1, %v2042
    %v2044 = vrot.slane %v1944, %v2043
    %v2045 = vlaneseq
    %v2046 = vshrl.u32 %v2045, 7
    %v2047 = vsub.s32 2, %v2046
    %v2048 = vrot.slane %v1944, %v2047
    %v2053 = vlaneseq
    %v2054 = vshrl.u32 %v2053, 7
    %v2055 = vsub.s32 0, %v2054
    %v2056 = vrot.slane %v1957, %v2055
    %v2057 = vlaneseq
    %v2058 = vshrl.u32 %v2057, 7
    %v2059 = vsub.s32 1, %v2058
    %v2060 = vrot.slane %v1957, %v2059
    %v2061 = vlaneseq
    %v2062 = vshrl.u32 %v2061, 7
    %v2063 = vsub.s32 2, %v2062
    %v2064 = vrot.slane %v1957, %v2063
    %v2069 = vlaneseq
    %v2070 = vshrl.u32 %v2069, 7
    %v2071 = vsub.s32 0, %v2070
    %v2072 = vrot.slane %v1970, %v2071
    %v2073 = vlaneseq
    %v2074 = vshrl.u32 %v2073, 7
    %v2075 = vsub.s32 1, %v2074
    %v2076 = vrot.slane %v1970, %v2075
    %v2077 = vlaneseq
    %v2078 = vshrl.u32 %v2077, 7
    %v2079 = vsub.s32 2, %v2078
    %v2080 = vrot.slane %v1970, %v2079
    %v2085 = vlaneseq
    %v2086 = vshrl.u32 %v2085, 7
    %v2087 = vsub.s32 0, %v2086
    %v2088 = vrot.slane %v1983, %v2087
    %v2089 = vlaneseq
    %v2090 = vshrl.u32 %v2089, 7
    %v2091 = vsub.s32 1, %v2090
    %v2092 = vrot.slane %v1983, %v2091
    %v2093 = vlaneseq
    %v2094 = vshrl.u32 %v2093, 7
    %v2095 = vsub.s32 2, %v2094
    %v2096 = vrot.slane %v1983, %v2095
    %v2101 = vlaneseq
    %v2102 = vshrl.u32 %v2101, 7
    %v2103 = vsub.s32 0, %v2102
    %v2104 = vrot.slane %v1996, %v2103
    %v2105 = vlaneseq
    %v2106 = vshrl.u32 %v2105, 7
    %v2107 = vsub.s32 1, %v2106
    %v2108 = vrot.slane %v1996, %v2107
    %v2109 = vlaneseq
    %v2110 = vshrl.u32 %v2109, 7
    %v2111 = vsub.s32 2, %v2110
    %v2112 = vrot.slane %v1996, %v2111
    %v2117 = vlaneseq
    %v2118 = vshrl.u32 %v2117, 7
    %v2119 = vsub.s32 0, %v2118
    %v2120 = vrot.slane %v2009, %v2119
    %v2121 = vlaneseq
    %v2122 = vshrl.u32 %v2121, 7
    %v2123 = vsub.s32 1, %v2122
    %v2124 = vrot.slane %v2009, %v2123
    %v2125 = vlaneseq
    %v2126 = vshrl.u32 %v2125, 7
    %v2127 = vsub.s32 2, %v2126
    %v2128 = vrot.slane %v2009, %v2127
    %v2133 = vlaneseq
    %v2134 = vshrl.u32 %v2133, 7
    %v2135 = vsub.s32 0, %v2134
    %v2136 = vrot.slane %v2022, %v2135
    %v2137 = vlaneseq
    %v2138 = vshrl.u32 %v2137, 7
    %v2139 = vsub.s32 1, %v2138
    %v2140 = vrot.slane %v2022, %v2139
    %v2141 = vlaneseq
    %v2142 = vshrl.u32 %v2141, 7
    %v2143 = vsub.s32 2, %v2142
    %v2144 = vrot.slane %v2022, %v2143
    %v2149 = vlaneseq
    %v2150 = vshrl.u32 %v2149, 7
    %v2151 = vsub.s32 0, %v2150
    %v2152 = vrot.slane %v2035, %v2151
    %v2153 = vlaneseq
    %v2154 = vshrl.u32 %v2153, 7
    %v2155 = vsub.s32 1, %v2154
    %v2156 = vrot.slane %v2035, %v2155
    %v2157 = vlaneseq
    %v2158 = vshrl.u32 %v2157, 7
    %v2159 = vsub.s32 2, %v2158
    %v2160 = vrot.slane %v2035, %v2159
    %v2164 = vsel %vm570, %v2040, %v2056
    %v2165 = vsel %vm570, %v2044, %v2060
    %v2166 = vsel %vm570, %v2048, %v2064
    %v2167 = vsel %vm574, %v2164, %v2072
    %v2168 = vsel %vm574, %v2165, %v2076
    %v2169 = vsel %vm574, %v2166, %v2080
    %v2170 = vsel %vm578, %v2167, %v2088
    %v2171 = vsel %vm578, %v2168, %v2092
    %v2172 = vsel %vm578, %v2169, %v2096
    %v2173 = vsel %vm582, %v2170, %v2104
    %v2174 = vsel %vm582, %v2171, %v2108
    %v2175 = vsel %vm582, %v2172, %v2112
    %v2176 = vsel %vm586, %v2173, %v2120
    %v2177 = vsel %vm586, %v2174, %v2124
    %v2178 = vsel %vm586, %v2175, %v2128
    %v2179 = vsel %vm590, %v2176, %v2136
    %v2180 = vsel %vm590, %v2177, %v2140
    %v2181 = vsel %vm590, %v2178, %v2144
    %v2182 = vsel %vm594, %v2179, %v2152
    %v2183 = vsel %vm594, %v2180, %v2156
    %v2184 = vsel %vm594, %v2181, %v2160
    %v2185 = vpack.c.bf16 %v1931, %v1931
    %2186 = vmatprep.subr.bf16.mxu0 %v700
    %2187 = vmatpush1.bf16.msra.mxu0 %v699
    %2188 = vmatprep.subr.bf16.mxu0 %v697
    %2189 = vmatpush1.bf16.msra.mxu0 %v696
    %2190 = vmatprep.subr.bf16.mxu0 %v694
    %2191 = vmatpush1.bf16.msra.mxu0 %v693
    %2192 = vmatprep.subr.bf16.mxu0 %v691
    %2193 = vmatpush1.bf16.msra.mxu0 %v690
    %2194 = vmatprep.subr.bf16.mxu0 %v688
    %2195 = vmatpush1.bf16.msra.mxu0 %v687
    %2196 = vmatprep.subr.bf16.mxu0 %v685
    %2197 = vmatpush1.bf16.msra.mxu0 %v684
    %2198 = vmatprep.subr.bf16.mxu0 %v682
    %2199 = vmatpush1.bf16.msra.mxu0 %v681
    %2200 = vmatprep.subr.bf16.mxu0 %v679
    %2201 = vmatpush1.bf16.msra.mxu0 %v678
    %2202 = vmatprep.subr.bf16.mxu0 0
    %2203 = vmatpush2.bf16.msra.mxu0 0
    %2204 = vmatprep.subr.bf16.mxu0 0
    %2205 = vmatpush2.bf16.msra.mxu0 0
    %2206 = vmatprep.subr.bf16.mxu0 0
    %2207 = vmatpush2.bf16.msra.mxu0 0
    %2208 = vmatprep.subr.bf16.mxu0 0
    %2209 = vmatpush2.bf16.msra.mxu0 0
    %2210 = vmatprep.subr.bf16.mxu0 0
    %2211 = vmatpush2.bf16.msra.mxu0 0
    %2212 = vmatprep.subr.bf16.mxu0 0
    %2213 = vmatpush2.bf16.msra.mxu0 0
    %2214 = vmatprep.subr.bf16.mxu0 0
    %2215 = vmatpush2.bf16.msra.mxu0 0
    %2216 = vmatprep.subr.bf16.mxu0 0
    %2217 = vmatpush2.bf16.msra.mxu0 0
    %2218 = vmatprep.mubr.bf16.mxu0 0
    %2219 = vmatmul.mubr.bf16.gmra.mxu0 %v2185
    %v2220 = vpop.f32.mrf.mxu0
    %v2221 = vadd.f32 0.0, %v2220
    %v2222 = vpop.f32.mrf.mxu0
    %v2223 = vadd.f32 0.0, %v2222
    %v2224 = vpop.f32.mrf.mxu0
    %v2225 = vpop.f32.mrf.mxu0
    %2226 = vdwg.mxu0
    %2227 = vmatprep.subr.bf16.mxu0 0
    %2228 = vmatpush1.bf16.msra.mxu0 %v701
    %2229 = vmatprep.subr.bf16.mxu0 0
    %2230 = vmatpush1.bf16.msra.mxu0 %v698
    %2231 = vmatprep.subr.bf16.mxu0 0
    %2232 = vmatpush1.bf16.msra.mxu0 %v695
    %2233 = vmatprep.subr.bf16.mxu0 0
    %2234 = vmatpush1.bf16.msra.mxu0 %v692
    %2235 = vmatprep.subr.bf16.mxu0 0
    %2236 = vmatpush1.bf16.msra.mxu0 %v689
    %2237 = vmatprep.subr.bf16.mxu0 0
    %2238 = vmatpush1.bf16.msra.mxu0 %v686
    %2239 = vmatprep.subr.bf16.mxu0 0
    %2240 = vmatpush1.bf16.msra.mxu0 %v683
    %2241 = vmatprep.subr.bf16.mxu0 0
    %2242 = vmatpush1.bf16.msra.mxu0 %v680
    %2243 = vmatprep.subr.bf16.mxu0 0
    %2244 = vmatpush2.bf16.msra.mxu0 0
    %2245 = vmatprep.subr.bf16.mxu0 0
    %2246 = vmatpush2.bf16.msra.mxu0 0
    %2247 = vmatprep.subr.bf16.mxu0 0
    %2248 = vmatpush2.bf16.msra.mxu0 0
    %2249 = vmatprep.subr.bf16.mxu0 0
    %2250 = vmatpush2.bf16.msra.mxu0 0
    %2251 = vmatprep.subr.bf16.mxu0 0
    %2252 = vmatpush2.bf16.msra.mxu0 0
    %2253 = vmatprep.subr.bf16.mxu0 0
    %2254 = vmatpush2.bf16.msra.mxu0 0
    %2255 = vmatprep.subr.bf16.mxu0 0
    %2256 = vmatpush2.bf16.msra.mxu0 0
    %2257 = vmatprep.subr.bf16.mxu0 0
    %2258 = vmatpush2.bf16.msra.mxu0 0
    %2259 = vmatprep.mubr.bf16.mxu0 0
    %2260 = vmatmul.mubr.bf16.gmra.mxu0 %v2185
    %v2261 = vpop.f32.mrf.mxu0
    %v2262 = vadd.f32 0.0, %v2261
    %v2263 = vpop.f32.mrf.mxu0
    %v2264 = vpop.f32.mrf.mxu0
    %v2265 = vpop.f32.mrf.mxu0
    %2266 = vdwg.mxu0
    %v2267 = vadd.f32 %v2182, %v2221
    %v2268 = vxor.u32 %v2267, 2147483648
    %v2269 = vmul.f32 %v2268, 1.442695
    %v2270 = vpow.pop %v2269
    %v2271 = vadd.f32 %v2270, 1.0
    %v2272 = vrcp.pop %v2271
    %v2273 = vmul.f32 1.0, %v2272
    %v2274 = vadd.f32 %v2183, %v2223
    %v2275 = vxor.u32 %v2274, 2147483648
    %v2276 = vmul.f32 %v2275, 1.442695
    %v2277 = vpow.pop %v2276
    %v2278 = vadd.f32 %v2277, 1.0
    %v2279 = vrcp.pop %v2278
    %v2280 = vmul.f32 1.0, %v2279
    %v2281 = vadd.f32 %v2262, %v353
    %v2282 = vmul.f32 %v2273, %v2281
    %v2283 = vadd.f32 %v2184, %v2282
    %v2284 = vtanh.pop %v2283
    %v2285 = vsub.f32 1.0, %v2280
    %v2286 = vmul.f32 %v2285, %v2284
    %v2287 = vmul.f32 %v2280, %v1931
    %v2288 = vadd.f32 %v2286, %v2287
    %s2289 = sadd.s32 %s829, 5
    %s2290 = smul.u32 %s2289, 128
    %s2291 = sadd.s32 %s2290, %s834
    %s2292 = sld [smem:[#allocation4 + %s2291]]
    %s2293 = sshra.s32 %s2292, 3
    %s2294 = sand.u32 %s2292, 7
    %s2295 = sshra.s32 %s2292, 3
    %s2296 = sand.u32 %s2292, 7
    %s2297 = smul.u32 %s2293, 3
    %s2298 = smul.u32 %s2297, 8
    %s2299 = sadd.s32 %s2298, %s2296
    %s2300 = scalar_lea.vmem [#allocation2], %s2299
    %v2301 = vld [vmem:[%s2300] ss:$8 sm:$0x7]
    %s2302 = sadd.s32 %s846, 5
    %s2303 = smul.u32 %s2302, 128
    %s2304 = sadd.s32 %s2303, %s851
    %s2305 = sld [smem:[#allocation4 + %s2304]]
    %s2306 = sshra.s32 %s2305, 3
    %s2307 = sand.u32 %s2305, 7
    %s2308 = sshra.s32 %s2305, 3
    %s2309 = sand.u32 %s2305, 7
    %s2310 = smul.u32 %s2306, 3
    %s2311 = smul.u32 %s2310, 8
    %s2312 = sadd.s32 %s2311, %s2309
    %s2313 = scalar_lea.vmem [#allocation2], %s2312
    %v2314 = vld [vmem:[%s2313] ss:$8 sm:$0x7]
    %s2315 = sadd.s32 %s863, 5
    %s2316 = smul.u32 %s2315, 128
    %s2317 = sadd.s32 %s2316, %s868
    %s2318 = sld [smem:[#allocation4 + %s2317]]
    %s2319 = sshra.s32 %s2318, 3
    %s2320 = sand.u32 %s2318, 7
    %s2321 = sshra.s32 %s2318, 3
    %s2322 = sand.u32 %s2318, 7
    %s2323 = smul.u32 %s2319, 3
    %s2324 = smul.u32 %s2323, 8
    %s2325 = sadd.s32 %s2324, %s2322
    %s2326 = scalar_lea.vmem [#allocation2], %s2325
    %v2327 = vld [vmem:[%s2326] ss:$8 sm:$0x7]
    %s2328 = sadd.s32 %s880, 5
    %s2329 = smul.u32 %s2328, 128
    %s2330 = sadd.s32 %s2329, %s885
    %s2331 = sld [smem:[#allocation4 + %s2330]]
    %s2332 = sshra.s32 %s2331, 3
    %s2333 = sand.u32 %s2331, 7
    %s2334 = sshra.s32 %s2331, 3
    %s2335 = sand.u32 %s2331, 7
    %s2336 = smul.u32 %s2332, 3
    %s2337 = smul.u32 %s2336, 8
    %s2338 = sadd.s32 %s2337, %s2335
    %s2339 = scalar_lea.vmem [#allocation2], %s2338
    %v2340 = vld [vmem:[%s2339] ss:$8 sm:$0x7]
    %s2341 = sadd.s32 %s897, 5
    %s2342 = smul.u32 %s2341, 128
    %s2343 = sadd.s32 %s2342, %s902
    %s2344 = sld [smem:[#allocation4 + %s2343]]
    %s2345 = sshra.s32 %s2344, 3
    %s2346 = sand.u32 %s2344, 7
    %s2347 = sshra.s32 %s2344, 3
    %s2348 = sand.u32 %s2344, 7
    %s2349 = smul.u32 %s2345, 3
    %s2350 = smul.u32 %s2349, 8
    %s2351 = sadd.s32 %s2350, %s2348
    %s2352 = scalar_lea.vmem [#allocation2], %s2351
    %v2353 = vld [vmem:[%s2352] ss:$8 sm:$0x7]
    %s2354 = sadd.s32 %s914, 5
    %s2355 = smul.u32 %s2354, 128
    %s2356 = sadd.s32 %s2355, %s919
    %s2357 = sld [smem:[#allocation4 + %s2356]]
    %s2358 = sshra.s32 %s2357, 3
    %s2359 = sand.u32 %s2357, 7
    %s2360 = sshra.s32 %s2357, 3
    %s2361 = sand.u32 %s2357, 7
    %s2362 = smul.u32 %s2358, 3
    %s2363 = smul.u32 %s2362, 8
    %s2364 = sadd.s32 %s2363, %s2361
    %s2365 = scalar_lea.vmem [#allocation2], %s2364
    %v2366 = vld [vmem:[%s2365] ss:$8 sm:$0x7]
    %s2367 = sadd.s32 %s931, 5
    %s2368 = smul.u32 %s2367, 128
    %s2369 = sadd.s32 %s2368, %s936
    %s2370 = sld [smem:[#allocation4 + %s2369]]
    %s2371 = sshra.s32 %s2370, 3
    %s2372 = sand.u32 %s2370, 7
    %s2373 = sshra.s32 %s2370, 3
    %s2374 = sand.u32 %s2370, 7
    %s2375 = smul.u32 %s2371, 3
    %s2376 = smul.u32 %s2375, 8
    %s2377 = sadd.s32 %s2376, %s2374
    %s2378 = scalar_lea.vmem [#allocation2], %s2377
    %v2379 = vld [vmem:[%s2378] ss:$8 sm:$0x7]
    %s2380 = sadd.s32 %s948, 5
    %s2381 = smul.u32 %s2380, 128
    %s2382 = sadd.s32 %s2381, %s953
    %s2383 = sld [smem:[#allocation4 + %s2382]]
    %s2384 = sshra.s32 %s2383, 3
    %s2385 = sand.u32 %s2383, 7
    %s2386 = sshra.s32 %s2383, 3
    %s2387 = sand.u32 %s2383, 7
    %s2388 = smul.u32 %s2384, 3
    %s2389 = smul.u32 %s2388, 8
    %s2390 = sadd.s32 %s2389, %s2387
    %s2391 = scalar_lea.vmem [#allocation2], %s2390
    %v2392 = vld [vmem:[%s2391] ss:$8 sm:$0x7]
    %v2394 = vlaneseq
    %v2395 = vshrl.u32 %v2394, 7
    %v2396 = vsub.s32 0, %v2395
    %v2397 = vrot.slane %v2301, %v2396
    %v2398 = vlaneseq
    %v2399 = vshrl.u32 %v2398, 7
    %v2400 = vsub.s32 1, %v2399
    %v2401 = vrot.slane %v2301, %v2400
    %v2402 = vlaneseq
    %v2403 = vshrl.u32 %v2402, 7
    %v2404 = vsub.s32 2, %v2403
    %v2405 = vrot.slane %v2301, %v2404
    %v2410 = vlaneseq
    %v2411 = vshrl.u32 %v2410, 7
    %v2412 = vsub.s32 0, %v2411
    %v2413 = vrot.slane %v2314, %v2412
    %v2414 = vlaneseq
    %v2415 = vshrl.u32 %v2414, 7
    %v2416 = vsub.s32 1, %v2415
    %v2417 = vrot.slane %v2314, %v2416
    %v2418 = vlaneseq
    %v2419 = vshrl.u32 %v2418, 7
    %v2420 = vsub.s32 2, %v2419
    %v2421 = vrot.slane %v2314, %v2420
    %v2426 = vlaneseq
    %v2427 = vshrl.u32 %v2426, 7
    %v2428 = vsub.s32 0, %v2427
    %v2429 = vrot.slane %v2327, %v2428
    %v2430 = vlaneseq
    %v2431 = vshrl.u32 %v2430, 7
    %v2432 = vsub.s32 1, %v2431
    %v2433 = vrot.slane %v2327, %v2432
    %v2434 = vlaneseq
    %v2435 = vshrl.u32 %v2434, 7
    %v2436 = vsub.s32 2, %v2435
    %v2437 = vrot.slane %v2327, %v2436
    %v2442 = vlaneseq
    %v2443 = vshrl.u32 %v2442, 7
    %v2444 = vsub.s32 0, %v2443
    %v2445 = vrot.slane %v2340, %v2444
    %v2446 = vlaneseq
    %v2447 = vshrl.u32 %v2446, 7
    %v2448 = vsub.s32 1, %v2447
    %v2449 = vrot.slane %v2340, %v2448
    %v2450 = vlaneseq
    %v2451 = vshrl.u32 %v2450, 7
    %v2452 = vsub.s32 2, %v2451
    %v2453 = vrot.slane %v2340, %v2452
    %v2458 = vlaneseq
    %v2459 = vshrl.u32 %v2458, 7
    %v2460 = vsub.s32 0, %v2459
    %v2461 = vrot.slane %v2353, %v2460
    %v2462 = vlaneseq
    %v2463 = vshrl.u32 %v2462, 7
    %v2464 = vsub.s32 1, %v2463
    %v2465 = vrot.slane %v2353, %v2464
    %v2466 = vlaneseq
    %v2467 = vshrl.u32 %v2466, 7
    %v2468 = vsub.s32 2, %v2467
    %v2469 = vrot.slane %v2353, %v2468
    %v2474 = vlaneseq
    %v2475 = vshrl.u32 %v2474, 7
    %v2476 = vsub.s32 0, %v2475
    %v2477 = vrot.slane %v2366, %v2476
    %v2478 = vlaneseq
    %v2479 = vshrl.u32 %v2478, 7
    %v2480 = vsub.s32 1, %v2479
    %v2481 = vrot.slane %v2366, %v2480
    %v2482 = vlaneseq
    %v2483 = vshrl.u32 %v2482, 7
    %v2484 = vsub.s32 2, %v2483
    %v2485 = vrot.slane %v2366, %v2484
    %v2490 = vlaneseq
    %v2491 = vshrl.u32 %v2490, 7
    %v2492 = vsub.s32 0, %v2491
    %v2493 = vrot.slane %v2379, %v2492
    %v2494 = vlaneseq
    %v2495 = vshrl.u32 %v2494, 7
    %v2496 = vsub.s32 1, %v2495
    %v2497 = vrot.slane %v2379, %v2496
    %v2498 = vlaneseq
    %v2499 = vshrl.u32 %v2498, 7
    %v2500 = vsub.s32 2, %v2499
    %v2501 = vrot.slane %v2379, %v2500
    %v2506 = vlaneseq
    %v2507 = vshrl.u32 %v2506, 7
    %v2508 = vsub.s32 0, %v2507
    %v2509 = vrot.slane %v2392, %v2508
    %v2510 = vlaneseq
    %v2511 = vshrl.u32 %v2510, 7
    %v2512 = vsub.s32 1, %v2511
    %v2513 = vrot.slane %v2392, %v2512
    %v2514 = vlaneseq
    %v2515 = vshrl.u32 %v2514, 7
    %v2516 = vsub.s32 2, %v2515
    %v2517 = vrot.slane %v2392, %v2516
    %v2521 = vsel %vm570, %v2397, %v2413
    %v2522 = vsel %vm570, %v2401, %v2417
    %v2523 = vsel %vm570, %v2405, %v2421
    %v2524 = vsel %vm574, %v2521, %v2429
    %v2525 = vsel %vm574, %v2522, %v2433
    %v2526 = vsel %vm574, %v2523, %v2437
    %v2527 = vsel %vm578, %v2524, %v2445
    %v2528 = vsel %vm578, %v2525, %v2449
    %v2529 = vsel %vm578, %v2526, %v2453
    %v2530 = vsel %vm582, %v2527, %v2461
    %v2531 = vsel %vm582, %v2528, %v2465
    %v2532 = vsel %vm582, %v2529, %v2469
    %v2533 = vsel %vm586, %v2530, %v2477
    %v2534 = vsel %vm586, %v2531, %v2481
    %v2535 = vsel %vm586, %v2532, %v2485
    %v2536 = vsel %vm590, %v2533, %v2493
    %v2537 = vsel %vm590, %v2534, %v2497
    %v2538 = vsel %vm590, %v2535, %v2501
    %v2539 = vsel %vm594, %v2536, %v2509
    %v2540 = vsel %vm594, %v2537, %v2513
    %v2541 = vsel %vm594, %v2538, %v2517
    %v2542 = vpack.c.bf16 %v2288, %v2288
    %2543 = vmatprep.subr.bf16.mxu0 %v700
    %2544 = vmatpush1.bf16.msra.mxu0 %v699
    %2545 = vmatprep.subr.bf16.mxu0 %v697
    %2546 = vmatpush1.bf16.msra.mxu0 %v696
    %2547 = vmatprep.subr.bf16.mxu0 %v694
    %2548 = vmatpush1.bf16.msra.mxu0 %v693
    %2549 = vmatprep.subr.bf16.mxu0 %v691
    %2550 = vmatpush1.bf16.msra.mxu0 %v690
    %2551 = vmatprep.subr.bf16.mxu0 %v688
    %2552 = vmatpush1.bf16.msra.mxu0 %v687
    %2553 = vmatprep.subr.bf16.mxu0 %v685
    %2554 = vmatpush1.bf16.msra.mxu0 %v684
    %2555 = vmatprep.subr.bf16.mxu0 %v682
    %2556 = vmatpush1.bf16.msra.mxu0 %v681
    %2557 = vmatprep.subr.bf16.mxu0 %v679
    %2558 = vmatpush1.bf16.msra.mxu0 %v678
    %2559 = vmatprep.subr.bf16.mxu0 0
    %2560 = vmatpush2.bf16.msra.mxu0 0
    %2561 = vmatprep.subr.bf16.mxu0 0
    %2562 = vmatpush2.bf16.msra.mxu0 0
    %2563 = vmatprep.subr.bf16.mxu0 0
    %2564 = vmatpush2.bf16.msra.mxu0 0
    %2565 = vmatprep.subr.bf16.mxu0 0
    %2566 = vmatpush2.bf16.msra.mxu0 0
    %2567 = vmatprep.subr.bf16.mxu0 0
    %2568 = vmatpush2.bf16.msra.mxu0 0
    %2569 = vmatprep.subr.bf16.mxu0 0
    %2570 = vmatpush2.bf16.msra.mxu0 0
    %2571 = vmatprep.subr.bf16.mxu0 0
    %2572 = vmatpush2.bf16.msra.mxu0 0
    %2573 = vmatprep.subr.bf16.mxu0 0
    %2574 = vmatpush2.bf16.msra.mxu0 0
    %2575 = vmatprep.mubr.bf16.mxu0 0
    %2576 = vmatmul.mubr.bf16.gmra.mxu0 %v2542
    %v2577 = vpop.f32.mrf.mxu0
    %v2578 = vadd.f32 0.0, %v2577
    %v2579 = vpop.f32.mrf.mxu0
    %v2580 = vadd.f32 0.0, %v2579
    %v2581 = vpop.f32.mrf.mxu0
    %v2582 = vpop.f32.mrf.mxu0
    %2583 = vdwg.mxu0
    %2584 = vmatprep.subr.bf16.mxu0 0
    %2585 = vmatpush1.bf16.msra.mxu0 %v701
    %2586 = vmatprep.subr.bf16.mxu0 0
    %2587 = vmatpush1.bf16.msra.mxu0 %v698
    %2588 = vmatprep.subr.bf16.mxu0 0
    %2589 = vmatpush1.bf16.msra.mxu0 %v695
    %2590 = vmatprep.subr.bf16.mxu0 0
    %2591 = vmatpush1.bf16.msra.mxu0 %v692
    %2592 = vmatprep.subr.bf16.mxu0 0
    %2593 = vmatpush1.bf16.msra.mxu0 %v689
    %2594 = vmatprep.subr.bf16.mxu0 0
    %2595 = vmatpush1.bf16.msra.mxu0 %v686
    %2596 = vmatprep.subr.bf16.mxu0 0
    %2597 = vmatpush1.bf16.msra.mxu0 %v683
    %2598 = vmatprep.subr.bf16.mxu0 0
    %2599 = vmatpush1.bf16.msra.mxu0 %v680
    %2600 = vmatprep.subr.bf16.mxu0 0
    %2601 = vmatpush2.bf16.msra.mxu0 0
    %2602 = vmatprep.subr.bf16.mxu0 0
    %2603 = vmatpush2.bf16.msra.mxu0 0
    %2604 = vmatprep.subr.bf16.mxu0 0
    %2605 = vmatpush2.bf16.msra.mxu0 0
    %2606 = vmatprep.subr.bf16.mxu0 0
    %2607 = vmatpush2.bf16.msra.mxu0 0
    %2608 = vmatprep.subr.bf16.mxu0 0
    %2609 = vmatpush2.bf16.msra.mxu0 0
    %2610 = vmatprep.subr.bf16.mxu0 0
    %2611 = vmatpush2.bf16.msra.mxu0 0
    %2612 = vmatprep.subr.bf16.mxu0 0
    %2613 = vmatpush2.bf16.msra.mxu0 0
    %2614 = vmatprep.subr.bf16.mxu0 0
    %2615 = vmatpush2.bf16.msra.mxu0 0
    %2616 = vmatprep.mubr.bf16.mxu0 0
    %2617 = vmatmul.mubr.bf16.gmra.mxu0 %v2542
    %v2618 = vpop.f32.mrf.mxu0
    %v2619 = vadd.f32 0.0, %v2618
    %v2620 = vpop.f32.mrf.mxu0
    %v2621 = vpop.f32.mrf.mxu0
    %v2622 = vpop.f32.mrf.mxu0
    %2623 = vdwg.mxu0
    %v2624 = vadd.f32 %v2539, %v2578
    %v2625 = vxor.u32 %v2624, 2147483648
    %v2626 = vmul.f32 %v2625, 1.442695
    %v2627 = vpow.pop %v2626
    %v2628 = vadd.f32 %v2627, 1.0
    %v2629 = vrcp.pop %v2628
    %v2630 = vmul.f32 1.0, %v2629
    %v2631 = vadd.f32 %v2540, %v2580
    %v2632 = vxor.u32 %v2631, 2147483648
    %v2633 = vmul.f32 %v2632, 1.442695
    %v2634 = vpow.pop %v2633
    %v2635 = vadd.f32 %v2634, 1.0
    %v2636 = vrcp.pop %v2635
    %v2637 = vmul.f32 1.0, %v2636
    %v2638 = vadd.f32 %v2619, %v353
    %v2639 = vmul.f32 %v2630, %v2638
    %v2640 = vadd.f32 %v2541, %v2639
    %v2641 = vtanh.pop %v2640
    %v2642 = vsub.f32 1.0, %v2637
    %v2643 = vmul.f32 %v2642, %v2641
    %v2644 = vmul.f32 %v2637, %v2288
    %v2645 = vadd.f32 %v2643, %v2644
    %s2646 = sadd.s32 %s829, 6
    %s2647 = smul.u32 %s2646, 128
    %s2648 = sadd.s32 %s2647, %s834
    %s2649 = sld [smem:[#allocation4 + %s2648]]
    %s2650 = sshra.s32 %s2649, 3
    %s2651 = sand.u32 %s2649, 7
    %s2652 = sshra.s32 %s2649, 3
    %s2653 = sand.u32 %s2649, 7
    %s2654 = smul.u32 %s2650, 3
    %s2655 = smul.u32 %s2654, 8
    %s2656 = sadd.s32 %s2655, %s2653
    %s2657 = scalar_lea.vmem [#allocation2], %s2656
    %v2658 = vld [vmem:[%s2657] ss:$8 sm:$0x7]
    %s2659 = sadd.s32 %s846, 6
    %s2660 = smul.u32 %s2659, 128
    %s2661 = sadd.s32 %s2660, %s851
    %s2662 = sld [smem:[#allocation4 + %s2661]]
    %s2663 = sshra.s32 %s2662, 3
    %s2664 = sand.u32 %s2662, 7
    %s2665 = sshra.s32 %s2662, 3
    %s2666 = sand.u32 %s2662, 7
    %s2667 = smul.u32 %s2663, 3
    %s2668 = smul.u32 %s2667, 8
    %s2669 = sadd.s32 %s2668, %s2666
    %s2670 = scalar_lea.vmem [#allocation2], %s2669
    %v2671 = vld [vmem:[%s2670] ss:$8 sm:$0x7]
    %s2672 = sadd.s32 %s863, 6
    %s2673 = smul.u32 %s2672, 128
    %s2674 = sadd.s32 %s2673, %s868
    %s2675 = sld [smem:[#allocation4 + %s2674]]
    %s2676 = sshra.s32 %s2675, 3
    %s2677 = sand.u32 %s2675, 7
    %s2678 = sshra.s32 %s2675, 3
    %s2679 = sand.u32 %s2675, 7
    %s2680 = smul.u32 %s2676, 3
    %s2681 = smul.u32 %s2680, 8
    %s2682 = sadd.s32 %s2681, %s2679
    %s2683 = scalar_lea.vmem [#allocation2], %s2682
    %v2684 = vld [vmem:[%s2683] ss:$8 sm:$0x7]
    %s2685 = sadd.s32 %s880, 6
    %s2686 = smul.u32 %s2685, 128
    %s2687 = sadd.s32 %s2686, %s885
    %s2688 = sld [smem:[#allocation4 + %s2687]]
    %s2689 = sshra.s32 %s2688, 3
    %s2690 = sand.u32 %s2688, 7
    %s2691 = sshra.s32 %s2688, 3
    %s2692 = sand.u32 %s2688, 7
    %s2693 = smul.u32 %s2689, 3
    %s2694 = smul.u32 %s2693, 8
    %s2695 = sadd.s32 %s2694, %s2692
    %s2696 = scalar_lea.vmem [#allocation2], %s2695
    %v2697 = vld [vmem:[%s2696] ss:$8 sm:$0x7]
    %s2698 = sadd.s32 %s897, 6
    %s2699 = smul.u32 %s2698, 128
    %s2700 = sadd.s32 %s2699, %s902
    %s2701 = sld [smem:[#allocation4 + %s2700]]
    %s2702 = sshra.s32 %s2701, 3
    %s2703 = sand.u32 %s2701, 7
    %s2704 = sshra.s32 %s2701, 3
    %s2705 = sand.u32 %s2701, 7
    %s2706 = smul.u32 %s2702, 3
    %s2707 = smul.u32 %s2706, 8
    %s2708 = sadd.s32 %s2707, %s2705
    %s2709 = scalar_lea.vmem [#allocation2], %s2708
    %v2710 = vld [vmem:[%s2709] ss:$8 sm:$0x7]
    %s2711 = sadd.s32 %s914, 6
    %s2712 = smul.u32 %s2711, 128
    %s2713 = sadd.s32 %s2712, %s919
    %s2714 = sld [smem:[#allocation4 + %s2713]]
    %s2715 = sshra.s32 %s2714, 3
    %s2716 = sand.u32 %s2714, 7
    %s2717 = sshra.s32 %s2714, 3
    %s2718 = sand.u32 %s2714, 7
    %s2719 = smul.u32 %s2715, 3
    %s2720 = smul.u32 %s2719, 8
    %s2721 = sadd.s32 %s2720, %s2718
    %s2722 = scalar_lea.vmem [#allocation2], %s2721
    %v2723 = vld [vmem:[%s2722] ss:$8 sm:$0x7]
    %s2724 = sadd.s32 %s931, 6
    %s2725 = smul.u32 %s2724, 128
    %s2726 = sadd.s32 %s2725, %s936
    %s2727 = sld [smem:[#allocation4 + %s2726]]
    %s2728 = sshra.s32 %s2727, 3
    %s2729 = sand.u32 %s2727, 7
    %s2730 = sshra.s32 %s2727, 3
    %s2731 = sand.u32 %s2727, 7
    %s2732 = smul.u32 %s2728, 3
    %s2733 = smul.u32 %s2732, 8
    %s2734 = sadd.s32 %s2733, %s2731
    %s2735 = scalar_lea.vmem [#allocation2], %s2734
    %v2736 = vld [vmem:[%s2735] ss:$8 sm:$0x7]
    %s2737 = sadd.s32 %s948, 6
    %s2738 = smul.u32 %s2737, 128
    %s2739 = sadd.s32 %s2738, %s953
    %s2740 = sld [smem:[#allocation4 + %s2739]]
    %s2741 = sshra.s32 %s2740, 3
    %s2742 = sand.u32 %s2740, 7
    %s2743 = sshra.s32 %s2740, 3
    %s2744 = sand.u32 %s2740, 7
    %s2745 = smul.u32 %s2741, 3
    %s2746 = smul.u32 %s2745, 8
    %s2747 = sadd.s32 %s2746, %s2744
    %s2748 = scalar_lea.vmem [#allocation2], %s2747
    %v2749 = vld [vmem:[%s2748] ss:$8 sm:$0x7]
    %v2751 = vlaneseq
    %v2752 = vshrl.u32 %v2751, 7
    %v2753 = vsub.s32 0, %v2752
    %v2754 = vrot.slane %v2658, %v2753
    %v2755 = vlaneseq
    %v2756 = vshrl.u32 %v2755, 7
    %v2757 = vsub.s32 1, %v2756
    %v2758 = vrot.slane %v2658, %v2757
    %v2759 = vlaneseq
    %v2760 = vshrl.u32 %v2759, 7
    %v2761 = vsub.s32 2, %v2760
    %v2762 = vrot.slane %v2658, %v2761
    %v2767 = vlaneseq
    %v2768 = vshrl.u32 %v2767, 7
    %v2769 = vsub.s32 0, %v2768
    %v2770 = vrot.slane %v2671, %v2769
    %v2771 = vlaneseq
    %v2772 = vshrl.u32 %v2771, 7
    %v2773 = vsub.s32 1, %v2772
    %v2774 = vrot.slane %v2671, %v2773
    %v2775 = vlaneseq
    %v2776 = vshrl.u32 %v2775, 7
    %v2777 = vsub.s32 2, %v2776
    %v2778 = vrot.slane %v2671, %v2777
    %v2783 = vlaneseq
    %v2784 = vshrl.u32 %v2783, 7
    %v2785 = vsub.s32 0, %v2784
    %v2786 = vrot.slane %v2684, %v2785
    %v2787 = vlaneseq
    %v2788 = vshrl.u32 %v2787, 7
    %v2789 = vsub.s32 1, %v2788
    %v2790 = vrot.slane %v2684, %v2789
    %v2791 = vlaneseq
    %v2792 = vshrl.u32 %v2791, 7
    %v2793 = vsub.s32 2, %v2792
    %v2794 = vrot.slane %v2684, %v2793
    %v2799 = vlaneseq
    %v2800 = vshrl.u32 %v2799, 7
    %v2801 = vsub.s32 0, %v2800
    %v2802 = vrot.slane %v2697, %v2801
    %v2803 = vlaneseq
    %v2804 = vshrl.u32 %v2803, 7
    %v2805 = vsub.s32 1, %v2804
    %v2806 = vrot.slane %v2697, %v2805
    %v2807 = vlaneseq
    %v2808 = vshrl.u32 %v2807, 7
    %v2809 = vsub.s32 2, %v2808
    %v2810 = vrot.slane %v2697, %v2809
    %v2815 = vlaneseq
    %v2816 = vshrl.u32 %v2815, 7
    %v2817 = vsub.s32 0, %v2816
    %v2818 = vrot.slane %v2710, %v2817
    %v2819 = vlaneseq
    %v2820 = vshrl.u32 %v2819, 7
    %v2821 = vsub.s32 1, %v2820
    %v2822 = vrot.slane %v2710, %v2821
    %v2823 = vlaneseq
    %v2824 = vshrl.u32 %v2823, 7
    %v2825 = vsub.s32 2, %v2824
    %v2826 = vrot.slane %v2710, %v2825
    %v2831 = vlaneseq
    %v2832 = vshrl.u32 %v2831, 7
    %v2833 = vsub.s32 0, %v2832
    %v2834 = vrot.slane %v2723, %v2833
    %v2835 = vlaneseq
    %v2836 = vshrl.u32 %v2835, 7
    %v2837 = vsub.s32 1, %v2836
    %v2838 = vrot.slane %v2723, %v2837
    %v2839 = vlaneseq
    %v2840 = vshrl.u32 %v2839, 7
    %v2841 = vsub.s32 2, %v2840
    %v2842 = vrot.slane %v2723, %v2841
    %v2847 = vlaneseq
    %v2848 = vshrl.u32 %v2847, 7
    %v2849 = vsub.s32 0, %v2848
    %v2850 = vrot.slane %v2736, %v2849
    %v2851 = vlaneseq
    %v2852 = vshrl.u32 %v2851, 7
    %v2853 = vsub.s32 1, %v2852
    %v2854 = vrot.slane %v2736, %v2853
    %v2855 = vlaneseq
    %v2856 = vshrl.u32 %v2855, 7
    %v2857 = vsub.s32 2, %v2856
    %v2858 = vrot.slane %v2736, %v2857
    %v2863 = vlaneseq
    %v2864 = vshrl.u32 %v2863, 7
    %v2865 = vsub.s32 0, %v2864
    %v2866 = vrot.slane %v2749, %v2865
    %v2867 = vlaneseq
    %v2868 = vshrl.u32 %v2867, 7
    %v2869 = vsub.s32 1, %v2868
    %v2870 = vrot.slane %v2749, %v2869
    %v2871 = vlaneseq
    %v2872 = vshrl.u32 %v2871, 7
    %v2873 = vsub.s32 2, %v2872
    %v2874 = vrot.slane %v2749, %v2873
    %v2878 = vsel %vm570, %v2754, %v2770
    %v2879 = vsel %vm570, %v2758, %v2774
    %v2880 = vsel %vm570, %v2762, %v2778
    %v2881 = vsel %vm574, %v2878, %v2786
    %v2882 = vsel %vm574, %v2879, %v2790
    %v2883 = vsel %vm574, %v2880, %v2794
    %v2884 = vsel %vm578, %v2881, %v2802
    %v2885 = vsel %vm578, %v2882, %v2806
    %v2886 = vsel %vm578, %v2883, %v2810
    %v2887 = vsel %vm582, %v2884, %v2818
    %v2888 = vsel %vm582, %v2885, %v2822
    %v2889 = vsel %vm582, %v2886, %v2826
    %v2890 = vsel %vm586, %v2887, %v2834
    %v2891 = vsel %vm586, %v2888, %v2838
    %v2892 = vsel %vm586, %v2889, %v2842
    %v2893 = vsel %vm590, %v2890, %v2850
    %v2894 = vsel %vm590, %v2891, %v2854
    %v2895 = vsel %vm590, %v2892, %v2858
    %v2896 = vsel %vm594, %v2893, %v2866
    %v2897 = vsel %vm594, %v2894, %v2870
    %v2898 = vsel %vm594, %v2895, %v2874
    %v2899 = vpack.c.bf16 %v2645, %v2645
    %2900 = vmatprep.subr.bf16.mxu0 %v700
    %2901 = vmatpush1.bf16.msra.mxu0 %v699
    %2902 = vmatprep.subr.bf16.mxu0 %v697
    %2903 = vmatpush1.bf16.msra.mxu0 %v696
    %2904 = vmatprep.subr.bf16.mxu0 %v694
    %2905 = vmatpush1.bf16.msra.mxu0 %v693
    %2906 = vmatprep.subr.bf16.mxu0 %v691
    %2907 = vmatpush1.bf16.msra.mxu0 %v690
    %2908 = vmatprep.subr.bf16.mxu0 %v688
    %2909 = vmatpush1.bf16.msra.mxu0 %v687
    %2910 = vmatprep.subr.bf16.mxu0 %v685
    %2911 = vmatpush1.bf16.msra.mxu0 %v684
    %2912 = vmatprep.subr.bf16.mxu0 %v682
    %2913 = vmatpush1.bf16.msra.mxu0 %v681
    %2914 = vmatprep.subr.bf16.mxu0 %v679
    %2915 = vmatpush1.bf16.msra.mxu0 %v678
    %2916 = vmatprep.subr.bf16.mxu0 0
    %2917 = vmatpush2.bf16.msra.mxu0 0
    %2918 = vmatprep.subr.bf16.mxu0 0
    %2919 = vmatpush2.bf16.msra.mxu0 0
    %2920 = vmatprep.subr.bf16.mxu0 0
    %2921 = vmatpush2.bf16.msra.mxu0 0
    %2922 = vmatprep.subr.bf16.mxu0 0
    %2923 = vmatpush2.bf16.msra.mxu0 0
    %2924 = vmatprep.subr.bf16.mxu0 0
    %2925 = vmatpush2.bf16.msra.mxu0 0
    %2926 = vmatprep.subr.bf16.mxu0 0
    %2927 = vmatpush2.bf16.msra.mxu0 0
    %2928 = vmatprep.subr.bf16.mxu0 0
    %2929 = vmatpush2.bf16.msra.mxu0 0
    %2930 = vmatprep.subr.bf16.mxu0 0
    %2931 = vmatpush2.bf16.msra.mxu0 0
    %2932 = vmatprep.mubr.bf16.mxu0 0
    %2933 = vmatmul.mubr.bf16.gmra.mxu0 %v2899
    %v2934 = vpop.f32.mrf.mxu0
    %v2935 = vadd.f32 0.0, %v2934
    %v2936 = vpop.f32.mrf.mxu0
    %v2937 = vadd.f32 0.0, %v2936
    %v2938 = vpop.f32.mrf.mxu0
    %v2939 = vpop.f32.mrf.mxu0
    %2940 = vdwg.mxu0
    %2941 = vmatprep.subr.bf16.mxu0 0
    %2942 = vmatpush1.bf16.msra.mxu0 %v701
    %2943 = vmatprep.subr.bf16.mxu0 0
    %2944 = vmatpush1.bf16.msra.mxu0 %v698
    %2945 = vmatprep.subr.bf16.mxu0 0
    %2946 = vmatpush1.bf16.msra.mxu0 %v695
    %2947 = vmatprep.subr.bf16.mxu0 0
    %2948 = vmatpush1.bf16.msra.mxu0 %v692
    %2949 = vmatprep.subr.bf16.mxu0 0
    %2950 = vmatpush1.bf16.msra.mxu0 %v689
    %2951 = vmatprep.subr.bf16.mxu0 0
    %2952 = vmatpush1.bf16.msra.mxu0 %v686
    %2953 = vmatprep.subr.bf16.mxu0 0
    %2954 = vmatpush1.bf16.msra.mxu0 %v683
    %2955 = vmatprep.subr.bf16.mxu0 0
    %2956 = vmatpush1.bf16.msra.mxu0 %v680
    %2957 = vmatprep.subr.bf16.mxu0 0
    %2958 = vmatpush2.bf16.msra.mxu0 0
    %2959 = vmatprep.subr.bf16.mxu0 0
    %2960 = vmatpush2.bf16.msra.mxu0 0
    %2961 = vmatprep.subr.bf16.mxu0 0
    %2962 = vmatpush2.bf16.msra.mxu0 0
    %2963 = vmatprep.subr.bf16.mxu0 0
    %2964 = vmatpush2.bf16.msra.mxu0 0
    %2965 = vmatprep.subr.bf16.mxu0 0
    %2966 = vmatpush2.bf16.msra.mxu0 0
    %2967 = vmatprep.subr.bf16.mxu0 0
    %2968 = vmatpush2.bf16.msra.mxu0 0
    %2969 = vmatprep.subr.bf16.mxu0 0
    %2970 = vmatpush2.bf16.msra.mxu0 0
    %2971 = vmatprep.subr.bf16.mxu0 0
    %2972 = vmatpush2.bf16.msra.mxu0 0
    %2973 = vmatprep.mubr.bf16.mxu0 0
    %2974 = vmatmul.mubr.bf16.gmra.mxu0 %v2899
    %v2975 = vpop.f32.mrf.mxu0
    %v2976 = vadd.f32 0.0, %v2975
    %v2977 = vpop.f32.mrf.mxu0
    %v2978 = vpop.f32.mrf.mxu0
    %v2979 = vpop.f32.mrf.mxu0
    %2980 = vdwg.mxu0
    %v2981 = vadd.f32 %v2896, %v2935
    %v2982 = vxor.u32 %v2981, 2147483648
    %v2983 = vmul.f32 %v2982, 1.442695
    %v2984 = vpow.pop %v2983
    %v2985 = vadd.f32 %v2984, 1.0
    %v2986 = vrcp.pop %v2985
    %v2987 = vmul.f32 1.0, %v2986
    %v2988 = vadd.f32 %v2897, %v2937
    %v2989 = vxor.u32 %v2988, 2147483648
    %v2990 = vmul.f32 %v2989, 1.442695
    %v2991 = vpow.pop %v2990
    %v2992 = vadd.f32 %v2991, 1.0
    %v2993 = vrcp.pop %v2992
    %v2994 = vmul.f32 1.0, %v2993
    %v2995 = vadd.f32 %v2976, %v353
    %v2996 = vmul.f32 %v2987, %v2995
    %v2997 = vadd.f32 %v2898, %v2996
    %v2998 = vtanh.pop %v2997
    %v2999 = vsub.f32 1.0, %v2994
    %v3000 = vmul.f32 %v2999, %v2998
    %v3001 = vmul.f32 %v2994, %v2645
    %v3002 = vadd.f32 %v3000, %v3001
    %s3003 = sadd.s32 %s829, 7
    %s3004 = smul.u32 %s3003, 128
    %s3005 = sadd.s32 %s3004, %s834
    %s3006 = sld [smem:[#allocation4 + %s3005]]
    %s3007 = sshra.s32 %s3006, 3
    %s3008 = sand.u32 %s3006, 7
    %s3009 = sshra.s32 %s3006, 3
    %s3010 = sand.u32 %s3006, 7
    %s3011 = smul.u32 %s3007, 3
    %s3012 = smul.u32 %s3011, 8
    %s3013 = sadd.s32 %s3012, %s3010
    %s3014 = scalar_lea.vmem [#allocation2], %s3013
    %v3015 = vld [vmem:[%s3014] ss:$8 sm:$0x7]
    %s3016 = sadd.s32 %s846, 7
    %s3017 = smul.u32 %s3016, 128
    %s3018 = sadd.s32 %s3017, %s851
    %s3019 = sld [smem:[#allocation4 + %s3018]]
    %s3020 = sshra.s32 %s3019, 3
    %s3021 = sand.u32 %s3019, 7
    %s3022 = sshra.s32 %s3019, 3
    %s3023 = sand.u32 %s3019, 7
    %s3024 = smul.u32 %s3020, 3
    %s3025 = smul.u32 %s3024, 8
    %s3026 = sadd.s32 %s3025, %s3023
    %s3027 = scalar_lea.vmem [#allocation2], %s3026
    %v3028 = vld [vmem:[%s3027] ss:$8 sm:$0x7]
    %s3029 = sadd.s32 %s863, 7
    %s3030 = smul.u32 %s3029, 128
    %s3031 = sadd.s32 %s3030, %s868
    %s3032 = sld [smem:[#allocation4 + %s3031]]
    %s3033 = sshra.s32 %s3032, 3
    %s3034 = sand.u32 %s3032, 7
    %s3035 = sshra.s32 %s3032, 3
    %s3036 = sand.u32 %s3032, 7
    %s3037 = smul.u32 %s3033, 3
    %s3038 = smul.u32 %s3037, 8
    %s3039 = sadd.s32 %s3038, %s3036
    %s3040 = scalar_lea.vmem [#allocation2], %s3039
    %v3041 = vld [vmem:[%s3040] ss:$8 sm:$0x7]
    %s3042 = sadd.s32 %s880, 7
    %s3043 = smul.u32 %s3042, 128
    %s3044 = sadd.s32 %s3043, %s885
    %s3045 = sld [smem:[#allocation4 + %s3044]]
    %s3046 = sshra.s32 %s3045, 3
    %s3047 = sand.u32 %s3045, 7
    %s3048 = sshra.s32 %s3045, 3
    %s3049 = sand.u32 %s3045, 7
    %s3050 = smul.u32 %s3046, 3
    %s3051 = smul.u32 %s3050, 8
    %s3052 = sadd.s32 %s3051, %s3049
    %s3053 = scalar_lea.vmem [#allocation2], %s3052
    %v3054 = vld [vmem:[%s3053] ss:$8 sm:$0x7]
    %s3055 = sadd.s32 %s897, 7
    %s3056 = smul.u32 %s3055, 128
    %s3057 = sadd.s32 %s3056, %s902
    %s3058 = sld [smem:[#allocation4 + %s3057]]
    %s3059 = sshra.s32 %s3058, 3
    %s3060 = sand.u32 %s3058, 7
    %s3061 = sshra.s32 %s3058, 3
    %s3062 = sand.u32 %s3058, 7
    %s3063 = smul.u32 %s3059, 3
    %s3064 = smul.u32 %s3063, 8
    %s3065 = sadd.s32 %s3064, %s3062
    %s3066 = scalar_lea.vmem [#allocation2], %s3065
    %v3067 = vld [vmem:[%s3066] ss:$8 sm:$0x7]
    %s3068 = sadd.s32 %s914, 7
    %s3069 = smul.u32 %s3068, 128
    %s3070 = sadd.s32 %s3069, %s919
    %s3071 = sld [smem:[#allocation4 + %s3070]]
    %s3072 = sshra.s32 %s3071, 3
    %s3073 = sand.u32 %s3071, 7
    %s3074 = sshra.s32 %s3071, 3
    %s3075 = sand.u32 %s3071, 7
    %s3076 = smul.u32 %s3072, 3
    %s3077 = smul.u32 %s3076, 8
    %s3078 = sadd.s32 %s3077, %s3075
    %s3079 = scalar_lea.vmem [#allocation2], %s3078
    %v3080 = vld [vmem:[%s3079] ss:$8 sm:$0x7]
    %s3081 = sadd.s32 %s931, 7
    %s3082 = smul.u32 %s3081, 128
    %s3083 = sadd.s32 %s3082, %s936
    %s3084 = sld [smem:[#allocation4 + %s3083]]
    %s3085 = sshra.s32 %s3084, 3
    %s3086 = sand.u32 %s3084, 7
    %s3087 = sshra.s32 %s3084, 3
    %s3088 = sand.u32 %s3084, 7
    %s3089 = smul.u32 %s3085, 3
    %s3090 = smul.u32 %s3089, 8
    %s3091 = sadd.s32 %s3090, %s3088
    %s3092 = scalar_lea.vmem [#allocation2], %s3091
    %v3093 = vld [vmem:[%s3092] ss:$8 sm:$0x7]
    %s3094 = sadd.s32 %s948, 7
    %s3095 = smul.u32 %s3094, 128
    %s3096 = sadd.s32 %s3095, %s953
    %s3097 = sld [smem:[#allocation4 + %s3096]]
    %s3098 = sshra.s32 %s3097, 3
    %s3099 = sand.u32 %s3097, 7
    %s3100 = sshra.s32 %s3097, 3
    %s3101 = sand.u32 %s3097, 7
    %s3102 = smul.u32 %s3098, 3
    %s3103 = smul.u32 %s3102, 8
    %s3104 = sadd.s32 %s3103, %s3101
    %s3105 = scalar_lea.vmem [#allocation2], %s3104
    %v3106 = vld [vmem:[%s3105] ss:$8 sm:$0x7]
    %v3108 = vlaneseq
    %v3109 = vshrl.u32 %v3108, 7
    %v3110 = vsub.s32 0, %v3109
    %v3111 = vrot.slane %v3015, %v3110
    %v3112 = vlaneseq
    %v3113 = vshrl.u32 %v3112, 7
    %v3114 = vsub.s32 1, %v3113
    %v3115 = vrot.slane %v3015, %v3114
    %v3116 = vlaneseq
    %v3117 = vshrl.u32 %v3116, 7
    %v3118 = vsub.s32 2, %v3117
    %v3119 = vrot.slane %v3015, %v3118
    %v3124 = vlaneseq
    %v3125 = vshrl.u32 %v3124, 7
    %v3126 = vsub.s32 0, %v3125
    %v3127 = vrot.slane %v3028, %v3126
    %v3128 = vlaneseq
    %v3129 = vshrl.u32 %v3128, 7
    %v3130 = vsub.s32 1, %v3129
    %v3131 = vrot.slane %v3028, %v3130
    %v3132 = vlaneseq
    %v3133 = vshrl.u32 %v3132, 7
    %v3134 = vsub.s32 2, %v3133
    %v3135 = vrot.slane %v3028, %v3134
    %v3140 = vlaneseq
    %v3141 = vshrl.u32 %v3140, 7
    %v3142 = vsub.s32 0, %v3141
    %v3143 = vrot.slane %v3041, %v3142
    %v3144 = vlaneseq
    %v3145 = vshrl.u32 %v3144, 7
    %v3146 = vsub.s32 1, %v3145
    %v3147 = vrot.slane %v3041, %v3146
    %v3148 = vlaneseq
    %v3149 = vshrl.u32 %v3148, 7
    %v3150 = vsub.s32 2, %v3149
    %v3151 = vrot.slane %v3041, %v3150
    %v3156 = vlaneseq
    %v3157 = vshrl.u32 %v3156, 7
    %v3158 = vsub.s32 0, %v3157
    %v3159 = vrot.slane %v3054, %v3158
    %v3160 = vlaneseq
    %v3161 = vshrl.u32 %v3160, 7
    %v3162 = vsub.s32 1, %v3161
    %v3163 = vrot.slane %v3054, %v3162
    %v3164 = vlaneseq
    %v3165 = vshrl.u32 %v3164, 7
    %v3166 = vsub.s32 2, %v3165
    %v3167 = vrot.slane %v3054, %v3166
    %v3172 = vlaneseq
    %v3173 = vshrl.u32 %v3172, 7
    %v3174 = vsub.s32 0, %v3173
    %v3175 = vrot.slane %v3067, %v3174
    %v3176 = vlaneseq
    %v3177 = vshrl.u32 %v3176, 7
    %v3178 = vsub.s32 1, %v3177
    %v3179 = vrot.slane %v3067, %v3178
    %v3180 = vlaneseq
    %v3181 = vshrl.u32 %v3180, 7
    %v3182 = vsub.s32 2, %v3181
    %v3183 = vrot.slane %v3067, %v3182
    %v3188 = vlaneseq
    %v3189 = vshrl.u32 %v3188, 7
    %v3190 = vsub.s32 0, %v3189
    %v3191 = vrot.slane %v3080, %v3190
    %v3192 = vlaneseq
    %v3193 = vshrl.u32 %v3192, 7
    %v3194 = vsub.s32 1, %v3193
    %v3195 = vrot.slane %v3080, %v3194
    %v3196 = vlaneseq
    %v3197 = vshrl.u32 %v3196, 7
    %v3198 = vsub.s32 2, %v3197
    %v3199 = vrot.slane %v3080, %v3198
    %v3204 = vlaneseq
    %v3205 = vshrl.u32 %v3204, 7
    %v3206 = vsub.s32 0, %v3205
    %v3207 = vrot.slane %v3093, %v3206
    %v3208 = vlaneseq
    %v3209 = vshrl.u32 %v3208, 7
    %v3210 = vsub.s32 1, %v3209
    %v3211 = vrot.slane %v3093, %v3210
    %v3212 = vlaneseq
    %v3213 = vshrl.u32 %v3212, 7
    %v3214 = vsub.s32 2, %v3213
    %v3215 = vrot.slane %v3093, %v3214
    %v3220 = vlaneseq
    %v3221 = vshrl.u32 %v3220, 7
    %v3222 = vsub.s32 0, %v3221
    %v3223 = vrot.slane %v3106, %v3222
    %v3224 = vlaneseq
    %v3225 = vshrl.u32 %v3224, 7
    %v3226 = vsub.s32 1, %v3225
    %v3227 = vrot.slane %v3106, %v3226
    %v3228 = vlaneseq
    %v3229 = vshrl.u32 %v3228, 7
    %v3230 = vsub.s32 2, %v3229
    %v3231 = vrot.slane %v3106, %v3230
    %v3235 = vsel %vm570, %v3111, %v3127
    %v3236 = vsel %vm570, %v3115, %v3131
    %v3237 = vsel %vm570, %v3119, %v3135
    %v3238 = vsel %vm574, %v3235, %v3143
    %v3239 = vsel %vm574, %v3236, %v3147
    %v3240 = vsel %vm574, %v3237, %v3151
    %v3241 = vsel %vm578, %v3238, %v3159
    %v3242 = vsel %vm578, %v3239, %v3163
    %v3243 = vsel %vm578, %v3240, %v3167
    %v3244 = vsel %vm582, %v3241, %v3175
    %v3245 = vsel %vm582, %v3242, %v3179
    %v3246 = vsel %vm582, %v3243, %v3183
    %v3247 = vsel %vm586, %v3244, %v3191
    %v3248 = vsel %vm586, %v3245, %v3195
    %v3249 = vsel %vm586, %v3246, %v3199
    %v3250 = vsel %vm590, %v3247, %v3207
    %v3251 = vsel %vm590, %v3248, %v3211
    %v3252 = vsel %vm590, %v3249, %v3215
    %v3253 = vsel %vm594, %v3250, %v3223
    %v3254 = vsel %vm594, %v3251, %v3227
    %v3255 = vsel %vm594, %v3252, %v3231
    %v3256 = vpack.c.bf16 %v3002, %v3002
    %3257 = vmatprep.subr.bf16.mxu0 %v700
    %3258 = vmatpush1.bf16.msra.mxu0 %v699
    %3259 = vmatprep.subr.bf16.mxu0 %v697
    %3260 = vmatpush1.bf16.msra.mxu0 %v696
    %3261 = vmatprep.subr.bf16.mxu0 %v694
    %3262 = vmatpush1.bf16.msra.mxu0 %v693
    %3263 = vmatprep.subr.bf16.mxu0 %v691
    %3264 = vmatpush1.bf16.msra.mxu0 %v690
    %3265 = vmatprep.subr.bf16.mxu0 %v688
    %3266 = vmatpush1.bf16.msra.mxu0 %v687
    %3267 = vmatprep.subr.bf16.mxu0 %v685
    %3268 = vmatpush1.bf16.msra.mxu0 %v684
    %3269 = vmatprep.subr.bf16.mxu0 %v682
    %3270 = vmatpush1.bf16.msra.mxu0 %v681
    %3271 = vmatprep.subr.bf16.mxu0 %v679
    %3272 = vmatpush1.bf16.msra.mxu0 %v678
    %3273 = vmatprep.subr.bf16.mxu0 0
    %3274 = vmatpush2.bf16.msra.mxu0 0
    %3275 = vmatprep.subr.bf16.mxu0 0
    %3276 = vmatpush2.bf16.msra.mxu0 0
    %3277 = vmatprep.subr.bf16.mxu0 0
    %3278 = vmatpush2.bf16.msra.mxu0 0
    %3279 = vmatprep.subr.bf16.mxu0 0
    %3280 = vmatpush2.bf16.msra.mxu0 0
    %3281 = vmatprep.subr.bf16.mxu0 0
    %3282 = vmatpush2.bf16.msra.mxu0 0
    %3283 = vmatprep.subr.bf16.mxu0 0
    %3284 = vmatpush2.bf16.msra.mxu0 0
    %3285 = vmatprep.subr.bf16.mxu0 0
    %3286 = vmatpush2.bf16.msra.mxu0 0
    %3287 = vmatprep.subr.bf16.mxu0 0
    %3288 = vmatpush2.bf16.msra.mxu0 0
    %3289 = vmatprep.mubr.bf16.mxu0 0
    %3290 = vmatmul.mubr.bf16.gmra.mxu0 %v3256
    %v3291 = vpop.f32.mrf.mxu0
    %v3292 = vadd.f32 0.0, %v3291
    %v3293 = vpop.f32.mrf.mxu0
    %v3294 = vadd.f32 0.0, %v3293
    %v3295 = vpop.f32.mrf.mxu0
    %v3296 = vpop.f32.mrf.mxu0
    %3297 = vdwg.mxu0
    %3298 = vmatprep.subr.bf16.mxu0 0
    %3299 = vmatpush1.bf16.msra.mxu0 %v701
    %3300 = vmatprep.subr.bf16.mxu0 0
    %3301 = vmatpush1.bf16.msra.mxu0 %v698
    %3302 = vmatprep.subr.bf16.mxu0 0
    %3303 = vmatpush1.bf16.msra.mxu0 %v695
    %3304 = vmatprep.subr.bf16.mxu0 0
    %3305 = vmatpush1.bf16.msra.mxu0 %v692
    %3306 = vmatprep.subr.bf16.mxu0 0
    %3307 = vmatpush1.bf16.msra.mxu0 %v689
    %3308 = vmatprep.subr.bf16.mxu0 0
    %3309 = vmatpush1.bf16.msra.mxu0 %v686
    %3310 = vmatprep.subr.bf16.mxu0 0
    %3311 = vmatpush1.bf16.msra.mxu0 %v683
    %3312 = vmatprep.subr.bf16.mxu0 0
    %3313 = vmatpush1.bf16.msra.mxu0 %v680
    %3314 = vmatprep.subr.bf16.mxu0 0
    %3315 = vmatpush2.bf16.msra.mxu0 0
    %3316 = vmatprep.subr.bf16.mxu0 0
    %3317 = vmatpush2.bf16.msra.mxu0 0
    %3318 = vmatprep.subr.bf16.mxu0 0
    %3319 = vmatpush2.bf16.msra.mxu0 0
    %3320 = vmatprep.subr.bf16.mxu0 0
    %3321 = vmatpush2.bf16.msra.mxu0 0
    %3322 = vmatprep.subr.bf16.mxu0 0
    %3323 = vmatpush2.bf16.msra.mxu0 0
    %3324 = vmatprep.subr.bf16.mxu0 0
    %3325 = vmatpush2.bf16.msra.mxu0 0
    %3326 = vmatprep.subr.bf16.mxu0 0
    %3327 = vmatpush2.bf16.msra.mxu0 0
    %3328 = vmatprep.subr.bf16.mxu0 0
    %3329 = vmatpush2.bf16.msra.mxu0 0
    %3330 = vmatprep.mubr.bf16.mxu0 0
    %3331 = vmatmul.mubr.bf16.gmra.mxu0 %v3256
    %v3332 = vpop.f32.mrf.mxu0
    %v3333 = vadd.f32 0.0, %v3332
    %v3334 = vpop.f32.mrf.mxu0
    %v3335 = vpop.f32.mrf.mxu0
    %v3336 = vpop.f32.mrf.mxu0
    %3337 = vdwg.mxu0
    %v3338 = vadd.f32 %v3253, %v3292
    %v3339 = vxor.u32 %v3338, 2147483648
    %v3340 = vmul.f32 %v3339, 1.442695
    %v3341 = vpow.pop %v3340
    %v3342 = vadd.f32 %v3341, 1.0
    %v3343 = vrcp.pop %v3342
    %v3344 = vmul.f32 1.0, %v3343
    %v3345 = vadd.f32 %v3254, %v3294
    %v3346 = vxor.u32 %v3345, 2147483648
    %v3347 = vmul.f32 %v3346, 1.442695
    %v3348 = vpow.pop %v3347
    %v3349 = vadd.f32 %v3348, 1.0
    %v3350 = vrcp.pop %v3349
    %v3351 = vmul.f32 1.0, %v3350
    %v3352 = vadd.f32 %v3333, %v353
    %v3353 = vmul.f32 %v3344, %v3352
    %v3354 = vadd.f32 %v3255, %v3353
    %v3355 = vtanh.pop %v3354
    %v3356 = vsub.f32 1.0, %v3351
    %v3357 = vmul.f32 %v3356, %v3355
    %v3358 = vmul.f32 %v3351, %v3002
    %v3359 = vadd.f32 %v3357, %v3358
    %v3360 = vlaneseq
    %v3361 = vshrl.u32 %v3360, 7
    %vm3362 = vcmp.eq.s32.totalorder %v3361, 0
    %s3363 = sld [smem:[#allocation5 + %s64]]
    %v3364 = vstv %s3363
    %v3365 = vsel %vm3362, %v3364, 0
    %vm3366 = vcmp.eq.s32.totalorder %v3361, 1
    %s3367 = sld [smem:[#allocation5 + %s365]]
    %v3368 = vstv %s3367
    %v3369 = vsel %vm3366, %v3368, %v3365
    %vm3370 = vcmp.eq.s32.totalorder %v3361, 2
    %s3371 = sld [smem:[#allocation5 + %s376]]
    %v3372 = vstv %s3371
    %v3373 = vsel %vm3370, %v3372, %v3369
    %vm3374 = vcmp.eq.s32.totalorder %v3361, 3
    %s3375 = sld [smem:[#allocation5 + %s387]]
    %v3376 = vstv %s3375
    %v3377 = vsel %vm3374, %v3376, %v3373
    %vm3378 = vcmp.eq.s32.totalorder %v3361, 4
    %s3379 = sld [smem:[#allocation5 + %s398]]
    %v3380 = vstv %s3379
    %v3381 = vsel %vm3378, %v3380, %v3377
    %vm3382 = vcmp.eq.s32.totalorder %v3361, 5
    %s3383 = sld [smem:[#allocation5 + %s409]]
    %v3384 = vstv %s3383
    %v3385 = vsel %vm3382, %v3384, %v3381
    %vm3386 = vcmp.eq.s32.totalorder %v3361, 6
    %s3387 = sld [smem:[#allocation5 + %s420]]
    %v3388 = vstv %s3387
    %v3389 = vsel %vm3386, %v3388, %v3385
    %vm3390 = vcmp.eq.s32.totalorder %v3361, 7
    %s3391 = sld [smem:[#allocation5 + %s431]]
    %v3392 = vstv %s3391
    %v3393 = vsel %vm3390, %v3392, %v3389
    %vm3394 = vcmp.gt.s32.totalorder %v3393, 0
    %vm3395 = vcmp.gt.s32.totalorder %v3393, 1
    %vm3396 = vcmp.gt.s32.totalorder %v3393, 2
    %vm3397 = vcmp.gt.s32.totalorder %v3393, 3
    %vm3398 = vcmp.gt.s32.totalorder %v3393, 4
    %vm3399 = vcmp.gt.s32.totalorder %v3393, 5
    %vm3400 = vcmp.gt.s32.totalorder %v3393, 6
    %vm3401 = vcmp.gt.s32.totalorder %v3393, 7
    %v3402 = vsel %vm3394, %v828, 0.0
    %v3403 = vsel %vm3395, %v1217, 0.0
    %v3404 = vsel %vm3396, %v1574, 0.0
    %v3405 = vsel %vm3397, %v1931, 0.0
    %v3406 = vsel %vm3398, %v2288, 0.0
    %v3407 = vsel %vm3399, %v2645, 0.0
    %v3408 = vsel %vm3400, %v3002, 0.0
    %v3409 = vsel %vm3401, %v3359, 0.0
    %v3410 = vpack.c.bf16 %v3402, %v3402
    %v3411 = vpack.c.bf16 %v3403, %v3403
    %v3412 = vpack.c.bf16 %v3404, %v3404
    %v3413 = vpack.c.bf16 %v3405, %v3405
    %v3414 = vpack.c.bf16 %v3406, %v3406
    %v3415 = vpack.c.bf16 %v3407, %v3407
    %v3416 = vpack.c.bf16 %v3408, %v3408
    %v3417 = vpack.c.bf16 %v3409, %v3409
    %v3418 = vld [vmem:[#allocation9] sm:$0xf]
    %v3419 = vld [vmem:[#allocation9 + $0x4] sm:$0xf]
    %v3420 = vld [vmem:[#allocation9 + $0x8] sm:$0xf]
    %v3421 = vld [vmem:[#allocation9 + $0xc] sm:$0xf]
    %v3422 = vld [vmem:[#allocation9 + $0x10] sm:$0xf]
    %v3423 = vld [vmem:[#allocation9 + $0x14] sm:$0xf]
    %v3424 = vld [vmem:[#allocation9 + $0x18] sm:$0xf]
    %v3425 = vld [vmem:[#allocation9 + $0x1c] sm:$0xf]
    %v3426 = vld [vmem:[#allocation9 + $0x20] sm:$0xf]
    %v3427 = vld [vmem:[#allocation9 + $0x24] sm:$0xf]
    %v3428 = vld [vmem:[#allocation9 + $0x28] sm:$0xf]
    %v3429 = vld [vmem:[#allocation9 + $0x2c] sm:$0xf]
    %v3430 = vld [vmem:[#allocation9 + $0x30] sm:$0xf]
    %v3431 = vld [vmem:[#allocation9 + $0x34] sm:$0xf]
    %v3432 = vld [vmem:[#allocation9 + $0x38] sm:$0xf]
    %v3433 = vld [vmem:[#allocation9 + $0x3c] sm:$0xf]
    %v3434 = vld [vmem:[%s8] sm:$0x1]
    %v3436 = vlaneseq
    %v3437 = vshrl.u32 %v3436, 7
    %v3438 = vsub.s32 0, %v3437
    %v3439 = vrot.slane %v3434, %v3438
    %v3449 = vunpack.c.l.b16 %v3410
    %v3450 = vunpack.c.l.b16 %v3411
    %v3451 = vunpack.c.l.b16 %v3412
    %v3452 = vunpack.c.l.b16 %v3413
    %v3453 = vunpack.c.l.b16 %v3414
    %v3454 = vunpack.c.l.b16 %v3415
    %v3455 = vunpack.c.l.b16 %v3416
    %v3456 = vunpack.c.l.b16 %v3417
    %v3457 = vpack.c.b16 %v3450, %v3449
    %v3458 = vpack.c.b16 %v3452, %v3451
    %v3459 = vpack.c.b16 %v3454, %v3453
    %v3460 = vpack.c.b16 %v3456, %v3455
    %v3481 = vunpack.c.l.b16 %v3418
    %v3482 = vunpack.c.l.b16 %v3419
    %v3483 = vunpack.c.l.b16 %v3420
    %v3484 = vunpack.c.l.b16 %v3421
    %v3485 = vunpack.c.l.b16 %v3422
    %v3486 = vunpack.c.l.b16 %v3423
    %v3487 = vunpack.c.l.b16 %v3424
    %v3488 = vunpack.c.l.b16 %v3425
    %v3489 = vunpack.c.l.b16 %v3426
    %v3490 = vunpack.c.l.b16 %v3427
    %v3491 = vunpack.c.l.b16 %v3428
    %v3492 = vunpack.c.l.b16 %v3429
    %v3493 = vunpack.c.l.b16 %v3430
    %v3494 = vunpack.c.l.b16 %v3431
    %v3495 = vunpack.c.l.b16 %v3432
    %v3496 = vunpack.c.l.b16 %v3433
    %v3497 = vpack.c.b16 %v3482, %v3481
    %v3498 = vpack.c.b16 %v3484, %v3483
    %v3499 = vpack.c.b16 %v3486, %v3485
    %v3500 = vpack.c.b16 %v3488, %v3487
    %v3501 = vpack.c.b16 %v3490, %v3489
    %v3502 = vpack.c.b16 %v3492, %v3491
    %v3503 = vpack.c.b16 %v3494, %v3493
    %v3504 = vpack.c.b16 %v3496, %v3495
    %3513 = vmatprep.subr.bf16.mxu0 0
    %3514 = vmatpush1.bf16.msra.mxu0 %v3504
    %3515 = vmatprep.subr.bf16.mxu0 0
    %3516 = vmatpush1.bf16.msra.mxu0 %v3503
    %3517 = vmatprep.subr.bf16.mxu0 0
    %3518 = vmatpush1.bf16.msra.mxu0 %v3502
    %3519 = vmatprep.subr.bf16.mxu0 0
    %3520 = vmatpush1.bf16.msra.mxu0 %v3501
    %3521 = vmatprep.subr.bf16.mxu0 0
    %3522 = vmatpush1.bf16.msra.mxu0 %v3500
    %3523 = vmatprep.subr.bf16.mxu0 0
    %3524 = vmatpush1.bf16.msra.mxu0 %v3499
    %3525 = vmatprep.subr.bf16.mxu0 0
    %3526 = vmatpush1.bf16.msra.mxu0 %v3498
    %3527 = vmatprep.subr.bf16.mxu0 0
    %3528 = vmatpush1.bf16.msra.mxu0 %v3497
    %3529 = vmatprep.subr.bf16.mxu0 0
    %3530 = vmatpush2.bf16.msra.mxu0 0
    %3531 = vmatprep.subr.bf16.mxu0 0
    %3532 = vmatpush2.bf16.msra.mxu0 0
    %3533 = vmatprep.subr.bf16.mxu0 0
    %3534 = vmatpush2.bf16.msra.mxu0 0
    %3535 = vmatprep.subr.bf16.mxu0 0
    %3536 = vmatpush2.bf16.msra.mxu0 0
    %3537 = vmatprep.subr.bf16.mxu0 0
    %3538 = vmatpush2.bf16.msra.mxu0 0
    %3539 = vmatprep.subr.bf16.mxu0 0
    %3540 = vmatpush2.bf16.msra.mxu0 0
    %3541 = vmatprep.subr.bf16.mxu0 0
    %3542 = vmatpush2.bf16.msra.mxu0 0
    %3543 = vmatprep.subr.bf16.mxu0 0
    %3544 = vmatpush2.bf16.msra.mxu0 0
    %3545 = vmatprep.mubr.bf16.mxu0 0
    %3546 = vmatmul.mubr.bf16.gmra.mxu0 %v3457
    %v3547 = vpop.f32.mrf.mxu0
    %v3548 = vadd.f32 %v3439, %v3547
    %v3549 = vpop.f32.mrf.mxu0
    %v3550 = vpop.f32.mrf.mxu0
    %v3551 = vadd.f32 %v3439, %v3550
    %v3552 = vpop.f32.mrf.mxu0
    %3553 = vmatprep.mubr.bf16.mxu0 0
    %3554 = vmatmul.mubr.bf16.gmra.mxu0 %v3458
    %v3555 = vpop.f32.mrf.mxu0
    %v3556 = vadd.f32 %v3439, %v3555
    %v3557 = vpop.f32.mrf.mxu0
    %v3558 = vpop.f32.mrf.mxu0
    %v3559 = vadd.f32 %v3439, %v3558
    %v3560 = vpop.f32.mrf.mxu0
    %3561 = vmatprep.mubr.bf16.mxu0 0
    %3562 = vmatmul.mubr.bf16.gmra.mxu0 %v3459
    %v3563 = vpop.f32.mrf.mxu0
    %v3564 = vadd.f32 %v3439, %v3563
    %v3565 = vpop.f32.mrf.mxu0
    %v3566 = vpop.f32.mrf.mxu0
    %v3567 = vadd.f32 %v3439, %v3566
    %v3568 = vpop.f32.mrf.mxu0
    %3569 = vmatprep.mubr.bf16.mxu0 0
    %3570 = vmatmul.mubr.bf16.gmra.mxu0 %v3460
    %v3571 = vpop.f32.mrf.mxu0
    %v3572 = vadd.f32 %v3439, %v3571
    %v3573 = vpop.f32.mrf.mxu0
    %v3574 = vpop.f32.mrf.mxu0
    %v3575 = vadd.f32 %v3439, %v3574
    %v3576 = vpop.f32.mrf.mxu0
    %3577 = vdwg.mxu0
    %v3578 = vpack.c.bf16 %v3548, %v3548
    %v3579 = vpack.c.bf16 %v3551, %v3551
    %v3580 = vpack.c.bf16 %v3556, %v3556
    %v3581 = vpack.c.bf16 %v3559, %v3559
    %v3582 = vpack.c.bf16 %v3564, %v3564
    %v3583 = vpack.c.bf16 %v3567, %v3567
    %v3584 = vpack.c.bf16 %v3572, %v3572
    %v3585 = vpack.c.bf16 %v3575, %v3575
    %3586 = vst [vmem:[#allocation11] sm:$0xf] %v3578
    %3587 = vst [vmem:[#allocation11 + $0x4] sm:$0xf] %v3579
    %3588 = vst [vmem:[#allocation11 + $0x8] sm:$0xf] %v3580
    %3589 = vst [vmem:[#allocation11 + $0xc] sm:$0xf] %v3581
    %3590 = vst [vmem:[#allocation11 + $0x10] sm:$0xf] %v3582
    %3591 = vst [vmem:[#allocation11 + $0x14] sm:$0xf] %v3583
    %3592 = vst [vmem:[#allocation11 + $0x18] sm:$0xf] %v3584
    %3593 = vst [vmem:[#allocation11 + $0x1c] sm:$0xf] %v3585
    // Predicated region
    $region38: #{tpu_custom_call.1} parent=1 // pred_check
      _
    $region39: #{tpu_custom_call.1} parent=1 // pred_check_branch
      %3595 = sbr.rel (0) target = $region41
    $region40: #{tpu_custom_call.1} parent=1 // pred_region
      %s3597 = ssub.s32 512, 512
      %3598 = vsyncadd [#allocation8], %s3597
      %s3599 = sshll.u32 [#allocation11], 4
      %s3600 = int_to_ptr.vmem [resolvable:$true] %s3599
      %3605 = dma.vmem_to_hbm [thread:$0]  %s3600, 512, %s9, [#allocation8], 64, 64, 4
    $region41: #{tpu_custom_call.1} parent=1 // pred_fallthru
      _
    // Predicated region
    $region42: #{tpu_custom_call.1} parent=1 // pred_check
      _
    $region43: #{tpu_custom_call.1} parent=1 // pred_check_branch
      %3607 = sbr.rel (0) target = $region45
    $region44: #{tpu_custom_call.1} parent=1 // pred_region
      %3608 = dma.done [#allocation8], 512
    $region45: #{tpu_custom_call.1} parent=1 // pred_fallthru
      _
    %3609 = vsyncpa [#allocation7], 1
    %3610 = vsyncpa [#allocation10], 1
    %3611 = vsyncpa [#allocation8], 1

</llo_original>
